<compile_context>
chip_gen: v6e
topology: v6e:2x2x1
jax: 0.10.0
libtpu: 0.0.40
codegen_flags: <defaults>
</compile_context>

<pallas_src>
import collections
import functools

import jax
import jax.numpy as jnp
from jax import lax
from jax.experimental import pallas as pl
from jax.experimental.pallas import tpu as pltpu


# ----------------------------------------------------------------------------
# helpers
# ----------------------------------------------------------------------------
def _round_up(x, m):
    return ((x + m - 1) // m) * m


def _tile_m(m):
    # M tile: <=512, multiple of 16 (bf16 sublane packing friendly).
    return min(512, _round_up(m, 16))


# ----------------------------------------------------------------------------
# Kernel 1: tiled matmul (+ optional bias / LeakyReLU epilogue)
# ----------------------------------------------------------------------------
def _make_matmul_kernel(apply_bias: bool, apply_act: bool, slope: float = 0.2):
    def kernel(a_ref, w_ref, b_ref, o_ref, acc_ref):
        @pl.when(pl.program_id(2) == 0)
        def _():
            acc_ref[...] = jnp.zeros_like(acc_ref)

        acc_ref[...] += jnp.dot(a_ref[...], w_ref[...],
                                preferred_element_type=jnp.float32)

        @pl.when(pl.program_id(2) == pl.num_programs(2) - 1)
        def _():
            y = acc_ref[...]
            if apply_bias:
                y = y + b_ref[...]
            if apply_act:
                y = jnp.where(y >= 0.0, y, slope * y)
            o_ref[...] = y.astype(o_ref.dtype)

    return kernel


def _matmul_layer(a, w_t, bias, *, apply_bias, apply_act, out_dtype):
    """a: [M, K] (bf16/f32), w_t: [K, Cp] bf16, bias: [1, Cp] f32.

    Returns [Mp, Cp] in out_dtype (Mp = M rounded up to the M tile)."""
    m, k = a.shape
    k2, n_out = w_t.shape
    assert k == k2

    tm = _tile_m(m)
    tn = 256 if (n_out % 256 == 0) else 128
    tk = min(1024, k)

    mp = _round_up(m, tm)
    kp = _round_up(k, tk)
    if mp != m or kp != k:
        a = jnp.pad(a, ((0, mp - m), (0, kp - k)))
    if kp != k:
        w_t = jnp.pad(w_t, ((0, kp - k), (0, 0)))

    a16 = a.astype(jnp.bfloat16)
    w16 = w_t.astype(jnp.bfloat16)

    grid = (mp // tm, n_out // tn, kp // tk)
    flops = 2 * mp * kp * n_out
    bytes_accessed = mp * kp * 2 + kp * n_out * 2 + mp * n_out * 4 + n_out * 4

    return pl.pallas_call(
        _make_matmul_kernel(apply_bias, apply_act),
        out_shape=jax.ShapeDtypeStruct((mp, n_out), out_dtype),
        grid_spec=pltpu.PrefetchScalarGridSpec(
            num_scalar_prefetch=0,
            grid=grid,
            in_specs=[
                pl.BlockSpec((tm, tk), lambda i, j, kk: (i, kk)),
                pl.BlockSpec((tk, tn), lambda i, j, kk: (kk, j)),
                pl.BlockSpec((1, tn), lambda i, j, kk: (0, j)),
            ],
            out_specs=pl.BlockSpec((tm, tn), lambda i, j, kk: (i, j)),
            scratch_shapes=[pltpu.VMEM((tm, tn), jnp.float32)],
        ),
        compiler_params=pltpu.CompilerParams(
            dimension_semantics=("parallel", "parallel", "arbitrary"),
            vmem_limit_bytes=32 * 1024 * 1024,
        ),
        cost_estimate=pl.CostEstimate(
            flops=flops, transcendentals=0, bytes_accessed=bytes_accessed),
    )(a16, w16, bias)


# ----------------------------------------------------------------------------
# Kernel 2: BatchNorm statistics (sum / sum-of-squares over M, per channel)
# ----------------------------------------------------------------------------
def _bn_stats_kernel(y_ref, sum_ref, sq_ref):
    @pl.when(pl.program_id(0) == 0)
    def _():
        sum_ref[...] = jnp.zeros_like(sum_ref)
        sq_ref[...] = jnp.zeros_like(sq_ref)

    y = y_ref[...]
    sum_ref[...] += jnp.sum(y, axis=0, keepdims=True)
    sq_ref[...] += jnp.sum(y * y, axis=0, keepdims=True)


# ----------------------------------------------------------------------------
# Kernel 3: fused scale-shift (BatchNorm affine) + optional LeakyReLU
# ----------------------------------------------------------------------------
def _make_scale_shift_kernel(apply_act: bool, slope: float = 0.2):
    def kernel(y_ref, scale_ref, shift_ref, o_ref):
        y = y_ref[...] * scale_ref[...] + shift_ref[...]
        if apply_act:
            y = jnp.where(y >= 0.0, y, slope * y)
        o_ref[...] = y.astype(o_ref.dtype)

    return kernel


def _batchnorm_act(y_pad, gamma, beta, *, m_real, apply_act,
                   eps=1e-5, out_dtype=jnp.bfloat16):
    """y_pad: [Mp, Cp] f32 conv output (rows >= m_real are exact zeros)."""
    mp, cp = y_pad.shape
    tm = min(512, mp)  # mp is a multiple of the matmul M tile, so tm | mp

    s, sq = pl.pallas_call(
        _bn_stats_kernel,
        out_shape=(jax.ShapeDtypeStruct((1, cp), jnp.float32),
                   jax.ShapeDtypeStruct((1, cp), jnp.float32)),
        grid_spec=pltpu.PrefetchScalarGridSpec(
            num_scalar_prefetch=0,
            grid=(mp // tm,),
            in_specs=[pl.BlockSpec((tm, cp), lambda i: (i, 0))],
            out_specs=(pl.BlockSpec((1, cp), lambda i: (0, 0)),
                       pl.BlockSpec((1, cp), lambda i: (0, 0))),
        ),
        compiler_params=pltpu.CompilerParams(
            dimension_semantics=("arbitrary",),
            vmem_limit_bytes=32 * 1024 * 1024,
        ),
    )(y_pad)

    # Tiny per-channel math (size Cp) in plain JAX.  Zero-padded rows
    # contribute nothing to the sums; divide by the *real* M.
    inv_m = jnp.float32(1.0 / m_real)
    mean = s * inv_m
    var = jnp.maximum(sq * inv_m - mean * mean, 0.0)   # biased batch variance
    scale = gamma * lax.rsqrt(var + eps)               # padded chans: gamma=0
    shift = beta - mean * scale

    return pl.pallas_call(
        _make_scale_shift_kernel(apply_act),
        out_shape=jax.ShapeDtypeStruct((mp, cp), out_dtype),
        grid_spec=pltpu.PrefetchScalarGridSpec(
            num_scalar_prefetch=0,
            grid=(mp // tm,),
            in_specs=[pl.BlockSpec((tm, cp), lambda i: (i, 0)),
                      pl.BlockSpec((1, cp), lambda i: (0, 0)),
                      pl.BlockSpec((1, cp), lambda i: (0, 0))],
            out_specs=pl.BlockSpec((tm, cp), lambda i: (i, 0)),
        ),
        compiler_params=pltpu.CompilerParams(
            dimension_semantics=("parallel",),
            vmem_limit_bytes=32 * 1024 * 1024,
        ),
    )(y_pad, scale, shift)


# ----------------------------------------------------------------------------
# im2col glue (plain JAX), NHWC.  Column order = (di, dj, c), c fastest.
# ----------------------------------------------------------------------------
def _im2col_nhwc(x, k, s, p):
    n, h, w, c = x.shape
    ho = (h + 2 * p - k) // s + 1
    wo = (w + 2 * p - k) // s + 1
    xp = jnp.pad(x, ((0, 0), (p, p), (p, p), (0, 0)))
    cols = []
    for di in range(k):
        for dj in range(k):
            sl = xp[:, di:di + s * (ho - 1) + 1:s,
                       dj:dj + s * (wo - 1) + 1:s, :]   # (N, Ho, Wo, C)
            cols.append(sl)
    a = jnp.concatenate(cols, axis=-1)                   # (N, Ho, Wo, k*k*C)
    return a.reshape(n * ho * wo, k * k * c), (n, ho, wo)


# ----------------------------------------------------------------------------
# Parameter prep / forward
# ----------------------------------------------------------------------------
LayerCfg = collections.namedtuple(
    "LayerCfg", ["stride", "use_norm", "use_act", "cin", "cin_pad",
                 "cout", "cout_pad"])


def init_params(key, input_nc, ndf):
    specs = [
        (input_nc, ndf,     2, False, True),   # layer 1
        (ndf,      ndf * 2, 2, True,  True),   # layer 2
        (ndf * 2,  ndf * 4, 2, True,  True),   # layer 3
        (ndf * 4,  ndf * 8, 1, True,  True),   # layer 4
        (ndf * 8,  1,       1, False, False),  # layer 5
    ]
    params, cfgs = [], []
    cin_pad_prev = _round_up(input_nc, 8)      # 16*cin_pad -> K multiple of 128
    for (cin, cout, s, use_norm, use_act) in specs:
        cin_pad = cin_pad_prev
        cout_pad = _round_up(cout, 128)        # lane-dense outputs everywhere
        k1, k2, key = jax.random.split(key, 3)
        w = 0.02 * jax.random.normal(k1, (cout, cin, 4, 4), jnp.float32)
        b = 0.01 * jax.random.normal(k2, (cout,), jnp.float32)
        # [K, Cout_pad] with K index = (di*4 + dj)*cin_pad + c (matches im2col)
        w_t = jnp.zeros((4, 4, cin_pad, cout_pad), jnp.float32)
        w_t = w_t.at[:, :, :cin, :cout].set(jnp.transpose(w, (2, 3, 1, 0)))
        w_t = w_t.reshape(16 * cin_pad, cout_pad).astype(jnp.bfloat16)
        b_p = jnp.zeros((1, cout_pad), jnp.float32).at[0, :cout].set(b)
        gamma = jnp.zeros((1, cout_pad), jnp.float32).at[0, :cout].set(1.0)
        beta = jnp.zeros((1, cout_pad), jnp.float32)
        params.append(dict(w_t=w_t, b=b_p, gamma=gamma, beta=beta))
        cfgs.append(LayerCfg(s, use_norm, use_act, cin, cin_pad, cout, cout_pad))
        cin_pad_prev = cout_pad
    return tuple(params), tuple(cfgs)


def discriminator_forward(x, params, cfgs):
    """x: NCHW f32.  cfgs is static (tuple of namedtuples)."""
    # NCHW -> NHWC, pad input channels to cfgs[0].cin_pad, cast to bf16.
    y = jnp.transpose(x, (0, 2, 3, 1))
    c0 = y.shape[-1]
    if cfgs[0].cin_pad > c0:
        y = jnp.pad(y, ((0, 0), (0, 0), (0, 0), (0, cfgs[0].cin_pad - c0)))
    y = y.astype(jnp.bfloat16)

    n_layers = len(cfgs)
    for idx, (prm, cfg) in enumerate(zip(params, cfgs)):
        is_last = idx == n_layers - 1
        a, (n, ho, wo) = _im2col_nhwc(y, k=4, s=cfg.stride, p=1)
        m = a.shape[0]

        if cfg.use_norm:
            # bias is cancelled by BN mean subtraction -> skip it; keep f32
            # output for the global batch-stats reduction.
            conv = _matmul_layer(a, prm["w_t"], prm["b"],
                                 apply_bias=False, apply_act=False,
                                 out_dtype=jnp.float32)
            out = _batchnorm_act(conv, prm["gamma"], prm["beta"],
                                 m_real=m, apply_act=cfg.use_act,
                                 out_dtype=jnp.bfloat16)
        else:
            out = _matmul_layer(a, prm["w_t"], prm["b"],
                                apply_bias=True, apply_act=cfg.use_act,
                                out_dtype=jnp.float32 if is_last
                                else jnp.bfloat16)

        y = out[:m].reshape(n, ho, wo, cfg.cout_pad)

    # Drop channel padding, back to NCHW.
    out = y[..., :cfgs[-1].cout].astype(jnp.float32)
    return jnp.transpose(out, (0, 3, 1, 2))


discriminator_forward_jit = jax.jit(discriminator_forward, static_argnums=(2,))


if __name__ == "__main__":
    key = jax.random.PRNGKey(0)
    kx, kp = jax.random.split(key)

    # Spatial must survive three stride-2 convs plus two stride-1 k=4/p=1
    # convs (each of those shrinks by 1):  32 -> 16 -> 8 -> 4 -> 3 -> 2.
    batch, input_nc, ndf, spatial = 2, 3, 8, 32
    x = jax.random.normal(kx, (batch, input_nc, spatial, spatial), jnp.float32)

    params, cfgs = init_params(kp, input_nc, ndf)

    out = discriminator_forward_jit(x, params, cfgs)
    out = jax.block_until_ready(out)

    assert out.shape == (batch, 1, 2, 2), out.shape
    assert bool(jnp.all(jnp.isfinite(out)))
    print("KERNEL_OK")
</pallas_src>

<mosaic_0001>
module attributes {stable_mosaic.version = 11 : i64} {
  func.func @kernel(%arg0: i32, %arg1: i32, %arg2: i32, %arg3: memref<512x128xbf16, #tpu.memory_space<vmem>>, %arg4: memref<128x128xbf16, #tpu.memory_space<vmem>>, %arg5: memref<1x128xf32, #tpu.memory_space<vmem>>, %arg6: memref<512x128xbf16, #tpu.memory_space<vmem>>, %arg7: memref<512x128xf32, #tpu.memory_space<vmem>>) attributes {dimension_semantics = [#tpu.dimension_semantics<parallel>, #tpu.dimension_semantics<parallel>, #tpu.dimension_semantics<arbitrary>], iteration_bounds = array<i64: 1, 1, 1>, scalar_prefetch = 0 : i64, scratch_operands = 1 : i64, tpu.core_type = #tpu.core_type<tc>, window_params = [{transform_indices = @transform_0, window_bounds = array<i64: 512, 128>}, {transform_indices = @transform_1, window_bounds = array<i64: 128, 128>}, {transform_indices = @transform_2, window_bounds = array<i64: 1, 128>}, {transform_indices = @transform_3, window_bounds = array<i64: 512, 128>}]} {
    %c0_i32 = arith.constant 0 : i32
    %0 = arith.cmpi eq, %arg2, %c0_i32 : i32
    %1 = arith.extui %0 : i1 to i32
    %c0_i32_0 = arith.constant 0 : i32
    %2 = arith.cmpi ne, %1, %c0_i32_0 : i32
    scf.if %2 {
      %cst_10 = arith.constant 0.000000e+00 : f32
      %12 = vector.broadcast %cst_10 : f32 to vector<512x128xf32>
      %c0_11 = arith.constant 0 : index
      %c0_12 = arith.constant 0 : index
      %13 = vector.load %arg7[%c0_11, %c0_12] : memref<512x128xf32, #tpu.memory_space<vmem>>, vector<512x128xf32>
      tpu.vector_store %arg7[%c0_11, %c0_12], %12 {strides = array<i32>} : memref<512x128xf32, #tpu.memory_space<vmem>>, vector<512x128xf32>,
    } else {
    }
    %c0 = arith.constant 0 : index
    %c0_1 = arith.constant 0 : index
    %3 = vector.load %arg7[%c0, %c0_1] : memref<512x128xf32, #tpu.memory_space<vmem>>, vector<512x128xf32>
    %c0_2 = arith.constant 0 : index
    %c0_3 = arith.constant 0 : index
    %4 = vector.load %arg3[%c0_2, %c0_3] : memref<512x128xbf16, #tpu.memory_space<vmem>>, vector<512x128xbf16>
    %c0_4 = arith.constant 0 : index
    %c0_5 = arith.constant 0 : index
    %5 = vector.load %arg4[%c0_4, %c0_5] : memref<128x128xbf16, #tpu.memory_space<vmem>>, vector<128x128xbf16>
    %cst = arith.constant dense<0.000000e+00> : vector<512x128xf32>
    %6 = tpu.matmul %4, %5, %cst {dimension_numbers = #tpu.dot_dimension_numbers<[1], [0], [0], [1], [0, 0, 1, 1], [], []>} : vector<512x128xbf16>, vector<128x128xbf16>, vector<512x128xf32> -> vector<512x128xf32>
    %7 = arith.addf %3, %6 : vector<512x128xf32>
    %c0_6 = arith.constant 0 : index
    %c0_7 = arith.constant 0 : index
    %8 = vector.load %arg7[%c0_6, %c0_7] : memref<512x128xf32, #tpu.memory_space<vmem>>, vector<512x128xf32>
    tpu.vector_store %arg7[%c0_6, %c0_7], %7 {strides = array<i32>} : memref<512x128xf32, #tpu.memory_space<vmem>>, vector<512x128xf32>,
    %c0_i32_8 = arith.constant 0 : i32
    %9 = arith.cmpi eq, %arg2, %c0_i32_8 : i32
    %10 = arith.extui %9 : i1 to i32
    %c0_i32_9 = arith.constant 0 : i32
    %11 = arith.cmpi ne, %10, %c0_i32_9 : i32
    scf.if %11 {
      %c0_10 = arith.constant 0 : index
      %c0_11 = arith.constant 0 : index
      %12 = vector.load %arg7[%c0_10, %c0_11] : memref<512x128xf32, #tpu.memory_space<vmem>>, vector<512x128xf32>
      %c0_12 = arith.constant 0 : index
      %c0_13 = arith.constant 0 : index
      %13 = vector.load %arg5[%c0_12, %c0_13] : memref<1x128xf32, #tpu.memory_space<vmem>>, vector<1x128xf32>
      %14 = vector.broadcast %13 : vector<1x128xf32> to vector<512x128xf32>
      %15 = arith.addf %12, %14 : vector<512x128xf32>
      %cst_14 = arith.constant 0.000000e+00 : f32
      %16 = vector.broadcast %cst_14 : f32 to vector<512x128xf32>
      %17 = arith.cmpf oge, %15, %16 : vector<512x128xf32>
      %cst_15 = arith.constant 2.000000e-01 : f32
      %18 = vector.broadcast %cst_15 : f32 to vector<512x128xf32>
      %19 = arith.mulf %18, %15 : vector<512x128xf32>
      %20 = arith.select %17, %15, %19 : vector<512x128xi1>, vector<512x128xf32>
      %21 = arith.truncf %20 : vector<512x128xf32> to vector<512x128xbf16>
      %c0_16 = arith.constant 0 : index
      %c0_17 = arith.constant 0 : index
      %22 = vector.load %arg6[%c0_16, %c0_17] : memref<512x128xbf16, #tpu.memory_space<vmem>>, vector<512x128xbf16>
      tpu.vector_store %arg6[%c0_16, %c0_17], %21 {strides = array<i32>} : memref<512x128xbf16, #tpu.memory_space<vmem>>, vector<512x128xbf16>,
    } else {
    }
    return
  }
  func.func @transform_0(%arg0: i32, %arg1: i32, %arg2: i32) -> (i32, i32) {
    %c0_i32 = arith.constant 0 : i32
    return %arg0, %arg2 : i32, i32
  }
  func.func @transform_1(%arg0: i32, %arg1: i32, %arg2: i32) -> (i32, i32) {
    %c0_i32 = arith.constant 0 : i32
    return %arg2, %arg1 : i32, i32
  }
  func.func @transform_2(%arg0: i32, %arg1: i32, %arg2: i32) -> (i32, i32) {
    %c0_i32 = arith.constant 0 : i32
    %c0_i32_0 = arith.constant 0 : i32
    return %c0_i32, %arg1 : i32, i32
  }
  func.func @transform_3(%arg0: i32, %arg1: i32, %arg2: i32) -> (i32, i32) {
    %c0_i32 = arith.constant 0 : i32
    return %arg0, %arg1 : i32, i32
  }
}

module attributes {stable_mosaic.version = 11 : i64} {
  func.func @kernel(%arg0: i32, %arg1: i32, %arg2: i32, %arg3: memref<128x1024xbf16, #tpu.memory_space<vmem>>, %arg4: memref<1024x128xbf16, #tpu.memory_space<vmem>>, %arg5: memref<1x128xf32, #tpu.memory_space<vmem>>, %arg6: memref<128x128xf32, #tpu.memory_space<vmem>>, %arg7: memref<128x128xf32, #tpu.memory_space<vmem>>) attributes {dimension_semantics = [#tpu.dimension_semantics<parallel>, #tpu.dimension_semantics<parallel>, #tpu.dimension_semantics<arbitrary>], iteration_bounds = array<i64: 1, 1, 2>, scalar_prefetch = 0 : i64, scratch_operands = 1 : i64, tpu.core_type = #tpu.core_type<tc>, window_params = [{transform_indices = @transform_0, window_bounds = array<i64: 128, 1024>}, {transform_indices = @transform_1, window_bounds = array<i64: 1024, 128>}, {transform_indices = @transform_2, window_bounds = array<i64: 1, 128>}, {transform_indices = @transform_3, window_bounds = array<i64: 128, 128>}]} {
    %c0_i32 = arith.constant 0 : i32
    %0 = arith.cmpi eq, %arg2, %c0_i32 : i32
    %1 = arith.extui %0 : i1 to i32
    %c0_i32_0 = arith.constant 0 : i32
    %2 = arith.cmpi ne, %1, %c0_i32_0 : i32
    scf.if %2 {
      %cst_9 = arith.constant 0.000000e+00 : f32
      %12 = vector.broadcast %cst_9 : f32 to vector<128x128xf32>
      %c0_10 = arith.constant 0 : index
      %c0_11 = arith.constant 0 : index
      %13 = vector.load %arg7[%c0_10, %c0_11] : memref<128x128xf32, #tpu.memory_space<vmem>>, vector<128x128xf32>
      tpu.vector_store %arg7[%c0_10, %c0_11], %12 {strides = array<i32>} : memref<128x128xf32, #tpu.memory_space<vmem>>, vector<128x128xf32>,
    } else {
    }
    %c0 = arith.constant 0 : index
    %c0_1 = arith.constant 0 : index
    %3 = vector.load %arg7[%c0, %c0_1] : memref<128x128xf32, #tpu.memory_space<vmem>>, vector<128x128xf32>
    %c0_2 = arith.constant 0 : index
    %c0_3 = arith.constant 0 : index
    %4 = vector.load %arg3[%c0_2, %c0_3] : memref<128x1024xbf16, #tpu.memory_space<vmem>>, vector<128x1024xbf16>
    %c0_4 = arith.constant 0 : index
    %c0_5 = arith.constant 0 : index
    %5 = vector.load %arg4[%c0_4, %c0_5] : memref<1024x128xbf16, #tpu.memory_space<vmem>>, vector<1024x128xbf16>
    %cst = arith.constant dense<0.000000e+00> : vector<128x128xf32>
    %6 = tpu.matmul %4, %5, %cst {dimension_numbers = #tpu.dot_dimension_numbers<[1], [0], [0], [1], [0, 0, 1, 1], [], []>} : vector<128x1024xbf16>, vector<1024x128xbf16>, vector<128x128xf32> -> vector<128x128xf32>
    %7 = arith.addf %3, %6 : vector<128x128xf32>
    %c0_6 = arith.constant 0 : index
    %c0_7 = arith.constant 0 : index
    %8 = vector.load %arg7[%c0_6, %c0_7] : memref<128x128xf32, #tpu.memory_space<vmem>>, vector<128x128xf32>
    tpu.vector_store %arg7[%c0_6, %c0_7], %7 {strides = array<i32>} : memref<128x128xf32, #tpu.memory_space<vmem>>, vector<128x128xf32>,
    %c1_i32 = arith.constant 1 : i32
    %9 = arith.cmpi eq, %arg2, %c1_i32 : i32
    %10 = arith.extui %9 : i1 to i32
    %c0_i32_8 = arith.constant 0 : i32
    %11 = arith.cmpi ne, %10, %c0_i32_8 : i32
    scf.if %11 {
      %c0_9 = arith.constant 0 : index
      %c0_10 = arith.constant 0 : index
      %12 = vector.load %arg7[%c0_9, %c0_10] : memref<128x128xf32, #tpu.memory_space<vmem>>, vector<128x128xf32>
      %c0_11 = arith.constant 0 : index
      %c0_12 = arith.constant 0 : index
      %13 = vector.load %arg6[%c0_11, %c0_12] : memref<128x128xf32, #tpu.memory_space<vmem>>, vector<128x128xf32>
      tpu.vector_store %arg6[%c0_11, %c0_12], %12 {strides = array<i32>} : memref<128x128xf32, #tpu.memory_space<vmem>>, vector<128x128xf32>,
    } else {
    }
    return
  }
  func.func @transform_0(%arg0: i32, %arg1: i32, %arg2: i32) -> (i32, i32) {
    %c0_i32 = arith.constant 0 : i32
    return %arg0, %arg2 : i32, i32
  }
  func.func @transform_1(%arg0: i32, %arg1: i32, %arg2: i32) -> (i32, i32) {
    %c0_i32 = arith.constant 0 : i32
    return %arg2, %arg1 : i32, i32
  }
  func.func @transform_2(%arg0: i32, %arg1: i32, %arg2: i32) -> (i32, i32) {
    %c0_i32 = arith.constant 0 : i32
    %c0_i32_0 = arith.constant 0 : i32
    return %c0_i32, %arg1 : i32, i32
  }
  func.func @transform_3(%arg0: i32, %arg1: i32, %arg2: i32) -> (i32, i32) {
    %c0_i32 = arith.constant 0 : i32
    return %arg0, %arg1 : i32, i32
  }
}

module attributes {stable_mosaic.version = 11 : i64} {
  func.func @_bn_stats_kernel(%arg0: i32, %arg1: memref<128x128xf32, #tpu.memory_space<vmem>>, %arg2: memref<1x128xf32, #tpu.memory_space<vmem>>, %arg3: memref<1x128xf32, #tpu.memory_space<vmem>>) attributes {dimension_semantics = [#tpu.dimension_semantics<arbitrary>], iteration_bounds = array<i64: 1>, scalar_prefetch = 0 : i64, scratch_operands = 0 : i64, tpu.core_type = #tpu.core_type<tc>, window_params = [{transform_indices = @transform_0, window_bounds = array<i64: 128, 128>}, {pipeline_mode = #tpu.pipeline_mode<synchronous>, transform_indices = @transform_1, window_bounds = array<i64: 1, 128>}, {pipeline_mode = #tpu.pipeline_mode<synchronous>, transform_indices = @transform_2, window_bounds = array<i64: 1, 128>}]} {
    %c0_i32 = arith.constant 0 : i32
    %0 = arith.cmpi eq, %arg0, %c0_i32 : i32
    %1 = arith.extui %0 : i1 to i32
    %c0_i32_0 = arith.constant 0 : i32
    %2 = arith.cmpi ne, %1, %c0_i32_0 : i32
    scf.if %2 {
      %cst_11 = arith.constant 0.000000e+00 : f32
      %15 = vector.broadcast %cst_11 : f32 to vector<1x128xf32>
      %c0_12 = arith.constant 0 : index
      %c0_13 = arith.constant 0 : index
      %16 = vector.load %arg2[%c0_12, %c0_13] : memref<1x128xf32, #tpu.memory_space<vmem>>, vector<1x128xf32>
      tpu.vector_store %arg2[%c0_12, %c0_13], %15 {strides = array<i32>} : memref<1x128xf32, #tpu.memory_space<vmem>>, vector<1x128xf32>,
      %cst_14 = arith.constant 0.000000e+00 : f32
      %17 = vector.broadcast %cst_14 : f32 to vector<1x128xf32>
      %c0_15 = arith.constant 0 : index
      %c0_16 = arith.constant 0 : index
      %18 = vector.load %arg3[%c0_15, %c0_16] : memref<1x128xf32, #tpu.memory_space<vmem>>, vector<1x128xf32>
      tpu.vector_store %arg3[%c0_15, %c0_16], %17 {strides = array<i32>} : memref<1x128xf32, #tpu.memory_space<vmem>>, vector<1x128xf32>,
    } else {
    }
    %c0 = arith.constant 0 : index
    %c0_1 = arith.constant 0 : index
    %3 = vector.load %arg1[%c0, %c0_1] : memref<128x128xf32, #tpu.memory_space<vmem>>, vector<128x128xf32>
    %c0_2 = arith.constant 0 : index
    %c0_3 = arith.constant 0 : index
    %4 = vector.load %arg2[%c0_2, %c0_3] : memref<1x128xf32, #tpu.memory_space<vmem>>, vector<1x128xf32>
    %cst = arith.constant dense<0.000000e+00> : vector<128xf32>
    %5 = vector.multi_reduction <add>, %3, %cst [0] : vector<128x128xf32> to vector<128xf32>
    %6 = vector.shape_cast %5 : vector<128xf32> to vector<1x128xf32>
    %7 = arith.addf %4, %6 : vector<1x128xf32>
    %c0_4 = arith.constant 0 : index
    %c0_5 = arith.constant 0 : index
    %8 = vector.load %arg2[%c0_4, %c0_5] : memref<1x128xf32, #tpu.memory_space<vmem>>, vector<1x128xf32>
    tpu.vector_store %arg2[%c0_4, %c0_5], %7 {strides = array<i32>} : memref<1x128xf32, #tpu.memory_space<vmem>>, vector<1x128xf32>,
    %c0_6 = arith.constant 0 : index
    %c0_7 = arith.constant 0 : index
    %9 = vector.load %arg3[%c0_6, %c0_7] : memref<1x128xf32, #tpu.memory_space<vmem>>, vector<1x128xf32>
    %10 = arith.mulf %3, %3 : vector<128x128xf32>
    %cst_8 = arith.constant dense<0.000000e+00> : vector<128xf32>
    %11 = vector.multi_reduction <add>, %10, %cst_8 [0] : vector<128x128xf32> to vector<128xf32>
    %12 = vector.shape_cast %11 : vector<128xf32> to vector<1x128xf32>
    %13 = arith.addf %9, %12 : vector<1x128xf32>
    %c0_9 = arith.constant 0 : index
    %c0_10 = arith.constant 0 : index
    %14 = vector.load %arg3[%c0_9, %c0_10] : memref<1x128xf32, #tpu.memory_space<vmem>>, vector<1x128xf32>
    tpu.vector_store %arg3[%c0_9, %c0_10], %13 {strides = array<i32>} : memref<1x128xf32, #tpu.memory_space<vmem>>, vector<1x128xf32>,
    return
  }
  func.func @transform_0(%arg0: i32) -> (i32, i32) {
    %c0_i32 = arith.constant 0 : i32
    %c0_i32_0 = arith.constant 0 : i32
    return %arg0, %c0_i32 : i32, i32
  }
  func.func @transform_1(%arg0: i32) -> (i32, i32) {
    %c0_i32 = arith.constant 0 : i32
    %c0_i32_0 = arith.constant 0 : i32
    %c0_i32_1 = arith.constant 0 : i32
    return %c0_i32, %c0_i32_0 : i32, i32
  }
  func.func @transform_2(%arg0: i32) -> (i32, i32) {
    %c0_i32 = arith.constant 0 : i32
    %c0_i32_0 = arith.constant 0 : i32
    %c0_i32_1 = arith.constant 0 : i32
    return %c0_i32, %c0_i32_0 : i32, i32
  }
}

module attributes {stable_mosaic.version = 11 : i64} {
  func.func @kernel(%arg0: i32, %arg1: memref<128x128xf32, #tpu.memory_space<vmem>>, %arg2: memref<1x128xf32, #tpu.memory_space<vmem>>, %arg3: memref<1x128xf32, #tpu.memory_space<vmem>>, %arg4: memref<128x128xbf16, #tpu.memory_space<vmem>>) attributes {dimension_semantics = [#tpu.dimension_semantics<parallel>], iteration_bounds = array<i64: 1>, scalar_prefetch = 0 : i64, scratch_operands = 0 : i64, tpu.core_type = #tpu.core_type<tc>, window_params = [{transform_indices = @transform_0, window_bounds = array<i64: 128, 128>}, {pipeline_mode = #tpu.pipeline_mode<synchronous>, transform_indices = @transform_1, window_bounds = array<i64: 1, 128>}, {pipeline_mode = #tpu.pipeline_mode<synchronous>, transform_indices = @transform_2, window_bounds = array<i64: 1, 128>}, {transform_indices = @transform_3, window_bounds = array<i64: 128, 128>}]} {
    %c0 = arith.constant 0 : index
    %c0_0 = arith.constant 0 : index
    %0 = vector.load %arg1[%c0, %c0_0] : memref<128x128xf32, #tpu.memory_space<vmem>>, vector<128x128xf32>
    %c0_1 = arith.constant 0 : index
    %c0_2 = arith.constant 0 : index
    %1 = vector.load %arg2[%c0_1, %c0_2] : memref<1x128xf32, #tpu.memory_space<vmem>>, vector<1x128xf32>
    %2 = vector.broadcast %1 : vector<1x128xf32> to vector<128x128xf32>
    %3 = arith.mulf %0, %2 : vector<128x128xf32>
    %c0_3 = arith.constant 0 : index
    %c0_4 = arith.constant 0 : index
    %4 = vector.load %arg3[%c0_3, %c0_4] : memref<1x128xf32, #tpu.memory_space<vmem>>, vector<1x128xf32>
    %5 = vector.broadcast %4 : vector<1x128xf32> to vector<128x128xf32>
    %6 = arith.addf %3, %5 : vector<128x128xf32>
    %cst = arith.constant 0.000000e+00 : f32
    %7 = vector.broadcast %cst : f32 to vector<128x128xf32>
    %8 = arith.cmpf oge, %6, %7 : vector<128x128xf32>
    %cst_5 = arith.constant 2.000000e-01 : f32
    %9 = vector.broadcast %cst_5 : f32 to vector<128x128xf32>
    %10 = arith.mulf %9, %6 : vector<128x128xf32>
    %11 = arith.select %8, %6, %10 : vector<128x128xi1>, vector<128x128xf32>
    %12 = arith.truncf %11 : vector<128x128xf32> to vector<128x128xbf16>
    %c0_6 = arith.constant 0 : index
    %c0_7 = arith.constant 0 : index
    %13 = vector.load %arg4[%c0_6, %c0_7] : memref<128x128xbf16, #tpu.memory_space<vmem>>, vector<128x128xbf16>
    tpu.vector_store %arg4[%c0_6, %c0_7], %12 {strides = array<i32>} : memref<128x128xbf16, #tpu.memory_space<vmem>>, vector<128x128xbf16>,
    return
  }
  func.func @transform_0(%arg0: i32) -> (i32, i32) {
    %c0_i32 = arith.constant 0 : i32
    %c0_i32_0 = arith.constant 0 : i32
    return %arg0, %c0_i32 : i32, i32
  }
  func.func @transform_1(%arg0: i32) -> (i32, i32) {
    %c0_i32 = arith.constant 0 : i32
    %c0_i32_0 = arith.constant 0 : i32
    %c0_i32_1 = arith.constant 0 : i32
    return %c0_i32, %c0_i32_0 : i32, i32
  }
  func.func @transform_2(%arg0: i32) -> (i32, i32) {
    %c0_i32 = arith.constant 0 : i32
    %c0_i32_0 = arith.constant 0 : i32
    %c0_i32_1 = arith.constant 0 : i32
    return %c0_i32, %c0_i32_0 : i32, i32
  }
  func.func @transform_3(%arg0: i32) -> (i32, i32) {
    %c0_i32 = arith.constant 0 : i32
    %c0_i32_0 = arith.constant 0 : i32
    return %arg0, %c0_i32 : i32, i32
  }
}

module attributes {stable_mosaic.version = 11 : i64} {
  func.func @kernel(%arg0: i32, %arg1: i32, %arg2: i32, %arg3: memref<32x1024xbf16, #tpu.memory_space<vmem>>, %arg4: memref<1024x128xbf16, #tpu.memory_space<vmem>>, %arg5: memref<1x128xf32, #tpu.memory_space<vmem>>, %arg6: memref<32x128xf32, #tpu.memory_space<vmem>>, %arg7: memref<32x128xf32, #tpu.memory_space<vmem>>) attributes {dimension_semantics = [#tpu.dimension_semantics<parallel>, #tpu.dimension_semantics<parallel>, #tpu.dimension_semantics<arbitrary>], iteration_bounds = array<i64: 1, 1, 2>, scalar_prefetch = 0 : i64, scratch_operands = 1 : i64, tpu.core_type = #tpu.core_type<tc>, window_params = [{transform_indices = @transform_0, window_bounds = array<i64: 32, 1024>}, {transform_indices = @transform_1, window_bounds = array<i64: 1024, 128>}, {transform_indices = @transform_2, window_bounds = array<i64: 1, 128>}, {transform_indices = @transform_3, window_bounds = array<i64: 32, 128>}]} {
    %c0_i32 = arith.constant 0 : i32
    %0 = arith.cmpi eq, %arg2, %c0_i32 : i32
    %1 = arith.extui %0 : i1 to i32
    %c0_i32_0 = arith.constant 0 : i32
    %2 = arith.cmpi ne, %1, %c0_i32_0 : i32
    scf.if %2 {
      %cst_9 = arith.constant 0.000000e+00 : f32
      %12 = vector.broadcast %cst_9 : f32 to vector<32x128xf32>
      %c0_10 = arith.constant 0 : index
      %c0_11 = arith.constant 0 : index
      %13 = vector.load %arg7[%c0_10, %c0_11] : memref<32x128xf32, #tpu.memory_space<vmem>>, vector<32x128xf32>
      tpu.vector_store %arg7[%c0_10, %c0_11], %12 {strides = array<i32>} : memref<32x128xf32, #tpu.memory_space<vmem>>, vector<32x128xf32>,
    } else {
    }
    %c0 = arith.constant 0 : index
    %c0_1 = arith.constant 0 : index
    %3 = vector.load %arg7[%c0, %c0_1] : memref<32x128xf32, #tpu.memory_space<vmem>>, vector<32x128xf32>
    %c0_2 = arith.constant 0 : index
    %c0_3 = arith.constant 0 : index
    %4 = vector.load %arg3[%c0_2, %c0_3] : memref<32x1024xbf16, #tpu.memory_space<vmem>>, vector<32x1024xbf16>
    %c0_4 = arith.constant 0 : index
    %c0_5 = arith.constant 0 : index
    %5 = vector.load %arg4[%c0_4, %c0_5] : memref<1024x128xbf16, #tpu.memory_space<vmem>>, vector<1024x128xbf16>
    %cst = arith.constant dense<0.000000e+00> : vector<32x128xf32>
    %6 = tpu.matmul %4, %5, %cst {dimension_numbers = #tpu.dot_dimension_numbers<[1], [0], [0], [1], [0, 0, 1, 1], [], []>} : vector<32x1024xbf16>, vector<1024x128xbf16>, vector<32x128xf32> -> vector<32x128xf32>
    %7 = arith.addf %3, %6 : vector<32x128xf32>
    %c0_6 = arith.constant 0 : index
    %c0_7 = arith.constant 0 : index
    %8 = vector.load %arg7[%c0_6, %c0_7] : memref<32x128xf32, #tpu.memory_space<vmem>>, vector<32x128xf32>
    tpu.vector_store %arg7[%c0_6, %c0_7], %7 {strides = array<i32>} : memref<32x128xf32, #tpu.memory_space<vmem>>, vector<32x128xf32>,
    %c1_i32 = arith.constant 1 : i32
    %9 = arith.cmpi eq, %arg2, %c1_i32 : i32
    %10 = arith.extui %9 : i1 to i32
    %c0_i32_8 = arith.constant 0 : i32
    %11 = arith.cmpi ne, %10, %c0_i32_8 : i32
    scf.if %11 {
      %c0_9 = arith.constant 0 : index
      %c0_10 = arith.constant 0 : index
      %12 = vector.load %arg7[%c0_9, %c0_10] : memref<32x128xf32, #tpu.memory_space<vmem>>, vector<32x128xf32>
      %c0_11 = arith.constant 0 : index
      %c0_12 = arith.constant 0 : index
      %13 = vector.load %arg6[%c0_11, %c0_12] : memref<32x128xf32, #tpu.memory_space<vmem>>, vector<32x128xf32>
      tpu.vector_store %arg6[%c0_11, %c0_12], %12 {strides = array<i32>} : memref<32x128xf32, #tpu.memory_space<vmem>>, vector<32x128xf32>,
    } else {
    }
    return
  }
  func.func @transform_0(%arg0: i32, %arg1: i32, %arg2: i32) -> (i32, i32) {
    %c0_i32 = arith.constant 0 : i32
    return %arg0, %arg2 : i32, i32
  }
  func.func @transform_1(%arg0: i32, %arg1: i32, %arg2: i32) -> (i32, i32) {
    %c0_i32 = arith.constant 0 : i32
    return %arg2, %arg1 : i32, i32
  }
  func.func @transform_2(%arg0: i32, %arg1: i32, %arg2: i32) -> (i32, i32) {
    %c0_i32 = arith.constant 0 : i32
    %c0_i32_0 = arith.constant 0 : i32
    return %c0_i32, %arg1 : i32, i32
  }
  func.func @transform_3(%arg0: i32, %arg1: i32, %arg2: i32) -> (i32, i32) {
    %c0_i32 = arith.constant 0 : i32
    return %arg0, %arg1 : i32, i32
  }
}

module attributes {stable_mosaic.version = 11 : i64} {
  func.func @_bn_stats_kernel(%arg0: i32, %arg1: memref<32x128xf32, #tpu.memory_space<vmem>>, %arg2: memref<1x128xf32, #tpu.memory_space<vmem>>, %arg3: memref<1x128xf32, #tpu.memory_space<vmem>>) attributes {dimension_semantics = [#tpu.dimension_semantics<arbitrary>], iteration_bounds = array<i64: 1>, scalar_prefetch = 0 : i64, scratch_operands = 0 : i64, tpu.core_type = #tpu.core_type<tc>, window_params = [{transform_indices = @transform_0, window_bounds = array<i64: 32, 128>}, {pipeline_mode = #tpu.pipeline_mode<synchronous>, transform_indices = @transform_1, window_bounds = array<i64: 1, 128>}, {pipeline_mode = #tpu.pipeline_mode<synchronous>, transform_indices = @transform_2, window_bounds = array<i64: 1, 128>}]} {
    %c0_i32 = arith.constant 0 : i32
    %0 = arith.cmpi eq, %arg0, %c0_i32 : i32
    %1 = arith.extui %0 : i1 to i32
    %c0_i32_0 = arith.constant 0 : i32
    %2 = arith.cmpi ne, %1, %c0_i32_0 : i32
    scf.if %2 {
      %cst_11 = arith.constant 0.000000e+00 : f32
      %15 = vector.broadcast %cst_11 : f32 to vector<1x128xf32>
      %c0_12 = arith.constant 0 : index
      %c0_13 = arith.constant 0 : index
      %16 = vector.load %arg2[%c0_12, %c0_13] : memref<1x128xf32, #tpu.memory_space<vmem>>, vector<1x128xf32>
      tpu.vector_store %arg2[%c0_12, %c0_13], %15 {strides = array<i32>} : memref<1x128xf32, #tpu.memory_space<vmem>>, vector<1x128xf32>,
      %cst_14 = arith.constant 0.000000e+00 : f32
      %17 = vector.broadcast %cst_14 : f32 to vector<1x128xf32>
      %c0_15 = arith.constant 0 : index
      %c0_16 = arith.constant 0 : index
      %18 = vector.load %arg3[%c0_15, %c0_16] : memref<1x128xf32, #tpu.memory_space<vmem>>, vector<1x128xf32>
      tpu.vector_store %arg3[%c0_15, %c0_16], %17 {strides = array<i32>} : memref<1x128xf32, #tpu.memory_space<vmem>>, vector<1x128xf32>,
    } else {
    }
    %c0 = arith.constant 0 : index
    %c0_1 = arith.constant 0 : index
    %3 = vector.load %arg1[%c0, %c0_1] : memref<32x128xf32, #tpu.memory_space<vmem>>, vector<32x128xf32>
    %c0_2 = arith.constant 0 : index
    %c0_3 = arith.constant 0 : index
    %4 = vector.load %arg2[%c0_2, %c0_3] : memref<1x128xf32, #tpu.memory_space<vmem>>, vector<1x128xf32>
    %cst = arith.constant dense<0.000000e+00> : vector<128xf32>
    %5 = vector.multi_reduction <add>, %3, %cst [0] : vector<32x128xf32> to vector<128xf32>
    %6 = vector.shape_cast %5 : vector<128xf32> to vector<1x128xf32>
    %7 = arith.addf %4, %6 : vector<1x128xf32>
    %c0_4 = arith.constant 0 : index
    %c0_5 = arith.constant 0 : index
    %8 = vector.load %arg2[%c0_4, %c0_5] : memref<1x128xf32, #tpu.memory_space<vmem>>, vector<1x128xf32>
    tpu.vector_store %arg2[%c0_4, %c0_5], %7 {strides = array<i32>} : memref<1x128xf32, #tpu.memory_space<vmem>>, vector<1x128xf32>,
    %c0_6 = arith.constant 0 : index
    %c0_7 = arith.constant 0 : index
    %9 = vector.load %arg3[%c0_6, %c0_7] : memref<1x128xf32, #tpu.memory_space<vmem>>, vector<1x128xf32>
    %10 = arith.mulf %3, %3 : vector<32x128xf32>
    %cst_8 = arith.constant dense<0.000000e+00> : vector<128xf32>
    %11 = vector.multi_reduction <add>, %10, %cst_8 [0] : vector<32x128xf32> to vector<128xf32>
    %12 = vector.shape_cast %11 : vector<128xf32> to vector<1x128xf32>
    %13 = arith.addf %9, %12 : vector<1x128xf32>
    %c0_9 = arith.constant 0 : index
    %c0_10 = arith.constant 0 : index
    %14 = vector.load %arg3[%c0_9, %c0_10] : memref<1x128xf32, #tpu.memory_space<vmem>>, vector<1x128xf32>
    tpu.vector_store %arg3[%c0_9, %c0_10], %13 {strides = array<i32>} : memref<1x128xf32, #tpu.memory_space<vmem>>, vector<1x128xf32>,
    return
  }
  func.func @transform_0(%arg0: i32) -> (i32, i32) {
    %c0_i32 = arith.constant 0 : i32
    %c0_i32_0 = arith.constant 0 : i32
    return %arg0, %c0_i32 : i32, i32
  }
  func.func @transform_1(%arg0: i32) -> (i32, i32) {
    %c0_i32 = arith.constant 0 : i32
    %c0_i32_0 = arith.constant 0 : i32
    %c0_i32_1 = arith.constant 0 : i32
    return %c0_i32, %c0_i32_0 : i32, i32
  }
  func.func @transform_2(%arg0: i32) -> (i32, i32) {
    %c0_i32 = arith.constant 0 : i32
    %c0_i32_0 = arith.constant 0 : i32
    %c0_i32_1 = arith.constant 0 : i32
    return %c0_i32, %c0_i32_0 : i32, i32
  }
}

module attributes {stable_mosaic.version = 11 : i64} {
  func.func @kernel(%arg0: i32, %arg1: memref<32x128xf32, #tpu.memory_space<vmem>>, %arg2: memref<1x128xf32, #tpu.memory_space<vmem>>, %arg3: memref<1x128xf32, #tpu.memory_space<vmem>>, %arg4: memref<32x128xbf16, #tpu.memory_space<vmem>>) attributes {dimension_semantics = [#tpu.dimension_semantics<parallel>], iteration_bounds = array<i64: 1>, scalar_prefetch = 0 : i64, scratch_operands = 0 : i64, tpu.core_type = #tpu.core_type<tc>, window_params = [{transform_indices = @transform_0, window_bounds = array<i64: 32, 128>}, {pipeline_mode = #tpu.pipeline_mode<synchronous>, transform_indices = @transform_1, window_bounds = array<i64: 1, 128>}, {pipeline_mode = #tpu.pipeline_mode<synchronous>, transform_indices = @transform_2, window_bounds = array<i64: 1, 128>}, {transform_indices = @transform_3, window_bounds = array<i64: 32, 128>}]} {
    %c0 = arith.constant 0 : index
    %c0_0 = arith.constant 0 : index
    %0 = vector.load %arg1[%c0, %c0_0] : memref<32x128xf32, #tpu.memory_space<vmem>>, vector<32x128xf32>
    %c0_1 = arith.constant 0 : index
    %c0_2 = arith.constant 0 : index
    %1 = vector.load %arg2[%c0_1, %c0_2] : memref<1x128xf32, #tpu.memory_space<vmem>>, vector<1x128xf32>
    %2 = vector.broadcast %1 : vector<1x128xf32> to vector<32x128xf32>
    %3 = arith.mulf %0, %2 : vector<32x128xf32>
    %c0_3 = arith.constant 0 : index
    %c0_4 = arith.constant 0 : index
    %4 = vector.load %arg3[%c0_3, %c0_4] : memref<1x128xf32, #tpu.memory_space<vmem>>, vector<1x128xf32>
    %5 = vector.broadcast %4 : vector<1x128xf32> to vector<32x128xf32>
    %6 = arith.addf %3, %5 : vector<32x128xf32>
    %cst = arith.constant 0.000000e+00 : f32
    %7 = vector.broadcast %cst : f32 to vector<32x128xf32>
    %8 = arith.cmpf oge, %6, %7 : vector<32x128xf32>
    %cst_5 = arith.constant 2.000000e-01 : f32
    %9 = vector.broadcast %cst_5 : f32 to vector<32x128xf32>
    %10 = arith.mulf %9, %6 : vector<32x128xf32>
    %11 = arith.select %8, %6, %10 : vector<32x128xi1>, vector<32x128xf32>
    %12 = arith.truncf %11 : vector<32x128xf32> to vector<32x128xbf16>
    %c0_6 = arith.constant 0 : index
    %c0_7 = arith.constant 0 : index
    %13 = vector.load %arg4[%c0_6, %c0_7] : memref<32x128xbf16, #tpu.memory_space<vmem>>, vector<32x128xbf16>
    tpu.vector_store %arg4[%c0_6, %c0_7], %12 {strides = array<i32>} : memref<32x128xbf16, #tpu.memory_space<vmem>>, vector<32x128xbf16>,
    return
  }
  func.func @transform_0(%arg0: i32) -> (i32, i32) {
    %c0_i32 = arith.constant 0 : i32
    %c0_i32_0 = arith.constant 0 : i32
    return %arg0, %c0_i32 : i32, i32
  }
  func.func @transform_1(%arg0: i32) -> (i32, i32) {
    %c0_i32 = arith.constant 0 : i32
    %c0_i32_0 = arith.constant 0 : i32
    %c0_i32_1 = arith.constant 0 : i32
    return %c0_i32, %c0_i32_0 : i32, i32
  }
  func.func @transform_2(%arg0: i32) -> (i32, i32) {
    %c0_i32 = arith.constant 0 : i32
    %c0_i32_0 = arith.constant 0 : i32
    %c0_i32_1 = arith.constant 0 : i32
    return %c0_i32, %c0_i32_0 : i32, i32
  }
  func.func @transform_3(%arg0: i32) -> (i32, i32) {
    %c0_i32 = arith.constant 0 : i32
    %c0_i32_0 = arith.constant 0 : i32
    return %arg0, %c0_i32 : i32, i32
  }
}

module attributes {stable_mosaic.version = 11 : i64} {
  func.func @kernel(%arg0: i32, %arg1: i32, %arg2: i32, %arg3: memref<16x1024xbf16, #tpu.memory_space<vmem>>, %arg4: memref<1024x128xbf16, #tpu.memory_space<vmem>>, %arg5: memref<1x128xf32, #tpu.memory_space<vmem>>, %arg6: memref<16x128xf32, #tpu.memory_space<vmem>>, %arg7: memref<16x128xf32, #tpu.memory_space<vmem>>) attributes {dimension_semantics = [#tpu.dimension_semantics<parallel>, #tpu.dimension_semantics<parallel>, #tpu.dimension_semantics<arbitrary>], iteration_bounds = array<i64: 1, 1, 2>, scalar_prefetch = 0 : i64, scratch_operands = 1 : i64, tpu.core_type = #tpu.core_type<tc>, window_params = [{transform_indices = @transform_0, window_bounds = array<i64: 16, 1024>}, {transform_indices = @transform_1, window_bounds = array<i64: 1024, 128>}, {transform_indices = @transform_2, window_bounds = array<i64: 1, 128>}, {transform_indices = @transform_3, window_bounds = array<i64: 16, 128>}]} {
    %c0_i32 = arith.constant 0 : i32
    %0 = arith.cmpi eq, %arg2, %c0_i32 : i32
    %1 = arith.extui %0 : i1 to i32
    %c0_i32_0 = arith.constant 0 : i32
    %2 = arith.cmpi ne, %1, %c0_i32_0 : i32
    scf.if %2 {
      %cst_9 = arith.constant 0.000000e+00 : f32
      %12 = vector.broadcast %cst_9 : f32 to vector<16x128xf32>
      %c0_10 = arith.constant 0 : index
      %c0_11 = arith.constant 0 : index
      %13 = vector.load %arg7[%c0_10, %c0_11] : memref<16x128xf32, #tpu.memory_space<vmem>>, vector<16x128xf32>
      tpu.vector_store %arg7[%c0_10, %c0_11], %12 {strides = array<i32>} : memref<16x128xf32, #tpu.memory_space<vmem>>, vector<16x128xf32>,
    } else {
    }
    %c0 = arith.constant 0 : index
    %c0_1 = arith.constant 0 : index
    %3 = vector.load %arg7[%c0, %c0_1] : memref<16x128xf32, #tpu.memory_space<vmem>>, vector<16x128xf32>
    %c0_2 = arith.constant 0 : index
    %c0_3 = arith.constant 0 : index
    %4 = vector.load %arg3[%c0_2, %c0_3] : memref<16x1024xbf16, #tpu.memory_space<vmem>>, vector<16x1024xbf16>
    %c0_4 = arith.constant 0 : index
    %c0_5 = arith.constant 0 : index
    %5 = vector.load %arg4[%c0_4, %c0_5] : memref<1024x128xbf16, #tpu.memory_space<vmem>>, vector<1024x128xbf16>
    %cst = arith.constant dense<0.000000e+00> : vector<16x128xf32>
    %6 = tpu.matmul %4, %5, %cst {dimension_numbers = #tpu.dot_dimension_numbers<[1], [0], [0], [1], [0, 0, 1, 1], [], []>} : vector<16x1024xbf16>, vector<1024x128xbf16>, vector<16x128xf32> -> vector<16x128xf32>
    %7 = arith.addf %3, %6 : vector<16x128xf32>
    %c0_6 = arith.constant 0 : index
    %c0_7 = arith.constant 0 : index
    %8 = vector.load %arg7[%c0_6, %c0_7] : memref<16x128xf32, #tpu.memory_space<vmem>>, vector<16x128xf32>
    tpu.vector_store %arg7[%c0_6, %c0_7], %7 {strides = array<i32>} : memref<16x128xf32, #tpu.memory_space<vmem>>, vector<16x128xf32>,
    %c1_i32 = arith.constant 1 : i32
    %9 = arith.cmpi eq, %arg2, %c1_i32 : i32
    %10 = arith.extui %9 : i1 to i32
    %c0_i32_8 = arith.constant 0 : i32
    %11 = arith.cmpi ne, %10, %c0_i32_8 : i32
    scf.if %11 {
      %c0_9 = arith.constant 0 : index
      %c0_10 = arith.constant 0 : index
      %12 = vector.load %arg7[%c0_9, %c0_10] : memref<16x128xf32, #tpu.memory_space<vmem>>, vector<16x128xf32>
      %c0_11 = arith.constant 0 : index
      %c0_12 = arith.constant 0 : index
      %13 = vector.load %arg5[%c0_11, %c0_12] : memref<1x128xf32, #tpu.memory_space<vmem>>, vector<1x128xf32>
      %14 = vector.broadcast %13 : vector<1x128xf32> to vector<16x128xf32>
      %15 = arith.addf %12, %14 : vector<16x128xf32>
      %c0_13 = arith.constant 0 : index
      %c0_14 = arith.constant 0 : index
      %16 = vector.load %arg6[%c0_13, %c0_14] : memref<16x128xf32, #tpu.memory_space<vmem>>, vector<16x128xf32>
      tpu.vector_store %arg6[%c0_13, %c0_14], %15 {strides = array<i32>} : memref<16x128xf32, #tpu.memory_space<vmem>>, vector<16x128xf32>,
    } else {
    }
    return
  }
  func.func @transform_0(%arg0: i32, %arg1: i32, %arg2: i32) -> (i32, i32) {
    %c0_i32 = arith.constant 0 : i32
    return %arg0, %arg2 : i32, i32
  }
  func.func @transform_1(%arg0: i32, %arg1: i32, %arg2: i32) -> (i32, i32) {
    %c0_i32 = arith.constant 0 : i32
    return %arg2, %arg1 : i32, i32
  }
  func.func @transform_2(%arg0: i32, %arg1: i32, %arg2: i32) -> (i32, i32) {
    %c0_i32 = arith.constant 0 : i32
    %c0_i32_0 = arith.constant 0 : i32
    return %c0_i32, %arg1 : i32, i32
  }
  func.func @transform_3(%arg0: i32, %arg1: i32, %arg2: i32) -> (i32, i32) {
    %c0_i32 = arith.constant 0 : i32
    return %arg0, %arg1 : i32, i32
  }
}

</mosaic_0001>

<llo_original>
// kernel: discriminator_forward.11
$region0: #{discriminator_forward.11}
  #allocation0 [shape = 'u32[]', space=smem, size = 0x4, offset = 0x4, fixed_abs, tag = 'smem constant byte address 0x4 - core index']
  #allocation1 [shape = 'u32[144,128]{1,0:T(1,128)}', space=vmem, size = 0x12000, scoped, tag = 'internal scratch']
  #allocation2 [shape = 'f32[512,128]{1,0:T(8,128)}', space=vmem, size = 0x40000, scoped, tag = 'scratch operand']
  %s0 = inlined_call_operand.vmem [shape: bf16[512,128], index: 0, kind: input, shape index: {}]
  %s1 = inlined_call_operand.vmem [shape: bf16[128,128], index: 1, kind: input, shape index: {}]
  %s2 = inlined_call_operand.vmem [shape: f32[1,128], index: 2, kind: input, shape index: {}]
  %s3 = inlined_call_operand.vmem [shape: bf16[512,128], index: 3, kind: output, shape index: {}]
  %s4 = sld [smem:[#allocation0]]
  $region30: #{discriminator_forward.11} parent=0
    _
  %s6 = ssub.s32 1, %s4
  %s7 = scalar_select 0, %s6, %s4
  // Predicated region
  $region2: #{discriminator_forward.11} parent=0 // pred_check
    _
  $region3: #{discriminator_forward.11} parent=0 // pred_check_branch
    %9 = sbr.rel (0) target = $region5
  $region4: #{discriminator_forward.11} parent=0 // pred_region
    _
  $region5: #{discriminator_forward.11} parent=0 // pred_fallthru
    _
  // Predicated region
  $region6: #{discriminator_forward.11} parent=0 // pred_check
    _
  $region7: #{discriminator_forward.11} parent=0 // pred_check_branch
    %11 = sbr.rel (0) target = $region9
  $region8: #{discriminator_forward.11} parent=0 // pred_region
    _
  $region9: #{discriminator_forward.11} parent=0 // pred_fallthru
    _
  // Predicated region
  $region10: #{discriminator_forward.11} parent=0 // pred_check
    _
  $region11: #{discriminator_forward.11} parent=0 // pred_check_branch
    %13 = sbr.rel (0) target = $region13
  $region12: #{discriminator_forward.11} parent=0 // pred_region
    _
  $region13: #{discriminator_forward.11} parent=0 // pred_fallthru
    _
  %p15 = scmp.eq.s32.totalorder 0, 0
  // Predicated region
  $region14: #{discriminator_forward.11} parent=0 // pred_check
    %p16 = pneg %p15
  $region15: #{discriminator_forward.11} parent=0 // pred_check_branch
    %18 = sbr.rel (%p16) target = $region17
  $region16: #{discriminator_forward.11} parent=0 // pred_region
    %19 = vst [vmem:[#allocation2] sm:$0xff] 0.0
    %20 = vst [vmem:[#allocation2 + $0x8] sm:$0xff] 0.0
    %21 = vst [vmem:[#allocation2 + $0x10] sm:$0xff] 0.0
    %22 = vst [vmem:[#allocation2 + $0x18] sm:$0xff] 0.0
    %23 = vst [vmem:[#allocation2 + $0x20] sm:$0xff] 0.0
    %24 = vst [vmem:[#allocation2 + $0x28] sm:$0xff] 0.0
    %25 = vst [vmem:[#allocation2 + $0x30] sm:$0xff] 0.0
    %26 = vst [vmem:[#allocation2 + $0x38] sm:$0xff] 0.0
    %27 = vst [vmem:[#allocation2 + $0x40] sm:$0xff] 0.0
    %28 = vst [vmem:[#allocation2 + $0x48] sm:$0xff] 0.0
    %29 = vst [vmem:[#allocation2 + $0x50] sm:$0xff] 0.0
    %30 = vst [vmem:[#allocation2 + $0x58] sm:$0xff] 0.0
    %31 = vst [vmem:[#allocation2 + $0x60] sm:$0xff] 0.0
    %32 = vst [vmem:[#allocation2 + $0x68] sm:$0xff] 0.0
    %33 = vst [vmem:[#allocation2 + $0x70] sm:$0xff] 0.0
    %34 = vst [vmem:[#allocation2 + $0x78] sm:$0xff] 0.0
    %35 = vst [vmem:[#allocation2 + $0x80] sm:$0xff] 0.0
    %36 = vst [vmem:[#allocation2 + $0x88] sm:$0xff] 0.0
    %37 = vst [vmem:[#allocation2 + $0x90] sm:$0xff] 0.0
    %38 = vst [vmem:[#allocation2 + $0x98] sm:$0xff] 0.0
    %39 = vst [vmem:[#allocation2 + $0xa0] sm:$0xff] 0.0
    %40 = vst [vmem:[#allocation2 + $0xa8] sm:$0xff] 0.0
    %41 = vst [vmem:[#allocation2 + $0xb0] sm:$0xff] 0.0
    %42 = vst [vmem:[#allocation2 + $0xb8] sm:$0xff] 0.0
    %43 = vst [vmem:[#allocation2 + $0xc0] sm:$0xff] 0.0
    %44 = vst [vmem:[#allocation2 + $0xc8] sm:$0xff] 0.0
    %45 = vst [vmem:[#allocation2 + $0xd0] sm:$0xff] 0.0
    %46 = vst [vmem:[#allocation2 + $0xd8] sm:$0xff] 0.0
    %47 = vst [vmem:[#allocation2 + $0xe0] sm:$0xff] 0.0
    %48 = vst [vmem:[#allocation2 + $0xe8] sm:$0xff] 0.0
    %49 = vst [vmem:[#allocation2 + $0xf0] sm:$0xff] 0.0
    %50 = vst [vmem:[#allocation2 + $0xf8] sm:$0xff] 0.0
    %51 = vst [vmem:[#allocation2 + $0x100] sm:$0xff] 0.0
    %52 = vst [vmem:[#allocation2 + $0x108] sm:$0xff] 0.0
    %53 = vst [vmem:[#allocation2 + $0x110] sm:$0xff] 0.0
    %54 = vst [vmem:[#allocation2 + $0x118] sm:$0xff] 0.0
    %55 = vst [vmem:[#allocation2 + $0x120] sm:$0xff] 0.0
    %56 = vst [vmem:[#allocation2 + $0x128] sm:$0xff] 0.0
    %57 = vst [vmem:[#allocation2 + $0x130] sm:$0xff] 0.0
    %58 = vst [vmem:[#allocation2 + $0x138] sm:$0xff] 0.0
    %59 = vst [vmem:[#allocation2 + $0x140] sm:$0xff] 0.0
    %60 = vst [vmem:[#allocation2 + $0x148] sm:$0xff] 0.0
    %61 = vst [vmem:[#allocation2 + $0x150] sm:$0xff] 0.0
    %62 = vst [vmem:[#allocation2 + $0x158] sm:$0xff] 0.0
    %63 = vst [vmem:[#allocation2 + $0x160] sm:$0xff] 0.0
    %64 = vst [vmem:[#allocation2 + $0x168] sm:$0xff] 0.0
    %65 = vst [vmem:[#allocation2 + $0x170] sm:$0xff] 0.0
    %66 = vst [vmem:[#allocation2 + $0x178] sm:$0xff] 0.0
    %67 = vst [vmem:[#allocation2 + $0x180] sm:$0xff] 0.0
    %68 = vst [vmem:[#allocation2 + $0x188] sm:$0xff] 0.0
    %69 = vst [vmem:[#allocation2 + $0x190] sm:$0xff] 0.0
    %70 = vst [vmem:[#allocation2 + $0x198] sm:$0xff] 0.0
    %71 = vst [vmem:[#allocation2 + $0x1a0] sm:$0xff] 0.0
    %72 = vst [vmem:[#allocation2 + $0x1a8] sm:$0xff] 0.0
    %73 = vst [vmem:[#allocation2 + $0x1b0] sm:$0xff] 0.0
    %74 = vst [vmem:[#allocation2 + $0x1b8] sm:$0xff] 0.0
    %75 = vst [vmem:[#allocation2 + $0x1c0] sm:$0xff] 0.0
    %76 = vst [vmem:[#allocation2 + $0x1c8] sm:$0xff] 0.0
    %77 = vst [vmem:[#allocation2 + $0x1d0] sm:$0xff] 0.0
    %78 = vst [vmem:[#allocation2 + $0x1d8] sm:$0xff] 0.0
    %79 = vst [vmem:[#allocation2 + $0x1e0] sm:$0xff] 0.0
    %80 = vst [vmem:[#allocation2 + $0x1e8] sm:$0xff] 0.0
    %81 = vst [vmem:[#allocation2 + $0x1f0] sm:$0xff] 0.0
    %82 = vst [vmem:[#allocation2 + $0x1f8] sm:$0xff] 0.0
  $region17: #{discriminator_forward.11} parent=0 // pred_fallthru
    _
  %v83 = vld [vmem:[#allocation2] sm:$0xff]
  %v84 = vld [vmem:[#allocation2 + $0x8] sm:$0xff]
  %v85 = vld [vmem:[#allocation2 + $0x10] sm:$0xff]
  %v86 = vld [vmem:[#allocation2 + $0x18] sm:$0xff]
  %v87 = vld [vmem:[#allocation2 + $0x20] sm:$0xff]
  %v88 = vld [vmem:[#allocation2 + $0x28] sm:$0xff]
  %v89 = vld [vmem:[#allocation2 + $0x30] sm:$0xff]
  %v90 = vld [vmem:[#allocation2 + $0x38] sm:$0xff]
  %v91 = vld [vmem:[#allocation2 + $0x40] sm:$0xff]
  %v92 = vld [vmem:[#allocation2 + $0x48] sm:$0xff]
  %v93 = vld [vmem:[#allocation2 + $0x50] sm:$0xff]
  %v94 = vld [vmem:[#allocation2 + $0x58] sm:$0xff]
  %v95 = vld [vmem:[#allocation2 + $0x60] sm:$0xff]
  %v96 = vld [vmem:[#allocation2 + $0x68] sm:$0xff]
  %v97 = vld [vmem:[#allocation2 + $0x70] sm:$0xff]
  %v98 = vld [vmem:[#allocation2 + $0x78] sm:$0xff]
  %v99 = vld [vmem:[#allocation2 + $0x80] sm:$0xff]
  %v100 = vld [vmem:[#allocation2 + $0x88] sm:$0xff]
  %v101 = vld [vmem:[#allocation2 + $0x90] sm:$0xff]
  %v102 = vld [vmem:[#allocation2 + $0x98] sm:$0xff]
  %v103 = vld [vmem:[#allocation2 + $0xa0] sm:$0xff]
  %v104 = vld [vmem:[#allocation2 + $0xa8] sm:$0xff]
  %v105 = vld [vmem:[#allocation2 + $0xb0] sm:$0xff]
  %v106 = vld [vmem:[#allocation2 + $0xb8] sm:$0xff]
  %v107 = vld [vmem:[#allocation2 + $0xc0] sm:$0xff]
  %v108 = vld [vmem:[#allocation2 + $0xc8] sm:$0xff]
  %v109 = vld [vmem:[#allocation2 + $0xd0] sm:$0xff]
  %v110 = vld [vmem:[#allocation2 + $0xd8] sm:$0xff]
  %v111 = vld [vmem:[#allocation2 + $0xe0] sm:$0xff]
  %v112 = vld [vmem:[#allocation2 + $0xe8] sm:$0xff]
  %v113 = vld [vmem:[#allocation2 + $0xf0] sm:$0xff]
  %v114 = vld [vmem:[#allocation2 + $0xf8] sm:$0xff]
  %v115 = vld [vmem:[#allocation2 + $0x100] sm:$0xff]
  %v116 = vld [vmem:[#allocation2 + $0x108] sm:$0xff]
  %v117 = vld [vmem:[#allocation2 + $0x110] sm:$0xff]
  %v118 = vld [vmem:[#allocation2 + $0x118] sm:$0xff]
  %v119 = vld [vmem:[#allocation2 + $0x120] sm:$0xff]
  %v120 = vld [vmem:[#allocation2 + $0x128] sm:$0xff]
  %v121 = vld [vmem:[#allocation2 + $0x130] sm:$0xff]
  %v122 = vld [vmem:[#allocation2 + $0x138] sm:$0xff]
  %v123 = vld [vmem:[#allocation2 + $0x140] sm:$0xff]
  %v124 = vld [vmem:[#allocation2 + $0x148] sm:$0xff]
  %v125 = vld [vmem:[#allocation2 + $0x150] sm:$0xff]
  %v126 = vld [vmem:[#allocation2 + $0x158] sm:$0xff]
  %v127 = vld [vmem:[#allocation2 + $0x160] sm:$0xff]
  %v128 = vld [vmem:[#allocation2 + $0x168] sm:$0xff]
  %v129 = vld [vmem:[#allocation2 + $0x170] sm:$0xff]
  %v130 = vld [vmem:[#allocation2 + $0x178] sm:$0xff]
  %v131 = vld [vmem:[#allocation2 + $0x180] sm:$0xff]
  %v132 = vld [vmem:[#allocation2 + $0x188] sm:$0xff]
  %v133 = vld [vmem:[#allocation2 + $0x190] sm:$0xff]
  %v134 = vld [vmem:[#allocation2 + $0x198] sm:$0xff]
  %v135 = vld [vmem:[#allocation2 + $0x1a0] sm:$0xff]
  %v136 = vld [vmem:[#allocation2 + $0x1a8] sm:$0xff]
  %v137 = vld [vmem:[#allocation2 + $0x1b0] sm:$0xff]
  %v138 = vld [vmem:[#allocation2 + $0x1b8] sm:$0xff]
  %v139 = vld [vmem:[#allocation2 + $0x1c0] sm:$0xff]
  %v140 = vld [vmem:[#allocation2 + $0x1c8] sm:$0xff]
  %v141 = vld [vmem:[#allocation2 + $0x1d0] sm:$0xff]
  %v142 = vld [vmem:[#allocation2 + $0x1d8] sm:$0xff]
  %v143 = vld [vmem:[#allocation2 + $0x1e0] sm:$0xff]
  %v144 = vld [vmem:[#allocation2 + $0x1e8] sm:$0xff]
  %v145 = vld [vmem:[#allocation2 + $0x1f0] sm:$0xff]
  %v146 = vld [vmem:[#allocation2 + $0x1f8] sm:$0xff]
  %v147 = vld [vmem:[%s0] sm:$0xf]
  %v148 = vld [vmem:[%s0 + $0x4] sm:$0xf]
  %v149 = vld [vmem:[%s0 + $0x8] sm:$0xf]
  %v150 = vld [vmem:[%s0 + $0xc] sm:$0xf]
  %v151 = vld [vmem:[%s0 + $0x10] sm:$0xf]
  %v152 = vld [vmem:[%s0 + $0x14] sm:$0xf]
  %v153 = vld [vmem:[%s0 + $0x18] sm:$0xf]
  %v154 = vld [vmem:[%s0 + $0x1c] sm:$0xf]
  %v155 = vld [vmem:[%s0 + $0x20] sm:$0xf]
  %v156 = vld [vmem:[%s0 + $0x24] sm:$0xf]
  %v157 = vld [vmem:[%s0 + $0x28] sm:$0xf]
  %v158 = vld [vmem:[%s0 + $0x2c] sm:$0xf]
  %v159 = vld [vmem:[%s0 + $0x30] sm:$0xf]
  %v160 = vld [vmem:[%s0 + $0x34] sm:$0xf]
  %v161 = vld [vmem:[%s0 + $0x38] sm:$0xf]
  %v162 = vld [vmem:[%s0 + $0x3c] sm:$0xf]
  %v163 = vld [vmem:[%s0 + $0x40] sm:$0xf]
  %v164 = vld [vmem:[%s0 + $0x44] sm:$0xf]
  %v165 = vld [vmem:[%s0 + $0x48] sm:$0xf]
  %v166 = vld [vmem:[%s0 + $0x4c] sm:$0xf]
  %v167 = vld [vmem:[%s0 + $0x50] sm:$0xf]
  %v168 = vld [vmem:[%s0 + $0x54] sm:$0xf]
  %v169 = vld [vmem:[%s0 + $0x58] sm:$0xf]
  %v170 = vld [vmem:[%s0 + $0x5c] sm:$0xf]
  %v171 = vld [vmem:[%s0 + $0x60] sm:$0xf]
  %v172 = vld [vmem:[%s0 + $0x64] sm:$0xf]
  %v173 = vld [vmem:[%s0 + $0x68] sm:$0xf]
  %v174 = vld [vmem:[%s0 + $0x6c] sm:$0xf]
  %v175 = vld [vmem:[%s0 + $0x70] sm:$0xf]
  %v176 = vld [vmem:[%s0 + $0x74] sm:$0xf]
  %v177 = vld [vmem:[%s0 + $0x78] sm:$0xf]
  %v178 = vld [vmem:[%s0 + $0x7c] sm:$0xf]
  %v179 = vld [vmem:[%s0 + $0x80] sm:$0xf]
  %v180 = vld [vmem:[%s0 + $0x84] sm:$0xf]
  %v181 = vld [vmem:[%s0 + $0x88] sm:$0xf]
  %v182 = vld [vmem:[%s0 + $0x8c] sm:$0xf]
  %v183 = vld [vmem:[%s0 + $0x90] sm:$0xf]
  %v184 = vld [vmem:[%s0 + $0x94] sm:$0xf]
  %v185 = vld [vmem:[%s0 + $0x98] sm:$0xf]
  %v186 = vld [vmem:[%s0 + $0x9c] sm:$0xf]
  %v187 = vld [vmem:[%s0 + $0xa0] sm:$0xf]
  %v188 = vld [vmem:[%s0 + $0xa4] sm:$0xf]
  %v189 = vld [vmem:[%s0 + $0xa8] sm:$0xf]
  %v190 = vld [vmem:[%s0 + $0xac] sm:$0xf]
  %v191 = vld [vmem:[%s0 + $0xb0] sm:$0xf]
  %v192 = vld [vmem:[%s0 + $0xb4] sm:$0xf]
  %v193 = vld [vmem:[%s0 + $0xb8] sm:$0xf]
  %v194 = vld [vmem:[%s0 + $0xbc] sm:$0xf]
  %v195 = vld [vmem:[%s0 + $0xc0] sm:$0xf]
  %v196 = vld [vmem:[%s0 + $0xc4] sm:$0xf]
  %v197 = vld [vmem:[%s0 + $0xc8] sm:$0xf]
  %v198 = vld [vmem:[%s0 + $0xcc] sm:$0xf]
  %v199 = vld [vmem:[%s0 + $0xd0] sm:$0xf]
  %v200 = vld [vmem:[%s0 + $0xd4] sm:$0xf]
  %v201 = vld [vmem:[%s0 + $0xd8] sm:$0xf]
  %v202 = vld [vmem:[%s0 + $0xdc] sm:$0xf]
  %v203 = vld [vmem:[%s0 + $0xe0] sm:$0xf]
  %v204 = vld [vmem:[%s0 + $0xe4] sm:$0xf]
  %v205 = vld [vmem:[%s0 + $0xe8] sm:$0xf]
  %v206 = vld [vmem:[%s0 + $0xec] sm:$0xf]
  %v207 = vld [vmem:[%s0 + $0xf0] sm:$0xf]
  %v208 = vld [vmem:[%s0 + $0xf4] sm:$0xf]
  %v209 = vld [vmem:[%s0 + $0xf8] sm:$0xf]
  %v210 = vld [vmem:[%s0 + $0xfc] sm:$0xf]
  %v211 = vld [vmem:[%s1] sm:$0xf]
  %v212 = vld [vmem:[%s1 + $0x4] sm:$0xf]
  %v213 = vld [vmem:[%s1 + $0x8] sm:$0xf]
  %v214 = vld [vmem:[%s1 + $0xc] sm:$0xf]
  %v215 = vld [vmem:[%s1 + $0x10] sm:$0xf]
  %v216 = vld [vmem:[%s1 + $0x14] sm:$0xf]
  %v217 = vld [vmem:[%s1 + $0x18] sm:$0xf]
  %v218 = vld [vmem:[%s1 + $0x1c] sm:$0xf]
  %v219 = vld [vmem:[%s1 + $0x20] sm:$0xf]
  %v220 = vld [vmem:[%s1 + $0x24] sm:$0xf]
  %v221 = vld [vmem:[%s1 + $0x28] sm:$0xf]
  %v222 = vld [vmem:[%s1 + $0x2c] sm:$0xf]
  %v223 = vld [vmem:[%s1 + $0x30] sm:$0xf]
  %v224 = vld [vmem:[%s1 + $0x34] sm:$0xf]
  %v225 = vld [vmem:[%s1 + $0x38] sm:$0xf]
  %v226 = vld [vmem:[%s1 + $0x3c] sm:$0xf]
  %v291 = vunpack.c.l.b16 %v147
  %v292 = vunpack.c.l.b16 %v148
  %v293 = vunpack.c.l.b16 %v149
  %v294 = vunpack.c.l.b16 %v150
  %v295 = vunpack.c.l.b16 %v151
  %v296 = vunpack.c.l.b16 %v152
  %v297 = vunpack.c.l.b16 %v153
  %v298 = vunpack.c.l.b16 %v154
  %v299 = vunpack.c.l.b16 %v155
  %v300 = vunpack.c.l.b16 %v156
  %v301 = vunpack.c.l.b16 %v157
  %v302 = vunpack.c.l.b16 %v158
  %v303 = vunpack.c.l.b16 %v159
  %v304 = vunpack.c.l.b16 %v160
  %v305 = vunpack.c.l.b16 %v161
  %v306 = vunpack.c.l.b16 %v162
  %v307 = vunpack.c.l.b16 %v163
  %v308 = vunpack.c.l.b16 %v164
  %v309 = vunpack.c.l.b16 %v165
  %v310 = vunpack.c.l.b16 %v166
  %v311 = vunpack.c.l.b16 %v167
  %v312 = vunpack.c.l.b16 %v168
  %v313 = vunpack.c.l.b16 %v169
  %v314 = vunpack.c.l.b16 %v170
  %v315 = vunpack.c.l.b16 %v171
  %v316 = vunpack.c.l.b16 %v172
  %v317 = vunpack.c.l.b16 %v173
  %v318 = vunpack.c.l.b16 %v174
  %v319 = vunpack.c.l.b16 %v175
  %v320 = vunpack.c.l.b16 %v176
  %v321 = vunpack.c.l.b16 %v177
  %v322 = vunpack.c.l.b16 %v178
  %v323 = vunpack.c.l.b16 %v179
  %v324 = vunpack.c.l.b16 %v180
  %v325 = vunpack.c.l.b16 %v181
  %v326 = vunpack.c.l.b16 %v182
  %v327 = vunpack.c.l.b16 %v183
  %v328 = vunpack.c.l.b16 %v184
  %v329 = vunpack.c.l.b16 %v185
  %v330 = vunpack.c.l.b16 %v186
  %v331 = vunpack.c.l.b16 %v187
  %v332 = vunpack.c.l.b16 %v188
  %v333 = vunpack.c.l.b16 %v189
  %v334 = vunpack.c.l.b16 %v190
  %v335 = vunpack.c.l.b16 %v191
  %v336 = vunpack.c.l.b16 %v192
  %v337 = vunpack.c.l.b16 %v193
  %v338 = vunpack.c.l.b16 %v194
  %v339 = vunpack.c.l.b16 %v195
  %v340 = vunpack.c.l.b16 %v196
  %v341 = vunpack.c.l.b16 %v197
  %v342 = vunpack.c.l.b16 %v198
  %v343 = vunpack.c.l.b16 %v199
  %v344 = vunpack.c.l.b16 %v200
  %v345 = vunpack.c.l.b16 %v201
  %v346 = vunpack.c.l.b16 %v202
  %v347 = vunpack.c.l.b16 %v203
  %v348 = vunpack.c.l.b16 %v204
  %v349 = vunpack.c.l.b16 %v205
  %v350 = vunpack.c.l.b16 %v206
  %v351 = vunpack.c.l.b16 %v207
  %v352 = vunpack.c.l.b16 %v208
  %v353 = vunpack.c.l.b16 %v209
  %v354 = vunpack.c.l.b16 %v210
  %v355 = vpack.c.b16 %v292, %v291
  %v356 = vpack.c.b16 %v294, %v293
  %v357 = vpack.c.b16 %v296, %v295
  %v358 = vpack.c.b16 %v298, %v297
  %v359 = vpack.c.b16 %v300, %v299
  %v360 = vpack.c.b16 %v302, %v301
  %v361 = vpack.c.b16 %v304, %v303
  %v362 = vpack.c.b16 %v306, %v305
  %v363 = vpack.c.b16 %v308, %v307
  %v364 = vpack.c.b16 %v310, %v309
  %v365 = vpack.c.b16 %v312, %v311
  %v366 = vpack.c.b16 %v314, %v313
  %v367 = vpack.c.b16 %v316, %v315
  %v368 = vpack.c.b16 %v318, %v317
  %v369 = vpack.c.b16 %v320, %v319
  %v370 = vpack.c.b16 %v322, %v321
  %v371 = vpack.c.b16 %v324, %v323
  %v372 = vpack.c.b16 %v326, %v325
  %v373 = vpack.c.b16 %v328, %v327
  %v374 = vpack.c.b16 %v330, %v329
  %v375 = vpack.c.b16 %v332, %v331
  %v376 = vpack.c.b16 %v334, %v333
  %v377 = vpack.c.b16 %v336, %v335
  %v378 = vpack.c.b16 %v338, %v337
  %v379 = vpack.c.b16 %v340, %v339
  %v380 = vpack.c.b16 %v342, %v341
  %v381 = vpack.c.b16 %v344, %v343
  %v382 = vpack.c.b16 %v346, %v345
  %v383 = vpack.c.b16 %v348, %v347
  %v384 = vpack.c.b16 %v350, %v349
  %v385 = vpack.c.b16 %v352, %v351
  %v386 = vpack.c.b16 %v354, %v353
  %v435 = vunpack.c.l.b16 %v211
  %v436 = vunpack.c.l.b16 %v212
  %v437 = vunpack.c.l.b16 %v213
  %v438 = vunpack.c.l.b16 %v214
  %v439 = vunpack.c.l.b16 %v215
  %v440 = vunpack.c.l.b16 %v216
  %v441 = vunpack.c.l.b16 %v217
  %v442 = vunpack.c.l.b16 %v218
  %v443 = vunpack.c.l.b16 %v219
  %v444 = vunpack.c.l.b16 %v220
  %v445 = vunpack.c.l.b16 %v221
  %v446 = vunpack.c.l.b16 %v222
  %v447 = vunpack.c.l.b16 %v223
  %v448 = vunpack.c.l.b16 %v224
  %v449 = vunpack.c.l.b16 %v225
  %v450 = vunpack.c.l.b16 %v226
  %v451 = vpack.c.b16 %v436, %v435
  %v452 = vpack.c.b16 %v438, %v437
  %v453 = vpack.c.b16 %v440, %v439
  %v454 = vpack.c.b16 %v442, %v441
  %v455 = vpack.c.b16 %v444, %v443
  %v456 = vpack.c.b16 %v446, %v445
  %v457 = vpack.c.b16 %v448, %v447
  %v458 = vpack.c.b16 %v450, %v449
  %467 = vmatprep.subr.bf16.mxu0 0
  %468 = vmatpush1.bf16.msra.mxu0 %v458
  %469 = vmatprep.subr.bf16.mxu0 0
  %470 = vmatpush1.bf16.msra.mxu0 %v457
  %471 = vmatprep.subr.bf16.mxu0 0
  %472 = vmatpush1.bf16.msra.mxu0 %v456
  %473 = vmatprep.subr.bf16.mxu0 0
  %474 = vmatpush1.bf16.msra.mxu0 %v455
  %475 = vmatprep.subr.bf16.mxu0 0
  %476 = vmatpush1.bf16.msra.mxu0 %v454
  %477 = vmatprep.subr.bf16.mxu0 0
  %478 = vmatpush1.bf16.msra.mxu0 %v453
  %479 = vmatprep.subr.bf16.mxu0 0
  %480 = vmatpush1.bf16.msra.mxu0 %v452
  %481 = vmatprep.subr.bf16.mxu0 0
  %482 = vmatpush1.bf16.msra.mxu0 %v451
  %483 = vmatprep.subr.bf16.mxu0 0
  %484 = vmatpush2.bf16.msra.mxu0 0
  %485 = vmatprep.subr.bf16.mxu0 0
  %486 = vmatpush2.bf16.msra.mxu0 0
  %487 = vmatprep.subr.bf16.mxu0 0
  %488 = vmatpush2.bf16.msra.mxu0 0
  %489 = vmatprep.subr.bf16.mxu0 0
  %490 = vmatpush2.bf16.msra.mxu0 0
  %491 = vmatprep.subr.bf16.mxu0 0
  %492 = vmatpush2.bf16.msra.mxu0 0
  %493 = vmatprep.subr.bf16.mxu0 0
  %494 = vmatpush2.bf16.msra.mxu0 0
  %495 = vmatprep.subr.bf16.mxu0 0
  %496 = vmatpush2.bf16.msra.mxu0 0
  %497 = vmatprep.subr.bf16.mxu0 0
  %498 = vmatpush2.bf16.msra.mxu0 0
  %499 = vmatprep.mubr.bf16.mxu0 0
  %500 = vmatmul.mubr.bf16.gmra.mxu0 %v355
  %v501 = vpop.f32.mrf.mxu0
  %v502 = vadd.f32 0.0, %v501
  %v503 = vpop.f32.mrf.mxu0
  %v504 = vpop.f32.mrf.mxu0
  %v505 = vadd.f32 0.0, %v504
  %v506 = vpop.f32.mrf.mxu0
  %507 = vmatprep.mubr.bf16.mxu0 0
  %508 = vmatmul.mubr.bf16.gmra.mxu0 %v356
  %v509 = vpop.f32.mrf.mxu0
  %v510 = vadd.f32 0.0, %v509
  %v511 = vpop.f32.mrf.mxu0
  %v512 = vpop.f32.mrf.mxu0
  %v513 = vadd.f32 0.0, %v512
  %v514 = vpop.f32.mrf.mxu0
  %515 = vmatprep.mubr.bf16.mxu0 0
  %516 = vmatmul.mubr.bf16.gmra.mxu0 %v357
  %v517 = vpop.f32.mrf.mxu0
  %v518 = vadd.f32 0.0, %v517
  %v519 = vpop.f32.mrf.mxu0
  %v520 = vpop.f32.mrf.mxu0
  %v521 = vadd.f32 0.0, %v520
  %v522 = vpop.f32.mrf.mxu0
  %523 = vmatprep.mubr.bf16.mxu0 0
  %524 = vmatmul.mubr.bf16.gmra.mxu0 %v358
  %v525 = vpop.f32.mrf.mxu0
  %v526 = vadd.f32 0.0, %v525
  %v527 = vpop.f32.mrf.mxu0
  %v528 = vpop.f32.mrf.mxu0
  %v529 = vadd.f32 0.0, %v528
  %v530 = vpop.f32.mrf.mxu0
  %531 = vmatprep.mubr.bf16.mxu0 0
  %532 = vmatmul.mubr.bf16.gmra.mxu0 %v359
  %v533 = vpop.f32.mrf.mxu0
  %v534 = vadd.f32 0.0, %v533
  %v535 = vpop.f32.mrf.mxu0
  %v536 = vpop.f32.mrf.mxu0
  %v537 = vadd.f32 0.0, %v536
  %v538 = vpop.f32.mrf.mxu0
  %539 = vmatprep.mubr.bf16.mxu0 0
  %540 = vmatmul.mubr.bf16.gmra.mxu0 %v360
  %v541 = vpop.f32.mrf.mxu0
  %v542 = vadd.f32 0.0, %v541
  %v543 = vpop.f32.mrf.mxu0
  %v544 = vpop.f32.mrf.mxu0
  %v545 = vadd.f32 0.0, %v544
  %v546 = vpop.f32.mrf.mxu0
  %547 = vmatprep.mubr.bf16.mxu0 0
  %548 = vmatmul.mubr.bf16.gmra.mxu0 %v361
  %v549 = vpop.f32.mrf.mxu0
  %v550 = vadd.f32 0.0, %v549
  %v551 = vpop.f32.mrf.mxu0
  %v552 = vpop.f32.mrf.mxu0
  %v553 = vadd.f32 0.0, %v552
  %v554 = vpop.f32.mrf.mxu0
  %555 = vmatprep.mubr.bf16.mxu0 0
  %556 = vmatmul.mubr.bf16.gmra.mxu0 %v362
  %v557 = vpop.f32.mrf.mxu0
  %v558 = vadd.f32 0.0, %v557
  %v559 = vpop.f32.mrf.mxu0
  %v560 = vpop.f32.mrf.mxu0
  %v561 = vadd.f32 0.0, %v560
  %v562 = vpop.f32.mrf.mxu0
  %563 = vmatprep.mubr.bf16.mxu0 0
  %564 = vmatmul.mubr.bf16.gmra.mxu0 %v363
  %v565 = vpop.f32.mrf.mxu0
  %v566 = vadd.f32 0.0, %v565
  %v567 = vpop.f32.mrf.mxu0
  %v568 = vpop.f32.mrf.mxu0
  %v569 = vadd.f32 0.0, %v568
  %v570 = vpop.f32.mrf.mxu0
  %571 = vmatprep.mubr.bf16.mxu0 0
  %572 = vmatmul.mubr.bf16.gmra.mxu0 %v364
  %v573 = vpop.f32.mrf.mxu0
  %v574 = vadd.f32 0.0, %v573
  %v575 = vpop.f32.mrf.mxu0
  %v576 = vpop.f32.mrf.mxu0
  %v577 = vadd.f32 0.0, %v576
  %v578 = vpop.f32.mrf.mxu0
  %579 = vmatprep.mubr.bf16.mxu0 0
  %580 = vmatmul.mubr.bf16.gmra.mxu0 %v365
  %v581 = vpop.f32.mrf.mxu0
  %v582 = vadd.f32 0.0, %v581
  %v583 = vpop.f32.mrf.mxu0
  %v584 = vpop.f32.mrf.mxu0
  %v585 = vadd.f32 0.0, %v584
  %v586 = vpop.f32.mrf.mxu0
  %587 = vmatprep.mubr.bf16.mxu0 0
  %588 = vmatmul.mubr.bf16.gmra.mxu0 %v366
  %v589 = vpop.f32.mrf.mxu0
  %v590 = vadd.f32 0.0, %v589
  %v591 = vpop.f32.mrf.mxu0
  %v592 = vpop.f32.mrf.mxu0
  %v593 = vadd.f32 0.0, %v592
  %v594 = vpop.f32.mrf.mxu0
  %595 = vmatprep.mubr.bf16.mxu0 0
  %596 = vmatmul.mubr.bf16.gmra.mxu0 %v367
  %v597 = vpop.f32.mrf.mxu0
  %v598 = vadd.f32 0.0, %v597
  %v599 = vpop.f32.mrf.mxu0
  %v600 = vpop.f32.mrf.mxu0
  %v601 = vadd.f32 0.0, %v600
  %v602 = vpop.f32.mrf.mxu0
  %603 = vmatprep.mubr.bf16.mxu0 0
  %604 = vmatmul.mubr.bf16.gmra.mxu0 %v368
  %v605 = vpop.f32.mrf.mxu0
  %v606 = vadd.f32 0.0, %v605
  %v607 = vpop.f32.mrf.mxu0
  %v608 = vpop.f32.mrf.mxu0
  %v609 = vadd.f32 0.0, %v608
  %v610 = vpop.f32.mrf.mxu0
  %611 = vmatprep.mubr.bf16.mxu0 0
  %612 = vmatmul.mubr.bf16.gmra.mxu0 %v369
  %v613 = vpop.f32.mrf.mxu0
  %v614 = vadd.f32 0.0, %v613
  %v615 = vpop.f32.mrf.mxu0
  %v616 = vpop.f32.mrf.mxu0
  %v617 = vadd.f32 0.0, %v616
  %v618 = vpop.f32.mrf.mxu0
  %619 = vmatprep.mubr.bf16.mxu0 0
  %620 = vmatmul.mubr.bf16.gmra.mxu0 %v370
  %v621 = vpop.f32.mrf.mxu0
  %v622 = vadd.f32 0.0, %v621
  %v623 = vpop.f32.mrf.mxu0
  %v624 = vpop.f32.mrf.mxu0
  %v625 = vadd.f32 0.0, %v624
  %v626 = vpop.f32.mrf.mxu0
  %627 = vmatprep.mubr.bf16.mxu0 0
  %628 = vmatmul.mubr.bf16.gmra.mxu0 %v371
  %v629 = vpop.f32.mrf.mxu0
  %v630 = vadd.f32 0.0, %v629
  %v631 = vpop.f32.mrf.mxu0
  %v632 = vpop.f32.mrf.mxu0
  %v633 = vadd.f32 0.0, %v632
  %v634 = vpop.f32.mrf.mxu0
  %635 = vmatprep.mubr.bf16.mxu0 0
  %636 = vmatmul.mubr.bf16.gmra.mxu0 %v372
  %v637 = vpop.f32.mrf.mxu0
  %v638 = vadd.f32 0.0, %v637
  %v639 = vpop.f32.mrf.mxu0
  %v640 = vpop.f32.mrf.mxu0
  %v641 = vadd.f32 0.0, %v640
  %v642 = vpop.f32.mrf.mxu0
  %643 = vmatprep.mubr.bf16.mxu0 0
  %644 = vmatmul.mubr.bf16.gmra.mxu0 %v373
  %v645 = vpop.f32.mrf.mxu0
  %v646 = vadd.f32 0.0, %v645
  %v647 = vpop.f32.mrf.mxu0
  %v648 = vpop.f32.mrf.mxu0
  %v649 = vadd.f32 0.0, %v648
  %v650 = vpop.f32.mrf.mxu0
  %651 = vmatprep.mubr.bf16.mxu0 0
  %652 = vmatmul.mubr.bf16.gmra.mxu0 %v374
  %v653 = vpop.f32.mrf.mxu0
  %v654 = vadd.f32 0.0, %v653
  %v655 = vpop.f32.mrf.mxu0
  %v656 = vpop.f32.mrf.mxu0
  %v657 = vadd.f32 0.0, %v656
  %v658 = vpop.f32.mrf.mxu0
  %659 = vmatprep.mubr.bf16.mxu0 0
  %660 = vmatmul.mubr.bf16.gmra.mxu0 %v375
  %v661 = vpop.f32.mrf.mxu0
  %v662 = vadd.f32 0.0, %v661
  %v663 = vpop.f32.mrf.mxu0
  %v664 = vpop.f32.mrf.mxu0
  %v665 = vadd.f32 0.0, %v664
  %v666 = vpop.f32.mrf.mxu0
  %667 = vmatprep.mubr.bf16.mxu0 0
  %668 = vmatmul.mubr.bf16.gmra.mxu0 %v376
  %v669 = vpop.f32.mrf.mxu0
  %v670 = vadd.f32 0.0, %v669
  %v671 = vpop.f32.mrf.mxu0
  %v672 = vpop.f32.mrf.mxu0
  %v673 = vadd.f32 0.0, %v672
  %v674 = vpop.f32.mrf.mxu0
  %675 = vmatprep.mubr.bf16.mxu0 0
  %676 = vmatmul.mubr.bf16.gmra.mxu0 %v377
  %v677 = vpop.f32.mrf.mxu0
  %v678 = vadd.f32 0.0, %v677
  %v679 = vpop.f32.mrf.mxu0
  %v680 = vpop.f32.mrf.mxu0
  %v681 = vadd.f32 0.0, %v680
  %v682 = vpop.f32.mrf.mxu0
  %683 = vmatprep.mubr.bf16.mxu0 0
  %684 = vmatmul.mubr.bf16.gmra.mxu0 %v378
  %v685 = vpop.f32.mrf.mxu0
  %v686 = vadd.f32 0.0, %v685
  %v687 = vpop.f32.mrf.mxu0
  %v688 = vpop.f32.mrf.mxu0
  %v689 = vadd.f32 0.0, %v688
  %v690 = vpop.f32.mrf.mxu0
  %691 = vmatprep.mubr.bf16.mxu0 0
  %692 = vmatmul.mubr.bf16.gmra.mxu0 %v379
  %v693 = vpop.f32.mrf.mxu0
  %v694 = vadd.f32 0.0, %v693
  %v695 = vpop.f32.mrf.mxu0
  %v696 = vpop.f32.mrf.mxu0
  %v697 = vadd.f32 0.0, %v696
  %v698 = vpop.f32.mrf.mxu0
  %699 = vmatprep.mubr.bf16.mxu0 0
  %700 = vmatmul.mubr.bf16.gmra.mxu0 %v380
  %v701 = vpop.f32.mrf.mxu0
  %v702 = vadd.f32 0.0, %v701
  %v703 = vpop.f32.mrf.mxu0
  %v704 = vpop.f32.mrf.mxu0
  %v705 = vadd.f32 0.0, %v704
  %v706 = vpop.f32.mrf.mxu0
  %707 = vmatprep.mubr.bf16.mxu0 0
  %708 = vmatmul.mubr.bf16.gmra.mxu0 %v381
  %v709 = vpop.f32.mrf.mxu0
  %v710 = vadd.f32 0.0, %v709
  %v711 = vpop.f32.mrf.mxu0
  %v712 = vpop.f32.mrf.mxu0
  %v713 = vadd.f32 0.0, %v712
  %v714 = vpop.f32.mrf.mxu0
  %715 = vmatprep.mubr.bf16.mxu0 0
  %716 = vmatmul.mubr.bf16.gmra.mxu0 %v382
  %v717 = vpop.f32.mrf.mxu0
  %v718 = vadd.f32 0.0, %v717
  %v719 = vpop.f32.mrf.mxu0
  %v720 = vpop.f32.mrf.mxu0
  %v721 = vadd.f32 0.0, %v720
  %v722 = vpop.f32.mrf.mxu0
  %723 = vmatprep.mubr.bf16.mxu0 0
  %724 = vmatmul.mubr.bf16.gmra.mxu0 %v383
  %v725 = vpop.f32.mrf.mxu0
  %v726 = vadd.f32 0.0, %v725
  %v727 = vpop.f32.mrf.mxu0
  %v728 = vpop.f32.mrf.mxu0
  %v729 = vadd.f32 0.0, %v728
  %v730 = vpop.f32.mrf.mxu0
  %731 = vmatprep.mubr.bf16.mxu0 0
  %732 = vmatmul.mubr.bf16.gmra.mxu0 %v384
  %v733 = vpop.f32.mrf.mxu0
  %v734 = vadd.f32 0.0, %v733
  %v735 = vpop.f32.mrf.mxu0
  %v736 = vpop.f32.mrf.mxu0
  %v737 = vadd.f32 0.0, %v736
  %v738 = vpop.f32.mrf.mxu0
  %739 = vmatprep.mubr.bf16.mxu0 0
  %740 = vmatmul.mubr.bf16.gmra.mxu0 %v385
  %v741 = vpop.f32.mrf.mxu0
  %v742 = vadd.f32 0.0, %v741
  %v743 = vpop.f32.mrf.mxu0
  %v744 = vpop.f32.mrf.mxu0
  %v745 = vadd.f32 0.0, %v744
  %v746 = vpop.f32.mrf.mxu0
  %747 = vmatprep.mubr.bf16.mxu0 0
  %748 = vmatmul.mubr.bf16.gmra.mxu0 %v386
  %v749 = vpop.f32.mrf.mxu0
  %v750 = vadd.f32 0.0, %v749
  %v751 = vpop.f32.mrf.mxu0
  %v752 = vpop.f32.mrf.mxu0
  %v753 = vadd.f32 0.0, %v752
  %v754 = vpop.f32.mrf.mxu0
  %755 = vdwg.mxu0
  %v756 = vadd.f32 %v83, %v502
  %v757 = vadd.f32 %v84, %v505
  %v758 = vadd.f32 %v85, %v510
  %v759 = vadd.f32 %v86, %v513
  %v760 = vadd.f32 %v87, %v518
  %v761 = vadd.f32 %v88, %v521
  %v762 = vadd.f32 %v89, %v526
  %v763 = vadd.f32 %v90, %v529
  %v764 = vadd.f32 %v91, %v534
  %v765 = vadd.f32 %v92, %v537
  %v766 = vadd.f32 %v93, %v542
  %v767 = vadd.f32 %v94, %v545
  %v768 = vadd.f32 %v95, %v550
  %v769 = vadd.f32 %v96, %v553
  %v770 = vadd.f32 %v97, %v558
  %v771 = vadd.f32 %v98, %v561
  %v772 = vadd.f32 %v99, %v566
  %v773 = vadd.f32 %v100, %v569
  %v774 = vadd.f32 %v101, %v574
  %v775 = vadd.f32 %v102, %v577
  %v776 = vadd.f32 %v103, %v582
  %v777 = vadd.f32 %v104, %v585
  %v778 = vadd.f32 %v105, %v590
  %v779 = vadd.f32 %v106, %v593
  %v780 = vadd.f32 %v107, %v598
  %v781 = vadd.f32 %v108, %v601
  %v782 = vadd.f32 %v109, %v606
  %v783 = vadd.f32 %v110, %v609
  %v784 = vadd.f32 %v111, %v614
  %v785 = vadd.f32 %v112, %v617
  %v786 = vadd.f32 %v113, %v622
  %v787 = vadd.f32 %v114, %v625
  %v788 = vadd.f32 %v115, %v630
  %v789 = vadd.f32 %v116, %v633
  %v790 = vadd.f32 %v117, %v638
  %v791 = vadd.f32 %v118, %v641
  %v792 = vadd.f32 %v119, %v646
  %v793 = vadd.f32 %v120, %v649
  %v794 = vadd.f32 %v121, %v654
  %v795 = vadd.f32 %v122, %v657
  %v796 = vadd.f32 %v123, %v662
  %v797 = vadd.f32 %v124, %v665
  %v798 = vadd.f32 %v125, %v670
  %v799 = vadd.f32 %v126, %v673
  %v800 = vadd.f32 %v127, %v678
  %v801 = vadd.f32 %v128, %v681
  %v802 = vadd.f32 %v129, %v686
  %v803 = vadd.f32 %v130, %v689
  %v804 = vadd.f32 %v131, %v694
  %v805 = vadd.f32 %v132, %v697
  %v806 = vadd.f32 %v133, %v702
  %v807 = vadd.f32 %v134, %v705
  %v808 = vadd.f32 %v135, %v710
  %v809 = vadd.f32 %v136, %v713
  %v810 = vadd.f32 %v137, %v718
  %v811 = vadd.f32 %v138, %v721
  %v812 = vadd.f32 %v139, %v726
  %v813 = vadd.f32 %v140, %v729
  %v814 = vadd.f32 %v141, %v734
  %v815 = vadd.f32 %v142, %v737
  %v816 = vadd.f32 %v143, %v742
  %v817 = vadd.f32 %v144, %v745
  %v818 = vadd.f32 %v145, %v750
  %v819 = vadd.f32 %v146, %v753
  %820 = vst [vmem:[#allocation2] sm:$0xff] %v756
  %821 = vst [vmem:[#allocation2 + $0x8] sm:$0xff] %v757
  %822 = vst [vmem:[#allocation2 + $0x10] sm:$0xff] %v758
  %823 = vst [vmem:[#allocation2 + $0x18] sm:$0xff] %v759
  %824 = vst [vmem:[#allocation2 + $0x20] sm:$0xff] %v760
  %825 = vst [vmem:[#allocation2 + $0x28] sm:$0xff] %v761
  %826 = vst [vmem:[#allocation2 + $0x30] sm:$0xff] %v762
  %827 = vst [vmem:[#allocation2 + $0x38] sm:$0xff] %v763
  %828 = vst [vmem:[#allocation2 + $0x40] sm:$0xff] %v764
  %829 = vst [vmem:[#allocation2 + $0x48] sm:$0xff] %v765
  %830 = vst [vmem:[#allocation2 + $0x50] sm:$0xff] %v766
  %831 = vst [vmem:[#allocation2 + $0x58] sm:$0xff] %v767
  %832 = vst [vmem:[#allocation2 + $0x60] sm:$0xff] %v768
  %833 = vst [vmem:[#allocation2 + $0x68] sm:$0xff] %v769
  %834 = vst [vmem:[#allocation2 + $0x70] sm:$0xff] %v770
  %835 = vst [vmem:[#allocation2 + $0x78] sm:$0xff] %v771
  %836 = vst [vmem:[#allocation2 + $0x80] sm:$0xff] %v772
  %837 = vst [vmem:[#allocation2 + $0x88] sm:$0xff] %v773
  %838 = vst [vmem:[#allocation2 + $0x90] sm:$0xff] %v774
  %839 = vst [vmem:[#allocation2 + $0x98] sm:$0xff] %v775
  %840 = vst [vmem:[#allocation2 + $0xa0] sm:$0xff] %v776
  %841 = vst [vmem:[#allocation2 + $0xa8] sm:$0xff] %v777
  %842 = vst [vmem:[#allocation2 + $0xb0] sm:$0xff] %v778
  %843 = vst [vmem:[#allocation2 + $0xb8] sm:$0xff] %v779
  %844 = vst [vmem:[#allocation2 + $0xc0] sm:$0xff] %v780
  %845 = vst [vmem:[#allocation2 + $0xc8] sm:$0xff] %v781
  %846 = vst [vmem:[#allocation2 + $0xd0] sm:$0xff] %v782
  %847 = vst [vmem:[#allocation2 + $0xd8] sm:$0xff] %v783
  %848 = vst [vmem:[#allocation2 + $0xe0] sm:$0xff] %v784
  %849 = vst [vmem:[#allocation2 + $0xe8] sm:$0xff] %v785
  %850 = vst [vmem:[#allocation2 + $0xf0] sm:$0xff] %v786
  %851 = vst [vmem:[#allocation2 + $0xf8] sm:$0xff] %v787
  %852 = vst [vmem:[#allocation2 + $0x100] sm:$0xff] %v788
  %853 = vst [vmem:[#allocation2 + $0x108] sm:$0xff] %v789
  %854 = vst [vmem:[#allocation2 + $0x110] sm:$0xff] %v790
  %855 = vst [vmem:[#allocation2 + $0x118] sm:$0xff] %v791
  %856 = vst [vmem:[#allocation2 + $0x120] sm:$0xff] %v792
  %857 = vst [vmem:[#allocation2 + $0x128] sm:$0xff] %v793
  %858 = vst [vmem:[#allocation2 + $0x130] sm:$0xff] %v794
  %859 = vst [vmem:[#allocation2 + $0x138] sm:$0xff] %v795
  %860 = vst [vmem:[#allocation2 + $0x140] sm:$0xff] %v796
  %861 = vst [vmem:[#allocation2 + $0x148] sm:$0xff] %v797
  %862 = vst [vmem:[#allocation2 + $0x150] sm:$0xff] %v798
  %863 = vst [vmem:[#allocation2 + $0x158] sm:$0xff] %v799
  %864 = vst [vmem:[#allocation2 + $0x160] sm:$0xff] %v800
  %865 = vst [vmem:[#allocation2 + $0x168] sm:$0xff] %v801
  %866 = vst [vmem:[#allocation2 + $0x170] sm:$0xff] %v802
  %867 = vst [vmem:[#allocation2 + $0x178] sm:$0xff] %v803
  %868 = vst [vmem:[#allocation2 + $0x180] sm:$0xff] %v804
  %869 = vst [vmem:[#allocation2 + $0x188] sm:$0xff] %v805
  %870 = vst [vmem:[#allocation2 + $0x190] sm:$0xff] %v806
  %871 = vst [vmem:[#allocation2 + $0x198] sm:$0xff] %v807
  %872 = vst [vmem:[#allocation2 + $0x1a0] sm:$0xff] %v808
  %873 = vst [vmem:[#allocation2 + $0x1a8] sm:$0xff] %v809
  %874 = vst [vmem:[#allocation2 + $0x1b0] sm:$0xff] %v810
  %875 = vst [vmem:[#allocation2 + $0x1b8] sm:$0xff] %v811
  %876 = vst [vmem:[#allocation2 + $0x1c0] sm:$0xff] %v812
  %877 = vst [vmem:[#allocation2 + $0x1c8] sm:$0xff] %v813
  %878 = vst [vmem:[#allocation2 + $0x1d0] sm:$0xff] %v814
  %879 = vst [vmem:[#allocation2 + $0x1d8] sm:$0xff] %v815
  %880 = vst [vmem:[#allocation2 + $0x1e0] sm:$0xff] %v816
  %881 = vst [vmem:[#allocation2 + $0x1e8] sm:$0xff] %v817
  %882 = vst [vmem:[#allocation2 + $0x1f0] sm:$0xff] %v818
  %883 = vst [vmem:[#allocation2 + $0x1f8] sm:$0xff] %v819
  // Predicated region
  $region18: #{discriminator_forward.11} parent=0 // pred_check
    %p884 = pneg %p15
  $region19: #{discriminator_forward.11} parent=0 // pred_check_branch
    %886 = sbr.rel (%p884) target = $region21
  $region20: #{discriminator_forward.11} parent=0 // pred_region
    %v887 = vld [vmem:[#allocation2] sm:$0xff]
    %v888 = vld [vmem:[#allocation2 + $0x8] sm:$0xff]
    %v889 = vld [vmem:[#allocation2 + $0x10] sm:$0xff]
    %v890 = vld [vmem:[#allocation2 + $0x18] sm:$0xff]
    %v891 = vld [vmem:[#allocation2 + $0x20] sm:$0xff]
    %v892 = vld [vmem:[#allocation2 + $0x28] sm:$0xff]
    %v893 = vld [vmem:[#allocation2 + $0x30] sm:$0xff]
    %v894 = vld [vmem:[#allocation2 + $0x38] sm:$0xff]
    %v895 = vld [vmem:[#allocation2 + $0x40] sm:$0xff]
    %v896 = vld [vmem:[#allocation2 + $0x48] sm:$0xff]
    %v897 = vld [vmem:[#allocation2 + $0x50] sm:$0xff]
    %v898 = vld [vmem:[#allocation2 + $0x58] sm:$0xff]
    %v899 = vld [vmem:[#allocation2 + $0x60] sm:$0xff]
    %v900 = vld [vmem:[#allocation2 + $0x68] sm:$0xff]
    %v901 = vld [vmem:[#allocation2 + $0x70] sm:$0xff]
    %v902 = vld [vmem:[#allocation2 + $0x78] sm:$0xff]
    %v903 = vld [vmem:[#allocation2 + $0x80] sm:$0xff]
    %v904 = vld [vmem:[#allocation2 + $0x88] sm:$0xff]
    %v905 = vld [vmem:[#allocation2 + $0x90] sm:$0xff]
    %v906 = vld [vmem:[#allocation2 + $0x98] sm:$0xff]
    %v907 = vld [vmem:[#allocation2 + $0xa0] sm:$0xff]
    %v908 = vld [vmem:[#allocation2 + $0xa8] sm:$0xff]
    %v909 = vld [vmem:[#allocation2 + $0xb0] sm:$0xff]
    %v910 = vld [vmem:[#allocation2 + $0xb8] sm:$0xff]
    %v911 = vld [vmem:[#allocation2 + $0xc0] sm:$0xff]
    %v912 = vld [vmem:[#allocation2 + $0xc8] sm:$0xff]
    %v913 = vld [vmem:[#allocation2 + $0xd0] sm:$0xff]
    %v914 = vld [vmem:[#allocation2 + $0xd8] sm:$0xff]
    %v915 = vld [vmem:[#allocation2 + $0xe0] sm:$0xff]
    %v916 = vld [vmem:[#allocation2 + $0xe8] sm:$0xff]
    %v917 = vld [vmem:[#allocation2 + $0xf0] sm:$0xff]
    %v918 = vld [vmem:[#allocation2 + $0xf8] sm:$0xff]
    %v919 = vld [vmem:[#allocation2 + $0x100] sm:$0xff]
    %v920 = vld [vmem:[#allocation2 + $0x108] sm:$0xff]
    %v921 = vld [vmem:[#allocation2 + $0x110] sm:$0xff]
    %v922 = vld [vmem:[#allocation2 + $0x118] sm:$0xff]
    %v923 = vld [vmem:[#allocation2 + $0x120] sm:$0xff]
    %v924 = vld [vmem:[#allocation2 + $0x128] sm:$0xff]
    %v925 = vld [vmem:[#allocation2 + $0x130] sm:$0xff]
    %v926 = vld [vmem:[#allocation2 + $0x138] sm:$0xff]
    %v927 = vld [vmem:[#allocation2 + $0x140] sm:$0xff]
    %v928 = vld [vmem:[#allocation2 + $0x148] sm:$0xff]
    %v929 = vld [vmem:[#allocation2 + $0x150] sm:$0xff]
    %v930 = vld [vmem:[#allocation2 + $0x158] sm:$0xff]
    %v931 = vld [vmem:[#allocation2 + $0x160] sm:$0xff]
    %v932 = vld [vmem:[#allocation2 + $0x168] sm:$0xff]
    %v933 = vld [vmem:[#allocation2 + $0x170] sm:$0xff]
    %v934 = vld [vmem:[#allocation2 + $0x178] sm:$0xff]
    %v935 = vld [vmem:[#allocation2 + $0x180] sm:$0xff]
    %v936 = vld [vmem:[#allocation2 + $0x188] sm:$0xff]
    %v937 = vld [vmem:[#allocation2 + $0x190] sm:$0xff]
    %v938 = vld [vmem:[#allocation2 + $0x198] sm:$0xff]
    %v939 = vld [vmem:[#allocation2 + $0x1a0] sm:$0xff]
    %v940 = vld [vmem:[#allocation2 + $0x1a8] sm:$0xff]
    %v941 = vld [vmem:[#allocation2 + $0x1b0] sm:$0xff]
    %v942 = vld [vmem:[#allocation2 + $0x1b8] sm:$0xff]
    %v943 = vld [vmem:[#allocation2 + $0x1c0] sm:$0xff]
    %v944 = vld [vmem:[#allocation2 + $0x1c8] sm:$0xff]
    %v945 = vld [vmem:[#allocation2 + $0x1d0] sm:$0xff]
    %v946 = vld [vmem:[#allocation2 + $0x1d8] sm:$0xff]
    %v947 = vld [vmem:[#allocation2 + $0x1e0] sm:$0xff]
    %v948 = vld [vmem:[#allocation2 + $0x1e8] sm:$0xff]
    %v949 = vld [vmem:[#allocation2 + $0x1f0] sm:$0xff]
    %v950 = vld [vmem:[#allocation2 + $0x1f8] sm:$0xff]
    %v951 = vld [vmem:[%s2] sm:$0x1]
    %v953 = vlaneseq
    %v954 = vshrl.u32 %v953, 7
    %v955 = vsub.s32 0, %v954
    %v956 = vrot.slane %v951, %v955
    %v958 = vadd.f32 %v887, %v956
    %v959 = vadd.f32 %v888, %v956
    %v960 = vadd.f32 %v889, %v956
    %v961 = vadd.f32 %v890, %v956
    %v962 = vadd.f32 %v891, %v956
    %v963 = vadd.f32 %v892, %v956
    %v964 = vadd.f32 %v893, %v956
    %v965 = vadd.f32 %v894, %v956
    %v966 = vadd.f32 %v895, %v956
    %v967 = vadd.f32 %v896, %v956
    %v968 = vadd.f32 %v897, %v956
    %v969 = vadd.f32 %v898, %v956
    %v970 = vadd.f32 %v899, %v956
    %v971 = vadd.f32 %v900, %v956
    %v972 = vadd.f32 %v901, %v956
    %v973 = vadd.f32 %v902, %v956
    %v974 = vadd.f32 %v903, %v956
    %v975 = vadd.f32 %v904, %v956
    %v976 = vadd.f32 %v905, %v956
    %v977 = vadd.f32 %v906, %v956
    %v978 = vadd.f32 %v907, %v956
    %v979 = vadd.f32 %v908, %v956
    %v980 = vadd.f32 %v909, %v956
    %v981 = vadd.f32 %v910, %v956
    %v982 = vadd.f32 %v911, %v956
    %v983 = vadd.f32 %v912, %v956
    %v984 = vadd.f32 %v913, %v956
    %v985 = vadd.f32 %v914, %v956
    %v986 = vadd.f32 %v915, %v956
    %v987 = vadd.f32 %v916, %v956
    %v988 = vadd.f32 %v917, %v956
    %v989 = vadd.f32 %v918, %v956
    %v990 = vadd.f32 %v919, %v956
    %v991 = vadd.f32 %v920, %v956
    %v992 = vadd.f32 %v921, %v956
    %v993 = vadd.f32 %v922, %v956
    %v994 = vadd.f32 %v923, %v956
    %v995 = vadd.f32 %v924, %v956
    %v996 = vadd.f32 %v925, %v956
    %v997 = vadd.f32 %v926, %v956
    %v998 = vadd.f32 %v927, %v956
    %v999 = vadd.f32 %v928, %v956
    %v1000 = vadd.f32 %v929, %v956
    %v1001 = vadd.f32 %v930, %v956
    %v1002 = vadd.f32 %v931, %v956
    %v1003 = vadd.f32 %v932, %v956
    %v1004 = vadd.f32 %v933, %v956
    %v1005 = vadd.f32 %v934, %v956
    %v1006 = vadd.f32 %v935, %v956
    %v1007 = vadd.f32 %v936, %v956
    %v1008 = vadd.f32 %v937, %v956
    %v1009 = vadd.f32 %v938, %v956
    %v1010 = vadd.f32 %v939, %v956
    %v1011 = vadd.f32 %v940, %v956
    %v1012 = vadd.f32 %v941, %v956
    %v1013 = vadd.f32 %v942, %v956
    %v1014 = vadd.f32 %v943, %v956
    %v1015 = vadd.f32 %v944, %v956
    %v1016 = vadd.f32 %v945, %v956
    %v1017 = vadd.f32 %v946, %v956
    %v1018 = vadd.f32 %v947, %v956
    %v1019 = vadd.f32 %v948, %v956
    %v1020 = vadd.f32 %v949, %v956
    %v1021 = vadd.f32 %v950, %v956
    %vm1022 = vcmp.ge.f32.partialorder %v958, 0.0
    %vm1023 = vcmp.ge.f32.partialorder %v959, 0.0
    %vm1024 = vcmp.ge.f32.partialorder %v960, 0.0
    %vm1025 = vcmp.ge.f32.partialorder %v961, 0.0
    %vm1026 = vcmp.ge.f32.partialorder %v962, 0.0
    %vm1027 = vcmp.ge.f32.partialorder %v963, 0.0
    %vm1028 = vcmp.ge.f32.partialorder %v964, 0.0
    %vm1029 = vcmp.ge.f32.partialorder %v965, 0.0
    %vm1030 = vcmp.ge.f32.partialorder %v966, 0.0
    %vm1031 = vcmp.ge.f32.partialorder %v967, 0.0
    %vm1032 = vcmp.ge.f32.partialorder %v968, 0.0
    %vm1033 = vcmp.ge.f32.partialorder %v969, 0.0
    %vm1034 = vcmp.ge.f32.partialorder %v970, 0.0
    %vm1035 = vcmp.ge.f32.partialorder %v971, 0.0
    %vm1036 = vcmp.ge.f32.partialorder %v972, 0.0
    %vm1037 = vcmp.ge.f32.partialorder %v973, 0.0
    %vm1038 = vcmp.ge.f32.partialorder %v974, 0.0
    %vm1039 = vcmp.ge.f32.partialorder %v975, 0.0
    %vm1040 = vcmp.ge.f32.partialorder %v976, 0.0
    %vm1041 = vcmp.ge.f32.partialorder %v977, 0.0
    %vm1042 = vcmp.ge.f32.partialorder %v978, 0.0
    %vm1043 = vcmp.ge.f32.partialorder %v979, 0.0
    %vm1044 = vcmp.ge.f32.partialorder %v980, 0.0
    %vm1045 = vcmp.ge.f32.partialorder %v981, 0.0
    %vm1046 = vcmp.ge.f32.partialorder %v982, 0.0
    %vm1047 = vcmp.ge.f32.partialorder %v983, 0.0
    %vm1048 = vcmp.ge.f32.partialorder %v984, 0.0
    %vm1049 = vcmp.ge.f32.partialorder %v985, 0.0
    %vm1050 = vcmp.ge.f32.partialorder %v986, 0.0
    %vm1051 = vcmp.ge.f32.partialorder %v987, 0.0
    %vm1052 = vcmp.ge.f32.partialorder %v988, 0.0
    %vm1053 = vcmp.ge.f32.partialorder %v989, 0.0
    %vm1054 = vcmp.ge.f32.partialorder %v990, 0.0
    %vm1055 = vcmp.ge.f32.partialorder %v991, 0.0
    %vm1056 = vcmp.ge.f32.partialorder %v992, 0.0
    %vm1057 = vcmp.ge.f32.partialorder %v993, 0.0
    %vm1058 = vcmp.ge.f32.partialorder %v994, 0.0
    %vm1059 = vcmp.ge.f32.partialorder %v995, 0.0
    %vm1060 = vcmp.ge.f32.partialorder %v996, 0.0
    %vm1061 = vcmp.ge.f32.partialorder %v997, 0.0
    %vm1062 = vcmp.ge.f32.partialorder %v998, 0.0
    %vm1063 = vcmp.ge.f32.partialorder %v999, 0.0
    %vm1064 = vcmp.ge.f32.partialorder %v1000, 0.0
    %vm1065 = vcmp.ge.f32.partialorder %v1001, 0.0
    %vm1066 = vcmp.ge.f32.partialorder %v1002, 0.0
    %vm1067 = vcmp.ge.f32.partialorder %v1003, 0.0
    %vm1068 = vcmp.ge.f32.partialorder %v1004, 0.0
    %vm1069 = vcmp.ge.f32.partialorder %v1005, 0.0
    %vm1070 = vcmp.ge.f32.partialorder %v1006, 0.0
    %vm1071 = vcmp.ge.f32.partialorder %v1007, 0.0
    %vm1072 = vcmp.ge.f32.partialorder %v1008, 0.0
    %vm1073 = vcmp.ge.f32.partialorder %v1009, 0.0
    %vm1074 = vcmp.ge.f32.partialorder %v1010, 0.0
    %vm1075 = vcmp.ge.f32.partialorder %v1011, 0.0
    %vm1076 = vcmp.ge.f32.partialorder %v1012, 0.0
    %vm1077 = vcmp.ge.f32.partialorder %v1013, 0.0
    %vm1078 = vcmp.ge.f32.partialorder %v1014, 0.0
    %vm1079 = vcmp.ge.f32.partialorder %v1015, 0.0
    %vm1080 = vcmp.ge.f32.partialorder %v1016, 0.0
    %vm1081 = vcmp.ge.f32.partialorder %v1017, 0.0
    %vm1082 = vcmp.ge.f32.partialorder %v1018, 0.0
    %vm1083 = vcmp.ge.f32.partialorder %v1019, 0.0
    %vm1084 = vcmp.ge.f32.partialorder %v1020, 0.0
    %vm1085 = vcmp.ge.f32.partialorder %v1021, 0.0
    %v1086 = vmul.f32 %v958, 0.2
    %v1087 = vmul.f32 %v959, 0.2
    %v1088 = vmul.f32 %v960, 0.2
    %v1089 = vmul.f32 %v961, 0.2
    %v1090 = vmul.f32 %v962, 0.2
    %v1091 = vmul.f32 %v963, 0.2
    %v1092 = vmul.f32 %v964, 0.2
    %v1093 = vmul.f32 %v965, 0.2
    %v1094 = vmul.f32 %v966, 0.2
    %v1095 = vmul.f32 %v967, 0.2
    %v1096 = vmul.f32 %v968, 0.2
    %v1097 = vmul.f32 %v969, 0.2
    %v1098 = vmul.f32 %v970, 0.2
    %v1099 = vmul.f32 %v971, 0.2
    %v1100 = vmul.f32 %v972, 0.2
    %v1101 = vmul.f32 %v973, 0.2
    %v1102 = vmul.f32 %v974, 0.2
    %v1103 = vmul.f32 %v975, 0.2
    %v1104 = vmul.f32 %v976, 0.2
    %v1105 = vmul.f32 %v977, 0.2
    %v1106 = vmul.f32 %v978, 0.2
    %v1107 = vmul.f32 %v979, 0.2
    %v1108 = vmul.f32 %v980, 0.2
    %v1109 = vmul.f32 %v981, 0.2
    %v1110 = vmul.f32 %v982, 0.2
    %v1111 = vmul.f32 %v983, 0.2
    %v1112 = vmul.f32 %v984, 0.2
    %v1113 = vmul.f32 %v985, 0.2
    %v1114 = vmul.f32 %v986, 0.2
    %v1115 = vmul.f32 %v987, 0.2
    %v1116 = vmul.f32 %v988, 0.2
    %v1117 = vmul.f32 %v989, 0.2
    %v1118 = vmul.f32 %v990, 0.2
    %v1119 = vmul.f32 %v991, 0.2
    %v1120 = vmul.f32 %v992, 0.2
    %v1121 = vmul.f32 %v993, 0.2
    %v1122 = vmul.f32 %v994, 0.2
    %v1123 = vmul.f32 %v995, 0.2
    %v1124 = vmul.f32 %v996, 0.2
    %v1125 = vmul.f32 %v997, 0.2
    %v1126 = vmul.f32 %v998, 0.2
    %v1127 = vmul.f32 %v999, 0.2
    %v1128 = vmul.f32 %v1000, 0.2
    %v1129 = vmul.f32 %v1001, 0.2
    %v1130 = vmul.f32 %v1002, 0.2
    %v1131 = vmul.f32 %v1003, 0.2
    %v1132 = vmul.f32 %v1004, 0.2
    %v1133 = vmul.f32 %v1005, 0.2
    %v1134 = vmul.f32 %v1006, 0.2
    %v1135 = vmul.f32 %v1007, 0.2
    %v1136 = vmul.f32 %v1008, 0.2
    %v1137 = vmul.f32 %v1009, 0.2
    %v1138 = vmul.f32 %v1010, 0.2
    %v1139 = vmul.f32 %v1011, 0.2
    %v1140 = vmul.f32 %v1012, 0.2
    %v1141 = vmul.f32 %v1013, 0.2
    %v1142 = vmul.f32 %v1014, 0.2
    %v1143 = vmul.f32 %v1015, 0.2
    %v1144 = vmul.f32 %v1016, 0.2
    %v1145 = vmul.f32 %v1017, 0.2
    %v1146 = vmul.f32 %v1018, 0.2
    %v1147 = vmul.f32 %v1019, 0.2
    %v1148 = vmul.f32 %v1020, 0.2
    %v1149 = vmul.f32 %v1021, 0.2
    %v1150 = vsel %vm1022, %v958, %v1086
    %v1151 = vsel %vm1023, %v959, %v1087
    %v1152 = vsel %vm1024, %v960, %v1088
    %v1153 = vsel %vm1025, %v961, %v1089
    %v1154 = vsel %vm1026, %v962, %v1090
    %v1155 = vsel %vm1027, %v963, %v1091
    %v1156 = vsel %vm1028, %v964, %v1092
    %v1157 = vsel %vm1029, %v965, %v1093
    %v1158 = vsel %vm1030, %v966, %v1094
    %v1159 = vsel %vm1031, %v967, %v1095
    %v1160 = vsel %vm1032, %v968, %v1096
    %v1161 = vsel %vm1033, %v969, %v1097
    %v1162 = vsel %vm1034, %v970, %v1098
    %v1163 = vsel %vm1035, %v971, %v1099
    %v1164 = vsel %vm1036, %v972, %v1100
    %v1165 = vsel %vm1037, %v973, %v1101
    %v1166 = vsel %vm1038, %v974, %v1102
    %v1167 = vsel %vm1039, %v975, %v1103
    %v1168 = vsel %vm1040, %v976, %v1104
    %v1169 = vsel %vm1041, %v977, %v1105
    %v1170 = vsel %vm1042, %v978, %v1106
    %v1171 = vsel %vm1043, %v979, %v1107
    %v1172 = vsel %vm1044, %v980, %v1108
    %v1173 = vsel %vm1045, %v981, %v1109
    %v1174 = vsel %vm1046, %v982, %v1110
    %v1175 = vsel %vm1047, %v983, %v1111
    %v1176 = vsel %vm1048, %v984, %v1112
    %v1177 = vsel %vm1049, %v985, %v1113
    %v1178 = vsel %vm1050, %v986, %v1114
    %v1179 = vsel %vm1051, %v987, %v1115
    %v1180 = vsel %vm1052, %v988, %v1116
    %v1181 = vsel %vm1053, %v989, %v1117
    %v1182 = vsel %vm1054, %v990, %v1118
    %v1183 = vsel %vm1055, %v991, %v1119
    %v1184 = vsel %vm1056, %v992, %v1120
    %v1185 = vsel %vm1057, %v993, %v1121
    %v1186 = vsel %vm1058, %v994, %v1122
    %v1187 = vsel %vm1059, %v995, %v1123
    %v1188 = vsel %vm1060, %v996, %v1124
    %v1189 = vsel %vm1061, %v997, %v1125
    %v1190 = vsel %vm1062, %v998, %v1126
    %v1191 = vsel %vm1063, %v999, %v1127
    %v1192 = vsel %vm1064, %v1000, %v1128
    %v1193 = vsel %vm1065, %v1001, %v1129
    %v1194 = vsel %vm1066, %v1002, %v1130
    %v1195 = vsel %vm1067, %v1003, %v1131
    %v1196 = vsel %vm1068, %v1004, %v1132
    %v1197 = vsel %vm1069, %v1005, %v1133
    %v1198 = vsel %vm1070, %v1006, %v1134
    %v1199 = vsel %vm1071, %v1007, %v1135
    %v1200 = vsel %vm1072, %v1008, %v1136
    %v1201 = vsel %vm1073, %v1009, %v1137
    %v1202 = vsel %vm1074, %v1010, %v1138
    %v1203 = vsel %vm1075, %v1011, %v1139
    %v1204 = vsel %vm1076, %v1012, %v1140
    %v1205 = vsel %vm1077, %v1013, %v1141
    %v1206 = vsel %vm1078, %v1014, %v1142
    %v1207 = vsel %vm1079, %v1015, %v1143
    %v1208 = vsel %vm1080, %v1016, %v1144
    %v1209 = vsel %vm1081, %v1017, %v1145
    %v1210 = vsel %vm1082, %v1018, %v1146
    %v1211 = vsel %vm1083, %v1019, %v1147
    %v1212 = vsel %vm1084, %v1020, %v1148
    %v1213 = vsel %vm1085, %v1021, %v1149
    %v1214 = vpack.c.bf16 %v1151, %v1150
    %v1215 = vpack.c.bf16 %v1153, %v1152
    %v1216 = vpack.c.bf16 %v1155, %v1154
    %v1217 = vpack.c.bf16 %v1157, %v1156
    %v1218 = vpack.c.bf16 %v1159, %v1158
    %v1219 = vpack.c.bf16 %v1161, %v1160
    %v1220 = vpack.c.bf16 %v1163, %v1162
    %v1221 = vpack.c.bf16 %v1165, %v1164
    %v1222 = vpack.c.bf16 %v1167, %v1166
    %v1223 = vpack.c.bf16 %v1169, %v1168
    %v1224 = vpack.c.bf16 %v1171, %v1170
    %v1225 = vpack.c.bf16 %v1173, %v1172
    %v1226 = vpack.c.bf16 %v1175, %v1174
    %v1227 = vpack.c.bf16 %v1177, %v1176
    %v1228 = vpack.c.bf16 %v1179, %v1178
    %v1229 = vpack.c.bf16 %v1181, %v1180
    %v1230 = vpack.c.bf16 %v1183, %v1182
    %v1231 = vpack.c.bf16 %v1185, %v1184
    %v1232 = vpack.c.bf16 %v1187, %v1186
    %v1233 = vpack.c.bf16 %v1189, %v1188
    %v1234 = vpack.c.bf16 %v1191, %v1190
    %v1235 = vpack.c.bf16 %v1193, %v1192
    %v1236 = vpack.c.bf16 %v1195, %v1194
    %v1237 = vpack.c.bf16 %v1197, %v1196
    %v1238 = vpack.c.bf16 %v1199, %v1198
    %v1239 = vpack.c.bf16 %v1201, %v1200
    %v1240 = vpack.c.bf16 %v1203, %v1202
    %v1241 = vpack.c.bf16 %v1205, %v1204
    %v1242 = vpack.c.bf16 %v1207, %v1206
    %v1243 = vpack.c.bf16 %v1209, %v1208
    %v1244 = vpack.c.bf16 %v1211, %v1210
    %v1245 = vpack.c.bf16 %v1213, %v1212
    %v1278 = vunpack.c.l.b16 %v1214
    %v1279 = vunpack.c.h.b16 %v1214
    %v1280 = vunpack.c.l.b16 %v1215
    %v1281 = vunpack.c.h.b16 %v1215
    %v1282 = vunpack.c.l.b16 %v1216
    %v1283 = vunpack.c.h.b16 %v1216
    %v1284 = vunpack.c.l.b16 %v1217
    %v1285 = vunpack.c.h.b16 %v1217
    %v1286 = vunpack.c.l.b16 %v1218
    %v1287 = vunpack.c.h.b16 %v1218
    %v1288 = vunpack.c.l.b16 %v1219
    %v1289 = vunpack.c.h.b16 %v1219
    %v1290 = vunpack.c.l.b16 %v1220
    %v1291 = vunpack.c.h.b16 %v1220
    %v1292 = vunpack.c.l.b16 %v1221
    %v1293 = vunpack.c.h.b16 %v1221
    %v1294 = vunpack.c.l.b16 %v1222
    %v1295 = vunpack.c.h.b16 %v1222
    %v1296 = vunpack.c.l.b16 %v1223
    %v1297 = vunpack.c.h.b16 %v1223
    %v1298 = vunpack.c.l.b16 %v1224
    %v1299 = vunpack.c.h.b16 %v1224
    %v1300 = vunpack.c.l.b16 %v1225
    %v1301 = vunpack.c.h.b16 %v1225
    %v1302 = vunpack.c.l.b16 %v1226
    %v1303 = vunpack.c.h.b16 %v1226
    %v1304 = vunpack.c.l.b16 %v1227
    %v1305 = vunpack.c.h.b16 %v1227
    %v1306 = vunpack.c.l.b16 %v1228
    %v1307 = vunpack.c.h.b16 %v1228
    %v1308 = vunpack.c.l.b16 %v1229
    %v1309 = vunpack.c.h.b16 %v1229
    %v1310 = vunpack.c.l.b16 %v1230
    %v1311 = vunpack.c.h.b16 %v1230
    %v1312 = vunpack.c.l.b16 %v1231
    %v1313 = vunpack.c.h.b16 %v1231
    %v1314 = vunpack.c.l.b16 %v1232
    %v1315 = vunpack.c.h.b16 %v1232
    %v1316 = vunpack.c.l.b16 %v1233
    %v1317 = vunpack.c.h.b16 %v1233
    %v1318 = vunpack.c.l.b16 %v1234
    %v1319 = vunpack.c.h.b16 %v1234
    %v1320 = vunpack.c.l.b16 %v1235
    %v1321 = vunpack.c.h.b16 %v1235
    %v1322 = vunpack.c.l.b16 %v1236
    %v1323 = vunpack.c.h.b16 %v1236
    %v1324 = vunpack.c.l.b16 %v1237
    %v1325 = vunpack.c.h.b16 %v1237
    %v1326 = vunpack.c.l.b16 %v1238
    %v1327 = vunpack.c.h.b16 %v1238
    %v1328 = vunpack.c.l.b16 %v1239
    %v1329 = vunpack.c.h.b16 %v1239
    %v1330 = vunpack.c.l.b16 %v1240
    %v1331 = vunpack.c.h.b16 %v1240
    %v1332 = vunpack.c.l.b16 %v1241
    %v1333 = vunpack.c.h.b16 %v1241
    %v1334 = vunpack.c.l.b16 %v1242
    %v1335 = vunpack.c.h.b16 %v1242
    %v1336 = vunpack.c.l.b16 %v1243
    %v1337 = vunpack.c.h.b16 %v1243
    %v1338 = vunpack.c.l.b16 %v1244
    %v1339 = vunpack.c.h.b16 %v1244
    %v1340 = vunpack.c.l.b16 %v1245
    %v1341 = vunpack.c.h.b16 %v1245
    %v1342 = vpack.c.b16 %v1278, %v1278
    %v1343 = vpack.c.b16 %v1279, %v1279
    %v1344 = vpack.c.b16 %v1280, %v1280
    %v1345 = vpack.c.b16 %v1281, %v1281
    %v1346 = vpack.c.b16 %v1282, %v1282
    %v1347 = vpack.c.b16 %v1283, %v1283
    %v1348 = vpack.c.b16 %v1284, %v1284
    %v1349 = vpack.c.b16 %v1285, %v1285
    %v1350 = vpack.c.b16 %v1286, %v1286
    %v1351 = vpack.c.b16 %v1287, %v1287
    %v1352 = vpack.c.b16 %v1288, %v1288
    %v1353 = vpack.c.b16 %v1289, %v1289
    %v1354 = vpack.c.b16 %v1290, %v1290
    %v1355 = vpack.c.b16 %v1291, %v1291
    %v1356 = vpack.c.b16 %v1292, %v1292
    %v1357 = vpack.c.b16 %v1293, %v1293
    %v1358 = vpack.c.b16 %v1294, %v1294
    %v1359 = vpack.c.b16 %v1295, %v1295
    %v1360 = vpack.c.b16 %v1296, %v1296
    %v1361 = vpack.c.b16 %v1297, %v1297
    %v1362 = vpack.c.b16 %v1298, %v1298
    %v1363 = vpack.c.b16 %v1299, %v1299
    %v1364 = vpack.c.b16 %v1300, %v1300
    %v1365 = vpack.c.b16 %v1301, %v1301
    %v1366 = vpack.c.b16 %v1302, %v1302
    %v1367 = vpack.c.b16 %v1303, %v1303
    %v1368 = vpack.c.b16 %v1304, %v1304
    %v1369 = vpack.c.b16 %v1305, %v1305
    %v1370 = vpack.c.b16 %v1306, %v1306
    %v1371 = vpack.c.b16 %v1307, %v1307
    %v1372 = vpack.c.b16 %v1308, %v1308
    %v1373 = vpack.c.b16 %v1309, %v1309
    %v1374 = vpack.c.b16 %v1310, %v1310
    %v1375 = vpack.c.b16 %v1311, %v1311
    %v1376 = vpack.c.b16 %v1312, %v1312
    %v1377 = vpack.c.b16 %v1313, %v1313
    %v1378 = vpack.c.b16 %v1314, %v1314
    %v1379 = vpack.c.b16 %v1315, %v1315
    %v1380 = vpack.c.b16 %v1316, %v1316
    %v1381 = vpack.c.b16 %v1317, %v1317
    %v1382 = vpack.c.b16 %v1318, %v1318
    %v1383 = vpack.c.b16 %v1319, %v1319
    %v1384 = vpack.c.b16 %v1320, %v1320
    %v1385 = vpack.c.b16 %v1321, %v1321
    %v1386 = vpack.c.b16 %v1322, %v1322
    %v1387 = vpack.c.b16 %v1323, %v1323
    %v1388 = vpack.c.b16 %v1324, %v1324
    %v1389 = vpack.c.b16 %v1325, %v1325
    %v1390 = vpack.c.b16 %v1326, %v1326
    %v1391 = vpack.c.b16 %v1327, %v1327
    %v1392 = vpack.c.b16 %v1328, %v1328
    %v1393 = vpack.c.b16 %v1329, %v1329
    %v1394 = vpack.c.b16 %v1330, %v1330
    %v1395 = vpack.c.b16 %v1331, %v1331
    %v1396 = vpack.c.b16 %v1332, %v1332
    %v1397 = vpack.c.b16 %v1333, %v1333
    %v1398 = vpack.c.b16 %v1334, %v1334
    %v1399 = vpack.c.b16 %v1335, %v1335
    %v1400 = vpack.c.b16 %v1336, %v1336
    %v1401 = vpack.c.b16 %v1337, %v1337
    %v1402 = vpack.c.b16 %v1338, %v1338
    %v1403 = vpack.c.b16 %v1339, %v1339
    %v1404 = vpack.c.b16 %v1340, %v1340
    %v1405 = vpack.c.b16 %v1341, %v1341
    %1470 = vst [vmem:[%s3] sm:$0xf] %v1342
    %1471 = vst [vmem:[%s3 + $0x4] sm:$0xf] %v1343
    %1472 = vst [vmem:[%s3 + $0x8] sm:$0xf] %v1344
    %1473 = vst [vmem:[%s3 + $0xc] sm:$0xf] %v1345
    %1474 = vst [vmem:[%s3 + $0x10] sm:$0xf] %v1346
    %1475 = vst [vmem:[%s3 + $0x14] sm:$0xf] %v1347
    %1476 = vst [vmem:[%s3 + $0x18] sm:$0xf] %v1348
    %1477 = vst [vmem:[%s3 + $0x1c] sm:$0xf] %v1349
    %1478 = vst [vmem:[%s3 + $0x20] sm:$0xf] %v1350
    %1479 = vst [vmem:[%s3 + $0x24] sm:$0xf] %v1351
    %1480 = vst [vmem:[%s3 + $0x28] sm:$0xf] %v1352
    %1481 = vst [vmem:[%s3 + $0x2c] sm:$0xf] %v1353
    %1482 = vst [vmem:[%s3 + $0x30] sm:$0xf] %v1354
    %1483 = vst [vmem:[%s3 + $0x34] sm:$0xf] %v1355
    %1484 = vst [vmem:[%s3 + $0x38] sm:$0xf] %v1356
    %1485 = vst [vmem:[%s3 + $0x3c] sm:$0xf] %v1357
    %1486 = vst [vmem:[%s3 + $0x40] sm:$0xf] %v1358
    %1487 = vst [vmem:[%s3 + $0x44] sm:$0xf] %v1359
    %1488 = vst [vmem:[%s3 + $0x48] sm:$0xf] %v1360
    %1489 = vst [vmem:[%s3 + $0x4c] sm:$0xf] %v1361
    %1490 = vst [vmem:[%s3 + $0x50] sm:$0xf] %v1362
    %1491 = vst [vmem:[%s3 + $0x54] sm:$0xf] %v1363
    %1492 = vst [vmem:[%s3 + $0x58] sm:$0xf] %v1364
    %1493 = vst [vmem:[%s3 + $0x5c] sm:$0xf] %v1365
    %1494 = vst [vmem:[%s3 + $0x60] sm:$0xf] %v1366
    %1495 = vst [vmem:[%s3 + $0x64] sm:$0xf] %v1367
    %1496 = vst [vmem:[%s3 + $0x68] sm:$0xf] %v1368
    %1497 = vst [vmem:[%s3 + $0x6c] sm:$0xf] %v1369
    %1498 = vst [vmem:[%s3 + $0x70] sm:$0xf] %v1370
    %1499 = vst [vmem:[%s3 + $0x74] sm:$0xf] %v1371
    %1500 = vst [vmem:[%s3 + $0x78] sm:$0xf] %v1372
    %1501 = vst [vmem:[%s3 + $0x7c] sm:$0xf] %v1373
    %1502 = vst [vmem:[%s3 + $0x80] sm:$0xf] %v1374
    %1503 = vst [vmem:[%s3 + $0x84] sm:$0xf] %v1375
    %1504 = vst [vmem:[%s3 + $0x88] sm:$0xf] %v1376
    %1505 = vst [vmem:[%s3 + $0x8c] sm:$0xf] %v1377
    %1506 = vst [vmem:[%s3 + $0x90] sm:$0xf] %v1378
    %1507 = vst [vmem:[%s3 + $0x94] sm:$0xf] %v1379
    %1508 = vst [vmem:[%s3 + $0x98] sm:$0xf] %v1380
    %1509 = vst [vmem:[%s3 + $0x9c] sm:$0xf] %v1381
    %1510 = vst [vmem:[%s3 + $0xa0] sm:$0xf] %v1382
    %1511 = vst [vmem:[%s3 + $0xa4] sm:$0xf] %v1383
    %1512 = vst [vmem:[%s3 + $0xa8] sm:$0xf] %v1384
    %1513 = vst [vmem:[%s3 + $0xac] sm:$0xf] %v1385
    %1514 = vst [vmem:[%s3 + $0xb0] sm:$0xf] %v1386
    %1515 = vst [vmem:[%s3 + $0xb4] sm:$0xf] %v1387
    %1516 = vst [vmem:[%s3 + $0xb8] sm:$0xf] %v1388
    %1517 = vst [vmem:[%s3 + $0xbc] sm:$0xf] %v1389
    %1518 = vst [vmem:[%s3 + $0xc0] sm:$0xf] %v1390
    %1519 = vst [vmem:[%s3 + $0xc4] sm:$0xf] %v1391
    %1520 = vst [vmem:[%s3 + $0xc8] sm:$0xf] %v1392
    %1521 = vst [vmem:[%s3 + $0xcc] sm:$0xf] %v1393
    %1522 = vst [vmem:[%s3 + $0xd0] sm:$0xf] %v1394
    %1523 = vst [vmem:[%s3 + $0xd4] sm:$0xf] %v1395
    %1524 = vst [vmem:[%s3 + $0xd8] sm:$0xf] %v1396
    %1525 = vst [vmem:[%s3 + $0xdc] sm:$0xf] %v1397
    %1526 = vst [vmem:[%s3 + $0xe0] sm:$0xf] %v1398
    %1527 = vst [vmem:[%s3 + $0xe4] sm:$0xf] %v1399
    %1528 = vst [vmem:[%s3 + $0xe8] sm:$0xf] %v1400
    %1529 = vst [vmem:[%s3 + $0xec] sm:$0xf] %v1401
    %1530 = vst [vmem:[%s3 + $0xf0] sm:$0xf] %v1402
    %1531 = vst [vmem:[%s3 + $0xf4] sm:$0xf] %v1403
    %1532 = vst [vmem:[%s3 + $0xf8] sm:$0xf] %v1404
    %1533 = vst [vmem:[%s3 + $0xfc] sm:$0xf] %v1405
  $region21: #{discriminator_forward.11} parent=0 // pred_fallthru
    _
  // Predicated region
  $region22: #{discriminator_forward.11} parent=0 // pred_check
    _
  $region23: #{discriminator_forward.11} parent=0 // pred_check_branch
    %1535 = sbr.rel (0) target = $region25
  $region24: #{discriminator_forward.11} parent=0 // pred_region
    _
  $region25: #{discriminator_forward.11} parent=0 // pred_fallthru
    _
  // Predicated region
  $region26: #{discriminator_forward.11} parent=0 // pred_check
    _
  $region27: #{discriminator_forward.11} parent=0 // pred_check_branch
    %1537 = sbr.rel (0) target = $region29
  $region28: #{discriminator_forward.11} parent=0 // pred_region
    _
  $region29: #{discriminator_forward.11} parent=0 // pred_fallthru
    _

// kernel: discriminator_forward.13
$region0: #{discriminator_forward.13}
  #allocation0 [shape = 'u32[]', space=smem, size = 0x4, offset = 0x4, fixed_abs, tag = 'smem constant byte address 0x4 - core index']
  #allocation1 [shape = 'u32[144,128]{1,0:T(1,128)}', space=vmem, size = 0x12000, scoped, tag = 'internal scratch']
  %s0 = inlined_call_operand.vmem [shape: f32[128,128], index: 0, kind: input, shape index: {}]
  %s1 = inlined_call_operand.vmem [shape: f32[1,128], index: 1, kind: output, shape index: {0}]
  %s2 = inlined_call_operand.vmem [shape: f32[1,128], index: 2, kind: output, shape index: {1}]
  %3 = xla_tuple %s1, %s2
  %s4 = sld [smem:[#allocation0]]
  $region26: #{discriminator_forward.13} parent=0
    _
  %s6 = ssub.s32 1, %s4
  %s7 = scalar_select 0, %s6, %s4
  // Predicated region
  $region2: #{discriminator_forward.13} parent=0 // pred_check
    _
  $region3: #{discriminator_forward.13} parent=0 // pred_check_branch
    %9 = sbr.rel (0) target = $region5
  $region4: #{discriminator_forward.13} parent=0 // pred_region
    _
  $region5: #{discriminator_forward.13} parent=0 // pred_fallthru
    _
  %p10 = scmp.eq.s32.totalorder 0, 0
  // Predicated region
  $region6: #{discriminator_forward.13} parent=0 // pred_check
    %p11 = pneg %p10
  $region7: #{discriminator_forward.13} parent=0 // pred_check_branch
    %13 = sbr.rel (%p11) target = $region9
  $region8: #{discriminator_forward.13} parent=0 // pred_region
    %14 = vst [vmem:[%s1] sm:$0x1] 0.0
    %15 = vst [vmem:[%s2] sm:$0x1] 0.0
  $region9: #{discriminator_forward.13} parent=0 // pred_fallthru
    _
  %v16 = vld [vmem:[%s0] sm:$0xff]
  %v17 = vld [vmem:[%s0 + $0x8] sm:$0xff]
  %v18 = vld [vmem:[%s0 + $0x10] sm:$0xff]
  %v19 = vld [vmem:[%s0 + $0x18] sm:$0xff]
  %v20 = vld [vmem:[%s0 + $0x20] sm:$0xff]
  %v21 = vld [vmem:[%s0 + $0x28] sm:$0xff]
  %v22 = vld [vmem:[%s0 + $0x30] sm:$0xff]
  %v23 = vld [vmem:[%s0 + $0x38] sm:$0xff]
  %v24 = vld [vmem:[%s0 + $0x40] sm:$0xff]
  %v25 = vld [vmem:[%s0 + $0x48] sm:$0xff]
  %v26 = vld [vmem:[%s0 + $0x50] sm:$0xff]
  %v27 = vld [vmem:[%s0 + $0x58] sm:$0xff]
  %v28 = vld [vmem:[%s0 + $0x60] sm:$0xff]
  %v29 = vld [vmem:[%s0 + $0x68] sm:$0xff]
  %v30 = vld [vmem:[%s0 + $0x70] sm:$0xff]
  %v31 = vld [vmem:[%s0 + $0x78] sm:$0xff]
  %v32 = vld [vmem:[%s1] sm:$0x1]
  %v33 = vadd.f32 %v16, %v17
  %v34 = vadd.f32 %v33, %v18
  %v35 = vadd.f32 %v34, %v19
  %v36 = vadd.f32 %v35, %v20
  %v37 = vadd.f32 %v36, %v21
  %v38 = vadd.f32 %v37, %v22
  %v39 = vadd.f32 %v38, %v23
  %v40 = vadd.f32 %v39, %v24
  %v41 = vadd.f32 %v40, %v25
  %v42 = vadd.f32 %v41, %v26
  %v43 = vadd.f32 %v42, %v27
  %v44 = vadd.f32 %v43, %v28
  %v45 = vadd.f32 %v44, %v29
  %v46 = vadd.f32 %v45, %v30
  %v47 = vadd.f32 %v46, %v31
  %v48 = vrot.slane %v47, 4
  %v49 = vadd.f32 %v47, %v48
  %v50 = vrot.slane %v49, 2
  %v51 = vadd.f32 %v49, %v50
  %v52 = vrot.slane %v51, 1
  %v53 = vadd.f32 %v51, %v52
  %v54 = vadd.f32 %v32, %v53
  %55 = vst [vmem:[%s1] sm:$0x1] %v54
  %v56 = vld [vmem:[%s2] sm:$0x1]
  %v57 = vmul.f32 %v16, %v16
  %v58 = vmul.f32 %v17, %v17
  %v59 = vmul.f32 %v18, %v18
  %v60 = vmul.f32 %v19, %v19
  %v61 = vmul.f32 %v20, %v20
  %v62 = vmul.f32 %v21, %v21
  %v63 = vmul.f32 %v22, %v22
  %v64 = vmul.f32 %v23, %v23
  %v65 = vmul.f32 %v24, %v24
  %v66 = vmul.f32 %v25, %v25
  %v67 = vmul.f32 %v26, %v26
  %v68 = vmul.f32 %v27, %v27
  %v69 = vmul.f32 %v28, %v28
  %v70 = vmul.f32 %v29, %v29
  %v71 = vmul.f32 %v30, %v30
  %v72 = vmul.f32 %v31, %v31
  %v73 = vadd.f32 %v57, %v58
  %v74 = vadd.f32 %v73, %v59
  %v75 = vadd.f32 %v74, %v60
  %v76 = vadd.f32 %v75, %v61
  %v77 = vadd.f32 %v76, %v62
  %v78 = vadd.f32 %v77, %v63
  %v79 = vadd.f32 %v78, %v64
  %v80 = vadd.f32 %v79, %v65
  %v81 = vadd.f32 %v80, %v66
  %v82 = vadd.f32 %v81, %v67
  %v83 = vadd.f32 %v82, %v68
  %v84 = vadd.f32 %v83, %v69
  %v85 = vadd.f32 %v84, %v70
  %v86 = vadd.f32 %v85, %v71
  %v87 = vadd.f32 %v86, %v72
  %v88 = vrot.slane %v87, 4
  %v89 = vadd.f32 %v87, %v88
  %v90 = vrot.slane %v89, 2
  %v91 = vadd.f32 %v89, %v90
  %v92 = vrot.slane %v91, 1
  %v93 = vadd.f32 %v91, %v92
  %v94 = vadd.f32 %v56, %v93
  %95 = vst [vmem:[%s2] sm:$0x1] %v94
  // Predicated region
  $region10: #{discriminator_forward.13} parent=0 // pred_check
    _
  $region11: #{discriminator_forward.13} parent=0 // pred_check_branch
    %97 = sbr.rel (0) target = $region13
  $region12: #{discriminator_forward.13} parent=0 // pred_region
    _
  $region13: #{discriminator_forward.13} parent=0 // pred_fallthru
    _
  // Predicated region
  $region14: #{discriminator_forward.13} parent=0 // pred_check
    _
  $region15: #{discriminator_forward.13} parent=0 // pred_check_branch
    %99 = sbr.rel (0) target = $region17
  $region16: #{discriminator_forward.13} parent=0 // pred_region
    _
  $region17: #{discriminator_forward.13} parent=0 // pred_fallthru
    _
  // Predicated region
  $region18: #{discriminator_forward.13} parent=0 // pred_check
    _
  $region19: #{discriminator_forward.13} parent=0 // pred_check_branch
    %101 = sbr.rel (0) target = $region21
  $region20: #{discriminator_forward.13} parent=0 // pred_region
    _
  $region21: #{discriminator_forward.13} parent=0 // pred_fallthru
    _
  // Predicated region
  $region22: #{discriminator_forward.13} parent=0 // pred_check
    _
  $region23: #{discriminator_forward.13} parent=0 // pred_check_branch
    %103 = sbr.rel (0) target = $region25
  $region24: #{discriminator_forward.13} parent=0 // pred_region
    _
  $region25: #{discriminator_forward.13} parent=0 // pred_fallthru
    _

// kernel: discriminator_forward.14
$region0: #{discriminator_forward.14}
  #allocation0 [shape = 'u32[]', space=smem, size = 0x4, offset = 0x4, fixed_abs, tag = 'smem constant byte address 0x4 - core index']
  #allocation1 [shape = 'u32[144,128]{1,0:T(1,128)}', space=vmem, size = 0x12000, scoped, tag = 'internal scratch']
  %s0 = inlined_call_operand.vmem [shape: f32[128,128], index: 0, kind: input, shape index: {}]
  %s1 = inlined_call_operand.vmem [shape: f32[1,128], index: 1, kind: input, shape index: {}]
  %s2 = inlined_call_operand.vmem [shape: f32[1,128], index: 2, kind: input, shape index: {}]
  %s3 = inlined_call_operand.vmem [shape: bf16[128,128], index: 3, kind: output, shape index: {}]
  %s4 = sld [smem:[#allocation0]]
  $region22: #{discriminator_forward.14} parent=0
    _
  %s6 = ssub.s32 1, %s4
  %s7 = scalar_select 0, %s6, %s4
  // Predicated region
  $region2: #{discriminator_forward.14} parent=0 // pred_check
    _
  $region3: #{discriminator_forward.14} parent=0 // pred_check_branch
    %9 = sbr.rel (0) target = $region5
  $region4: #{discriminator_forward.14} parent=0 // pred_region
    _
  $region5: #{discriminator_forward.14} parent=0 // pred_fallthru
    _
  // Predicated region
  $region6: #{discriminator_forward.14} parent=0 // pred_check
    _
  $region7: #{discriminator_forward.14} parent=0 // pred_check_branch
    %11 = sbr.rel (0) target = $region9
  $region8: #{discriminator_forward.14} parent=0 // pred_region
    _
  $region9: #{discriminator_forward.14} parent=0 // pred_fallthru
    _
  // Predicated region
  $region10: #{discriminator_forward.14} parent=0 // pred_check
    _
  $region11: #{discriminator_forward.14} parent=0 // pred_check_branch
    %13 = sbr.rel (0) target = $region13
  $region12: #{discriminator_forward.14} parent=0 // pred_region
    _
  $region13: #{discriminator_forward.14} parent=0 // pred_fallthru
    _
  %v14 = vld [vmem:[%s0] sm:$0xff]
  %v15 = vld [vmem:[%s0 + $0x8] sm:$0xff]
  %v16 = vld [vmem:[%s0 + $0x10] sm:$0xff]
  %v17 = vld [vmem:[%s0 + $0x18] sm:$0xff]
  %v18 = vld [vmem:[%s0 + $0x20] sm:$0xff]
  %v19 = vld [vmem:[%s0 + $0x28] sm:$0xff]
  %v20 = vld [vmem:[%s0 + $0x30] sm:$0xff]
  %v21 = vld [vmem:[%s0 + $0x38] sm:$0xff]
  %v22 = vld [vmem:[%s0 + $0x40] sm:$0xff]
  %v23 = vld [vmem:[%s0 + $0x48] sm:$0xff]
  %v24 = vld [vmem:[%s0 + $0x50] sm:$0xff]
  %v25 = vld [vmem:[%s0 + $0x58] sm:$0xff]
  %v26 = vld [vmem:[%s0 + $0x60] sm:$0xff]
  %v27 = vld [vmem:[%s0 + $0x68] sm:$0xff]
  %v28 = vld [vmem:[%s0 + $0x70] sm:$0xff]
  %v29 = vld [vmem:[%s0 + $0x78] sm:$0xff]
  %v30 = vld [vmem:[%s1] sm:$0x1]
  %v32 = vlaneseq
  %v33 = vshrl.u32 %v32, 7
  %v34 = vsub.s32 0, %v33
  %v35 = vrot.slane %v30, %v34
  %v37 = vmul.f32 %v14, %v35
  %v38 = vmul.f32 %v15, %v35
  %v39 = vmul.f32 %v16, %v35
  %v40 = vmul.f32 %v17, %v35
  %v41 = vmul.f32 %v18, %v35
  %v42 = vmul.f32 %v19, %v35
  %v43 = vmul.f32 %v20, %v35
  %v44 = vmul.f32 %v21, %v35
  %v45 = vmul.f32 %v22, %v35
  %v46 = vmul.f32 %v23, %v35
  %v47 = vmul.f32 %v24, %v35
  %v48 = vmul.f32 %v25, %v35
  %v49 = vmul.f32 %v26, %v35
  %v50 = vmul.f32 %v27, %v35
  %v51 = vmul.f32 %v28, %v35
  %v52 = vmul.f32 %v29, %v35
  %v53 = vld [vmem:[%s2] sm:$0x1]
  %v55 = vlaneseq
  %v56 = vshrl.u32 %v55, 7
  %v57 = vsub.s32 0, %v56
  %v58 = vrot.slane %v53, %v57
  %v60 = vadd.f32 %v37, %v58
  %v61 = vadd.f32 %v38, %v58
  %v62 = vadd.f32 %v39, %v58
  %v63 = vadd.f32 %v40, %v58
  %v64 = vadd.f32 %v41, %v58
  %v65 = vadd.f32 %v42, %v58
  %v66 = vadd.f32 %v43, %v58
  %v67 = vadd.f32 %v44, %v58
  %v68 = vadd.f32 %v45, %v58
  %v69 = vadd.f32 %v46, %v58
  %v70 = vadd.f32 %v47, %v58
  %v71 = vadd.f32 %v48, %v58
  %v72 = vadd.f32 %v49, %v58
  %v73 = vadd.f32 %v50, %v58
  %v74 = vadd.f32 %v51, %v58
  %v75 = vadd.f32 %v52, %v58
  %vm76 = vcmp.ge.f32.partialorder %v60, 0.0
  %vm77 = vcmp.ge.f32.partialorder %v61, 0.0
  %vm78 = vcmp.ge.f32.partialorder %v62, 0.0
  %vm79 = vcmp.ge.f32.partialorder %v63, 0.0
  %vm80 = vcmp.ge.f32.partialorder %v64, 0.0
  %vm81 = vcmp.ge.f32.partialorder %v65, 0.0
  %vm82 = vcmp.ge.f32.partialorder %v66, 0.0
  %vm83 = vcmp.ge.f32.partialorder %v67, 0.0
  %vm84 = vcmp.ge.f32.partialorder %v68, 0.0
  %vm85 = vcmp.ge.f32.partialorder %v69, 0.0
  %vm86 = vcmp.ge.f32.partialorder %v70, 0.0
  %vm87 = vcmp.ge.f32.partialorder %v71, 0.0
  %vm88 = vcmp.ge.f32.partialorder %v72, 0.0
  %vm89 = vcmp.ge.f32.partialorder %v73, 0.0
  %vm90 = vcmp.ge.f32.partialorder %v74, 0.0
  %vm91 = vcmp.ge.f32.partialorder %v75, 0.0
  %v92 = vmul.f32 %v60, 0.2
  %v93 = vmul.f32 %v61, 0.2
  %v94 = vmul.f32 %v62, 0.2
  %v95 = vmul.f32 %v63, 0.2
  %v96 = vmul.f32 %v64, 0.2
  %v97 = vmul.f32 %v65, 0.2
  %v98 = vmul.f32 %v66, 0.2
  %v99 = vmul.f32 %v67, 0.2
  %v100 = vmul.f32 %v68, 0.2
  %v101 = vmul.f32 %v69, 0.2
  %v102 = vmul.f32 %v70, 0.2
  %v103 = vmul.f32 %v71, 0.2
  %v104 = vmul.f32 %v72, 0.2
  %v105 = vmul.f32 %v73, 0.2
  %v106 = vmul.f32 %v74, 0.2
  %v107 = vmul.f32 %v75, 0.2
  %v108 = vsel %vm76, %v60, %v92
  %v109 = vsel %vm77, %v61, %v93
  %v110 = vsel %vm78, %v62, %v94
  %v111 = vsel %vm79, %v63, %v95
  %v112 = vsel %vm80, %v64, %v96
  %v113 = vsel %vm81, %v65, %v97
  %v114 = vsel %vm82, %v66, %v98
  %v115 = vsel %vm83, %v67, %v99
  %v116 = vsel %vm84, %v68, %v100
  %v117 = vsel %vm85, %v69, %v101
  %v118 = vsel %vm86, %v70, %v102
  %v119 = vsel %vm87, %v71, %v103
  %v120 = vsel %vm88, %v72, %v104
  %v121 = vsel %vm89, %v73, %v105
  %v122 = vsel %vm90, %v74, %v106
  %v123 = vsel %vm91, %v75, %v107
  %v124 = vpack.c.bf16 %v109, %v108
  %v125 = vpack.c.bf16 %v111, %v110
  %v126 = vpack.c.bf16 %v113, %v112
  %v127 = vpack.c.bf16 %v115, %v114
  %v128 = vpack.c.bf16 %v117, %v116
  %v129 = vpack.c.bf16 %v119, %v118
  %v130 = vpack.c.bf16 %v121, %v120
  %v131 = vpack.c.bf16 %v123, %v122
  %v140 = vunpack.c.l.b16 %v124
  %v141 = vunpack.c.h.b16 %v124
  %v142 = vunpack.c.l.b16 %v125
  %v143 = vunpack.c.h.b16 %v125
  %v144 = vunpack.c.l.b16 %v126
  %v145 = vunpack.c.h.b16 %v126
  %v146 = vunpack.c.l.b16 %v127
  %v147 = vunpack.c.h.b16 %v127
  %v148 = vunpack.c.l.b16 %v128
  %v149 = vunpack.c.h.b16 %v128
  %v150 = vunpack.c.l.b16 %v129
  %v151 = vunpack.c.h.b16 %v129
  %v152 = vunpack.c.l.b16 %v130
  %v153 = vunpack.c.h.b16 %v130
  %v154 = vunpack.c.l.b16 %v131
  %v155 = vunpack.c.h.b16 %v131
  %v156 = vpack.c.b16 %v140, %v140
  %v157 = vpack.c.b16 %v141, %v141
  %v158 = vpack.c.b16 %v142, %v142
  %v159 = vpack.c.b16 %v143, %v143
  %v160 = vpack.c.b16 %v144, %v144
  %v161 = vpack.c.b16 %v145, %v145
  %v162 = vpack.c.b16 %v146, %v146
  %v163 = vpack.c.b16 %v147, %v147
  %v164 = vpack.c.b16 %v148, %v148
  %v165 = vpack.c.b16 %v149, %v149
  %v166 = vpack.c.b16 %v150, %v150
  %v167 = vpack.c.b16 %v151, %v151
  %v168 = vpack.c.b16 %v152, %v152
  %v169 = vpack.c.b16 %v153, %v153
  %v170 = vpack.c.b16 %v154, %v154
  %v171 = vpack.c.b16 %v155, %v155
  %188 = vst [vmem:[%s3] sm:$0xf] %v156
  %189 = vst [vmem:[%s3 + $0x4] sm:$0xf] %v157
  %190 = vst [vmem:[%s3 + $0x8] sm:$0xf] %v158
  %191 = vst [vmem:[%s3 + $0xc] sm:$0xf] %v159
  %192 = vst [vmem:[%s3 + $0x10] sm:$0xf] %v160
  %193 = vst [vmem:[%s3 + $0x14] sm:$0xf] %v161
  %194 = vst [vmem:[%s3 + $0x18] sm:$0xf] %v162
  %195 = vst [vmem:[%s3 + $0x1c] sm:$0xf] %v163
  %196 = vst [vmem:[%s3 + $0x20] sm:$0xf] %v164
  %197 = vst [vmem:[%s3 + $0x24] sm:$0xf] %v165
  %198 = vst [vmem:[%s3 + $0x28] sm:$0xf] %v166
  %199 = vst [vmem:[%s3 + $0x2c] sm:$0xf] %v167
  %200 = vst [vmem:[%s3 + $0x30] sm:$0xf] %v168
  %201 = vst [vmem:[%s3 + $0x34] sm:$0xf] %v169
  %202 = vst [vmem:[%s3 + $0x38] sm:$0xf] %v170
  %203 = vst [vmem:[%s3 + $0x3c] sm:$0xf] %v171
  // Predicated region
  $region14: #{discriminator_forward.14} parent=0 // pred_check
    _
  $region15: #{discriminator_forward.14} parent=0 // pred_check_branch
    %205 = sbr.rel (0) target = $region17
  $region16: #{discriminator_forward.14} parent=0 // pred_region
    _
  $region17: #{discriminator_forward.14} parent=0 // pred_fallthru
    _
  // Predicated region
  $region18: #{discriminator_forward.14} parent=0 // pred_check
    _
  $region19: #{discriminator_forward.14} parent=0 // pred_check_branch
    %207 = sbr.rel (0) target = $region21
  $region20: #{discriminator_forward.14} parent=0 // pred_region
    _
  $region21: #{discriminator_forward.14} parent=0 // pred_fallthru
    _

// kernel: discriminator_forward.12
$region0: #{discriminator_forward.12}
  #allocation0 [shape = 'u32[]', space=smem, size = 0x4, offset = 0x4, fixed_abs, tag = 'smem constant byte address 0x4 - core index']
  #allocation1 [shape = 'u32[144,128]{1,0:T(1,128)}', space=vmem, size = 0x12000, scoped, tag = 'internal scratch']
  #allocation2 [shape = 'f32[128,128]{1,0:T(8,128)}', space=vmem, size = 0x10000, scoped, tag = 'scratch operand']
  %s0 = inlined_call_operand.vmem [shape: bf16[128,2048], index: 0, kind: input, shape index: {}]
  %s1 = inlined_call_operand.vmem [shape: bf16[2048,128], index: 1, kind: input, shape index: {}]
  %s2 = inlined_call_operand.vmem [shape: f32[1,128], index: 2, kind: input, shape index: {}]
  %s3 = inlined_call_operand.vmem [shape: f32[128,128], index: 3, kind: output, shape index: {}]
  %s4 = sld [smem:[#allocation0]]
  $region76: #{discriminator_forward.12} parent=0
    _
  %s6 = ssub.s32 1, %s4
  %s7 = scalar_select 0, %s6, %s4
  $region1: #{discriminator_forward.12} parent=0
    #allocation3 [shape = 'u8[524288]{0}', space=vmem, size = 0x80000, scoped, tag = 'input window, operand 0']
    loop: start=0, step=1, limit=4
    $region2: #{discriminator_forward.12} parent=1 // loop_pre_header
      _
    $region3: #{discriminator_forward.12} parent=1 // loop_header
      %s9 = sphi 0, %s13
      %p10 = scmp.ge.s32.totalorder %s9, 4
      %s16 = sphi 0, %s35
      %s17 = sphi 0, %s31
      %s18 = sphi 0, %s27
      %s19 = sphi 0, %s16
      %s20 = sphi 0, %s17
      %s21 = sphi 0, %s18
      %s22 = sphi 0, %s19
      %s23 = sphi 0, %s20
      %s24 = sphi 0, %s21
      %s40 = sphi 0, %s42
      %s43 = sphi 0, %s40
      %s44 = sphi 0, %s43
      %s60 = sphi 0, %s44
      %s68 = sphi 0, %s70
      %s71 = sphi 0, %s68
      %s72 = sphi 0, %s71
      %s88 = sphi 0, %s72
      %s94 = sphi 0, %s96
      %s97 = sphi 0, %s94
      %s98 = sphi 0, %s97
      %s114 = sphi 0, %s98
      %s122 = sphi 0, %s124
      %s125 = sphi 0, %s122
      %s126 = sphi 0, %s125
      %s142 = sphi 0, %s126
    $region4: #{discriminator_forward.12} parent=1 // loop_header_branch
      %12 = sbr.rel (%p10) target = $region8
    $region5: #{discriminator_forward.12} parent=1 // loop_body
      %s14 = ssub.s32 %s9, 1
      %s15 = ssub.s32 %s9, 2
      %s25 = sadd.s32 1, %s18
      %p26 = scmp.ge.s32.totalorder %s25, 2
      %s27 = scalar_select %p26, 0, %s25
      %s28 = sadd.s32 1, %s17
      %s29 = scalar_select %p26, %s28, %s17
      %p30 = scmp.ge.s32.totalorder %s29, 1
      %s31 = scalar_select %p30, 0, %s29
      %s32 = sadd.s32 1, %s16
      %s33 = scalar_select %p30, %s32, %s16
      %p34 = scmp.ge.s32.totalorder %s33, 1
      %s35 = scalar_select %p34, 0, %s33
      %s36 = ssub.s32 %s16, %s35
      %s37 = ssub.s32 %s18, %s27
      %s38 = sor.u32 %s36, %s37
      %p39 = scmp.eq.s32.totalorder %s38, 0
      %s41 = sadd.s32 %s40, 1
      %s42 = scalar_select %p39, %s40, %s41
      %p45 = pneg %p39
      %p46 = scmp.eq.s32.totalorder %s9, 1
      %p47 = por %p45, %p46
      %p48 = scmp.ne.s32.totalorder %s40, %s43
      %p49 = scmp.eq.s32.totalorder %s9, 0
      %p50 = por %p48, %p49
      %p51 = scmp.ne.s32.totalorder %s40, %s43
      %p52 = scmp.eq.s32.totalorder %s14, 1
      %p53 = por %p51, %p52
      %p54 = scmp.ne.s32.totalorder %s43, %s44
      %p55 = scmp.eq.s32.totalorder %s14, 0
      %p56 = por %p54, %p55
      %p57 = scmp.ne.s32.totalorder %s43, %s44
      %p58 = scmp.eq.s32.totalorder %s15, 1
      %p59 = por %p57, %p58
      %p61 = scmp.ne.s32.totalorder %s44, %s60
      %p62 = scmp.eq.s32.totalorder %s15, 0
      %p63 = por %p61, %p62
      %s64 = ssub.s32 %s18, %s27
      %s65 = ssub.s32 %s17, %s31
      %s66 = sor.u32 %s64, %s65
      %p67 = scmp.eq.s32.totalorder %s66, 0
      %s69 = sadd.s32 %s68, 1
      %s70 = scalar_select %p67, %s68, %s69
      %p73 = pneg %p67
      %p74 = scmp.eq.s32.totalorder %s9, 1
      %p75 = por %p73, %p74
      %p76 = scmp.ne.s32.totalorder %s68, %s71
      %p77 = scmp.eq.s32.totalorder %s9, 0
      %p78 = por %p76, %p77
      %p79 = scmp.ne.s32.totalorder %s68, %s71
      %p80 = scmp.eq.s32.totalorder %s14, 1
      %p81 = por %p79, %p80
      %p82 = scmp.ne.s32.totalorder %s71, %s72
      %p83 = scmp.eq.s32.totalorder %s14, 0
      %p84 = por %p82, %p83
      %p85 = scmp.ne.s32.totalorder %s71, %s72
      %p86 = scmp.eq.s32.totalorder %s15, 1
      %p87 = por %p85, %p86
      %p89 = scmp.ne.s32.totalorder %s72, %s88
      %p90 = scmp.eq.s32.totalorder %s15, 0
      %p91 = por %p89, %p90
      %s92 = ssub.s32 %s17, %s31
      %p93 = scmp.eq.s32.totalorder %s92, 0
      %s95 = sadd.s32 %s94, 1
      %s96 = scalar_select %p93, %s94, %s95
      %p99 = pneg %p93
      %p100 = scmp.eq.s32.totalorder %s9, 1
      %p101 = por %p99, %p100
      %p102 = scmp.ne.s32.totalorder %s94, %s97
      %p103 = scmp.eq.s32.totalorder %s9, 0
      %p104 = por %p102, %p103
      %p105 = scmp.ne.s32.totalorder %s94, %s97
      %p106 = scmp.eq.s32.totalorder %s14, 1
      %p107 = por %p105, %p106
      %p108 = scmp.ne.s32.totalorder %s97, %s98
      %p109 = scmp.eq.s32.totalorder %s14, 0
      %p110 = por %p108, %p109
      %p111 = scmp.ne.s32.totalorder %s97, %s98
      %p112 = scmp.eq.s32.totalorder %s15, 1
      %p113 = por %p111, %p112
      %p115 = scmp.ne.s32.totalorder %s98, %s114
      %p116 = scmp.eq.s32.totalorder %s15, 0
      %p117 = por %p115, %p116
      %s118 = ssub.s32 %s16, %s35
      %s119 = ssub.s32 %s17, %s31
      %s120 = sor.u32 %s118, %s119
      %p121 = scmp.eq.s32.totalorder %s120, 0
      %s123 = sadd.s32 %s122, 1
      %s124 = scalar_select %p121, %s122, %s123
      %p127 = pneg %p121
      %p128 = scmp.eq.s32.totalorder %s9, 1
      %p129 = por %p127, %p128
      %p130 = scmp.ne.s32.totalorder %s122, %s125
      %p131 = scmp.eq.s32.totalorder %s9, 0
      %p132 = por %p130, %p131
      %p133 = scmp.ne.s32.totalorder %s122, %s125
      %p134 = scmp.eq.s32.totalorder %s14, 1
      %p135 = por %p133, %p134
      %p136 = scmp.ne.s32.totalorder %s125, %s126
      %p137 = scmp.eq.s32.totalorder %s14, 0
      %p138 = por %p136, %p137
      %p139 = scmp.ne.s32.totalorder %s125, %s126
      %p140 = scmp.eq.s32.totalorder %s15, 1
      %p141 = por %p139, %p140
      %p143 = scmp.ne.s32.totalorder %s126, %s142
      %p144 = scmp.eq.s32.totalorder %s15, 0
      %p145 = por %p143, %p144
      %p146 = scmp.le.s32.totalorder 1, %s9
      %p147 = scmp.lt.s32.totalorder %s9, 3
      %p148 = pnand %p146, %p147
      %p149 = pneg %p148
      // Predicated region
      $region9: #{discriminator_forward.12} parent=5 // pred_check
        _
      $region10: #{discriminator_forward.12} parent=5 // pred_check_branch
        %151 = sbr.rel (%p148) target = $region12
      $region11: #{discriminator_forward.12} parent=5 // pred_region
        %s152 = ssub.s32 %s9, 1
        // Predicated region
        $region13: #{discriminator_forward.12} parent=11 // pred_check
          %p153 = pneg %p110
        $region14: #{discriminator_forward.12} parent=11 // pred_check_branch
          %155 = sbr.rel (%p153) target = $region16
        $region15: #{discriminator_forward.12} parent=11 // pred_region
          %p156 = scmp.lt.s32.totalorder %s20, 0
          %s157 = scalar_select %p156, %s20, 0
          %s158 = scalar_lea.vmem %s2, %s157
        $region16: #{discriminator_forward.12} parent=11 // pred_fallthru
          _
      $region12: #{discriminator_forward.12} parent=5 // pred_fallthru
        _
      %p159 = scmp.lt.s32.totalorder %s9, 2
      // Predicated region
      $region17: #{discriminator_forward.12} parent=5 // pred_check
        %p160 = pneg %p159
      $region18: #{discriminator_forward.12} parent=5 // pred_check_branch
        %162 = sbr.rel (%p160) target = $region20
      $region19: #{discriminator_forward.12} parent=5 // pred_region
        // Predicated region
        $region21: #{discriminator_forward.12} parent=19 // pred_check
          %p163 = pneg %p50
        $region22: #{discriminator_forward.12} parent=19 // pred_check_branch
          %165 = sbr.rel (%p163) target = $region24
        $region23: #{discriminator_forward.12} parent=19 // pred_region
          %s166 = sand.u32 %s40, 1
          %s167 = sand.u32 %s40, 1
          %s168 = smul.addr %s167, 512
          %s169 = scalar_lea.vmem [#allocation3], %s168
          %s170 = smul.u32 16, %s16
          %s171 = smul.u32 8, %s18
          %s172 = smul.addr %s170, 16
          %s173 = sadd.s32 %s171, %s172
          %s174 = smul.addr %s173, 4
          %s175 = scalar_lea.vmem %s0, %s174
          // Predicated region
          $region25: #{discriminator_forward.12} parent=23 // pred_check
            _
          $region26: #{discriminator_forward.12} parent=23 // pred_check_branch
            %177 = sbr.rel (0) target = $region28
          $region27: #{discriminator_forward.12} parent=23 // pred_region
            // Predicated region
            $region29: #{discriminator_forward.12} parent=27 // pred_check
              _
            $region30: #{discriminator_forward.12} parent=27 // pred_check_branch
              %179 = sbr.rel (0) target = $region32
            $region31: #{discriminator_forward.12} parent=27 // pred_region
              loop: start=0, step=1, limit=1
              $region33: #{discriminator_forward.12} parent=31 // loop_pre_header
                _
              $region34: #{discriminator_forward.12} parent=31 // loop_header
                %s181 = sphi 0, %s185
                %p182 = scmp.ge.s32.totalorder %s181, 1
                %s186 = sphi %s175, %s175
                %s187 = sphi %s169, %s169
              $region35: #{discriminator_forward.12} parent=31 // loop_header_branch
                %184 = sbr.rel (%p182) target = $region39
              $region36: #{discriminator_forward.12} parent=31 // loop_body
                %v188 = vld [vmem:[%s186] sm:$0xff]
                %189 = vst [vmem:[%s187] sm:$0xff] %v188
                %v190 = vld [vmem:[%s186 + $0x8] sm:$0xff]
                %191 = vst [vmem:[%s187 + $0x8] sm:$0xff] %v190
                %v192 = vld [vmem:[%s186 + $0x10] sm:$0xff]
                %193 = vst [vmem:[%s187 + $0x10] sm:$0xff] %v192
                %v194 = vld [vmem:[%s186 + $0x18] sm:$0xff]
                %195 = vst [vmem:[%s187 + $0x18] sm:$0xff] %v194
                %v196 = vld [vmem:[%s186 + $0x40] sm:$0xff]
                %197 = vst [vmem:[%s187 + $0x20] sm:$0xff] %v196
                %v198 = vld [vmem:[%s186 + $0x48] sm:$0xff]
                %199 = vst [vmem:[%s187 + $0x28] sm:$0xff] %v198
                %v200 = vld [vmem:[%s186 + $0x50] sm:$0xff]
                %201 = vst [vmem:[%s187 + $0x30] sm:$0xff] %v200
                %v202 = vld [vmem:[%s186 + $0x58] sm:$0xff]
                %203 = vst [vmem:[%s187 + $0x38] sm:$0xff] %v202
                %v204 = vld [vmem:[%s186 + $0x80] sm:$0xff]
                %205 = vst [vmem:[%s187 + $0x40] sm:$0xff] %v204
                %v206 = vld [vmem:[%s186 + $0x88] sm:$0xff]
                %207 = vst [vmem:[%s187 + $0x48] sm:$0xff] %v206
                %v208 = vld [vmem:[%s186 + $0x90] sm:$0xff]
                %209 = vst [vmem:[%s187 + $0x50] sm:$0xff] %v208
                %v210 = vld [vmem:[%s186 + $0x98] sm:$0xff]
                %211 = vst [vmem:[%s187 + $0x58] sm:$0xff] %v210
                %v212 = vld [vmem:[%s186 + $0xc0] sm:$0xff]
                %213 = vst [vmem:[%s187 + $0x60] sm:$0xff] %v212
                %v214 = vld [vmem:[%s186 + $0xc8] sm:$0xff]
                %215 = vst [vmem:[%s187 + $0x68] sm:$0xff] %v214
                %v216 = vld [vmem:[%s186 + $0xd0] sm:$0xff]
                %217 = vst [vmem:[%s187 + $0x70] sm:$0xff] %v216
                %v218 = vld [vmem:[%s186 + $0xd8] sm:$0xff]
                %219 = vst [vmem:[%s187 + $0x78] sm:$0xff] %v218
                %v220 = vld [vmem:[%s186 + $0x100] sm:$0xff]
                %221 = vst [vmem:[%s187 + $0x80] sm:$0xff] %v220
                %v222 = vld [vmem:[%s186 + $0x108] sm:$0xff]
                %223 = vst [vmem:[%s187 + $0x88] sm:$0xff] %v222
                %v224 = vld [vmem:[%s186 + $0x110] sm:$0xff]
                %225 = vst [vmem:[%s187 + $0x90] sm:$0xff] %v224
                %v226 = vld [vmem:[%s186 + $0x118] sm:$0xff]
                %227 = vst [vmem:[%s187 + $0x98] sm:$0xff] %v226
                %v228 = vld [vmem:[%s186 + $0x140] sm:$0xff]
                %229 = vst [vmem:[%s187 + $0xa0] sm:$0xff] %v228
                %v230 = vld [vmem:[%s186 + $0x148] sm:$0xff]
                %231 = vst [vmem:[%s187 + $0xa8] sm:$0xff] %v230
                %v232 = vld [vmem:[%s186 + $0x150] sm:$0xff]
                %233 = vst [vmem:[%s187 + $0xb0] sm:$0xff] %v232
                %v234 = vld [vmem:[%s186 + $0x158] sm:$0xff]
                %235 = vst [vmem:[%s187 + $0xb8] sm:$0xff] %v234
                %v236 = vld [vmem:[%s186 + $0x180] sm:$0xff]
                %237 = vst [vmem:[%s187 + $0xc0] sm:$0xff] %v236
                %v238 = vld [vmem:[%s186 + $0x188] sm:$0xff]
                %239 = vst [vmem:[%s187 + $0xc8] sm:$0xff] %v238
                %v240 = vld [vmem:[%s186 + $0x190] sm:$0xff]
                %241 = vst [vmem:[%s187 + $0xd0] sm:$0xff] %v240
                %v242 = vld [vmem:[%s186 + $0x198] sm:$0xff]
                %243 = vst [vmem:[%s187 + $0xd8] sm:$0xff] %v242
                %v244 = vld [vmem:[%s186 + $0x1c0] sm:$0xff]
                %245 = vst [vmem:[%s187 + $0xe0] sm:$0xff] %v244
                %v246 = vld [vmem:[%s186 + $0x1c8] sm:$0xff]
                %247 = vst [vmem:[%s187 + $0xe8] sm:$0xff] %v246
                %v248 = vld [vmem:[%s186 + $0x1d0] sm:$0xff]
                %249 = vst [vmem:[%s187 + $0xf0] sm:$0xff] %v248
                %v250 = vld [vmem:[%s186 + $0x1d8] sm:$0xff]
                %251 = vst [vmem:[%s187 + $0xf8] sm:$0xff] %v250
                %v252 = vld [vmem:[%s186 + $0x200] sm:$0xff]
                %253 = vst [vmem:[%s187 + $0x100] sm:$0xff] %v252
                %v254 = vld [vmem:[%s186 + $0x208] sm:$0xff]
                %255 = vst [vmem:[%s187 + $0x108] sm:$0xff] %v254
                %v256 = vld [vmem:[%s186 + $0x210] sm:$0xff]
                %257 = vst [vmem:[%s187 + $0x110] sm:$0xff] %v256
                %v258 = vld [vmem:[%s186 + $0x218] sm:$0xff]
                %259 = vst [vmem:[%s187 + $0x118] sm:$0xff] %v258
                %v260 = vld [vmem:[%s186 + $0x240] sm:$0xff]
                %261 = vst [vmem:[%s187 + $0x120] sm:$0xff] %v260
                %v262 = vld [vmem:[%s186 + $0x248] sm:$0xff]
                %263 = vst [vmem:[%s187 + $0x128] sm:$0xff] %v262
                %v264 = vld [vmem:[%s186 + $0x250] sm:$0xff]
                %265 = vst [vmem:[%s187 + $0x130] sm:$0xff] %v264
                %v266 = vld [vmem:[%s186 + $0x258] sm:$0xff]
                %267 = vst [vmem:[%s187 + $0x138] sm:$0xff] %v266
                %v268 = vld [vmem:[%s186 + $0x280] sm:$0xff]
                %269 = vst [vmem:[%s187 + $0x140] sm:$0xff] %v268
                %v270 = vld [vmem:[%s186 + $0x288] sm:$0xff]
                %271 = vst [vmem:[%s187 + $0x148] sm:$0xff] %v270
                %v272 = vld [vmem:[%s186 + $0x290] sm:$0xff]
                %273 = vst [vmem:[%s187 + $0x150] sm:$0xff] %v272
                %v274 = vld [vmem:[%s186 + $0x298] sm:$0xff]
                %275 = vst [vmem:[%s187 + $0x158] sm:$0xff] %v274
                %v276 = vld [vmem:[%s186 + $0x2c0] sm:$0xff]
                %277 = vst [vmem:[%s187 + $0x160] sm:$0xff] %v276
                %v278 = vld [vmem:[%s186 + $0x2c8] sm:$0xff]
                %279 = vst [vmem:[%s187 + $0x168] sm:$0xff] %v278
                %v280 = vld [vmem:[%s186 + $0x2d0] sm:$0xff]
                %281 = vst [vmem:[%s187 + $0x170] sm:$0xff] %v280
                %v282 = vld [vmem:[%s186 + $0x2d8] sm:$0xff]
                %283 = vst [vmem:[%s187 + $0x178] sm:$0xff] %v282
                %v284 = vld [vmem:[%s186 + $0x300] sm:$0xff]
                %285 = vst [vmem:[%s187 + $0x180] sm:$0xff] %v284
                %v286 = vld [vmem:[%s186 + $0x308] sm:$0xff]
                %287 = vst [vmem:[%s187 + $0x188] sm:$0xff] %v286
                %v288 = vld [vmem:[%s186 + $0x310] sm:$0xff]
                %289 = vst [vmem:[%s187 + $0x190] sm:$0xff] %v288
                %v290 = vld [vmem:[%s186 + $0x318] sm:$0xff]
                %291 = vst [vmem:[%s187 + $0x198] sm:$0xff] %v290
                %v292 = vld [vmem:[%s186 + $0x340] sm:$0xff]
                %293 = vst [vmem:[%s187 + $0x1a0] sm:$0xff] %v292
                %v294 = vld [vmem:[%s186 + $0x348] sm:$0xff]
                %295 = vst [vmem:[%s187 + $0x1a8] sm:$0xff] %v294
                %v296 = vld [vmem:[%s186 + $0x350] sm:$0xff]
                %297 = vst [vmem:[%s187 + $0x1b0] sm:$0xff] %v296
                %v298 = vld [vmem:[%s186 + $0x358] sm:$0xff]
                %299 = vst [vmem:[%s187 + $0x1b8] sm:$0xff] %v298
                %v300 = vld [vmem:[%s186 + $0x380] sm:$0xff]
                %301 = vst [vmem:[%s187 + $0x1c0] sm:$0xff] %v300
                %v302 = vld [vmem:[%s186 + $0x388] sm:$0xff]
                %303 = vst [vmem:[%s187 + $0x1c8] sm:$0xff] %v302
                %v304 = vld [vmem:[%s186 + $0x390] sm:$0xff]
                %305 = vst [vmem:[%s187 + $0x1d0] sm:$0xff] %v304
                %v306 = vld [vmem:[%s186 + $0x398] sm:$0xff]
                %307 = vst [vmem:[%s187 + $0x1d8] sm:$0xff] %v306
                %v308 = vld [vmem:[%s186 + $0x3c0] sm:$0xff]
                %309 = vst [vmem:[%s187 + $0x1e0] sm:$0xff] %v308
                %v310 = vld [vmem:[%s186 + $0x3c8] sm:$0xff]
                %311 = vst [vmem:[%s187 + $0x1e8] sm:$0xff] %v310
                %v312 = vld [vmem:[%s186 + $0x3d0] sm:$0xff]
                %313 = vst [vmem:[%s187 + $0x1f0] sm:$0xff] %v312
                %v314 = vld [vmem:[%s186 + $0x3d8] sm:$0xff]
                %315 = vst [vmem:[%s187 + $0x1f8] sm:$0xff] %v314
              $region37: #{discriminator_forward.12} parent=31 // loop_footer
                %s185 = sadd.s32 1, %s181
              $region38: #{discriminator_forward.12} parent=31 // loop_footer_branch
                %180 = sbr.rel target = $region34
              $region39: #{discriminator_forward.12} parent=31 // loop_exit
                _
            $region32: #{discriminator_forward.12} parent=27 // pred_fallthru
              _
            // Predicated region
            $region40: #{discriminator_forward.12} parent=27 // pred_check
              _
            $region41: #{discriminator_forward.12} parent=27 // pred_check_branch
              %317 = sbr.rel target = $region43
            $region42: #{discriminator_forward.12} parent=27 // pred_region
              _
            $region43: #{discriminator_forward.12} parent=27 // pred_fallthru
              _
          $region28: #{discriminator_forward.12} parent=23 // pred_fallthru
            _
          %318 = vnop
        $region24: #{discriminator_forward.12} parent=19 // pred_fallthru
          _
        // Predicated region
        $region44: #{discriminator_forward.12} parent=19 // pred_check
          %p319 = pneg %p78
        $region45: #{discriminator_forward.12} parent=19 // pred_check_branch
          %321 = sbr.rel (%p319) target = $region47
        $region46: #{discriminator_forward.12} parent=19 // pred_region
          %s322 = smul.u32 128, %s18
          %p323 = scmp.lt.s32.totalorder %s322, 255
          %s324 = scalar_select %p323, %s322, 255
          %p325 = scmp.lt.s32.totalorder %s17, 0
          %s326 = scalar_select %p325, %s17, 0
          %s327 = sadd.s32 %s326, %s324
          %s328 = smul.addr %s327, 4
          %s329 = scalar_lea.vmem %s1, %s328
          %s330 = smul.u32 128, %s18
        $region47: #{discriminator_forward.12} parent=19 // pred_fallthru
          _
      $region20: #{discriminator_forward.12} parent=5 // pred_fallthru
        _
      %p331 = scmp.le.s32.totalorder 1, %s9
      %p332 = scmp.lt.s32.totalorder %s9, 3
      %p333 = pnand %p331, %p332
      %p334 = pneg %p333
      // Predicated region
      $region48: #{discriminator_forward.12} parent=5 // pred_check
        _
      $region49: #{discriminator_forward.12} parent=5 // pred_check_branch
        %336 = sbr.rel (%p333) target = $region51
      $region50: #{discriminator_forward.12} parent=5 // pred_region
        %s337 = ssub.s32 %s9, 1
        %s338 = sand.u32 %s43, 1
        %s339 = sand.u32 %s43, 1
        %s340 = smul.addr %s339, 512
        %s341 = scalar_lea.vmem [#allocation3], %s340
        // Predicated region
        $region52: #{discriminator_forward.12} parent=50 // pred_check
          %p342 = pneg %p56
        $region53: #{discriminator_forward.12} parent=50 // pred_check_branch
          %344 = sbr.rel (%p342) target = $region55
        $region54: #{discriminator_forward.12} parent=50 // pred_region
          _
        $region55: #{discriminator_forward.12} parent=50 // pred_fallthru
          _
        %s345 = sand.u32 %s43, 1
        %s346 = sand.u32 %s43, 1
        %s347 = smul.addr %s346, 512
        %s348 = scalar_lea.vmem [#allocation3], %s347
        %p349 = pneg %p56
        %p350 = pneg %p53
        %s351 = smul.u32 128, %s21
        %p352 = scmp.lt.s32.totalorder %s351, 255
        %s353 = scalar_select %p352, %s351, 255
        %p354 = scmp.lt.s32.totalorder %s20, 0
        %s355 = scalar_select %p354, %s20, 0
        %s356 = sadd.s32 %s355, %s353
        %s357 = smul.addr %s356, 4
        %s358 = scalar_lea.vmem %s1, %s357
        %p359 = pneg %p84
        %p360 = pneg %p81
        %p361 = scmp.lt.s32.totalorder %s20, 0
        %s362 = scalar_select %p361, %s20, 0
        %s363 = scalar_lea.vmem %s2, %s362
        %p364 = pneg %p110
        %p365 = pneg %p107
        %p366 = pneg %p138
        %p367 = pneg %p135
        %s368 = smul.u32 16, %s19
        %p369 = scmp.lt.s32.totalorder %s368, 15
        %s370 = scalar_select %p369, %s368, 15
        %p371 = scmp.lt.s32.totalorder %s20, 0
        %s372 = scalar_select %p371, %s20, 0
        %s373 = sadd.s32 %s372, %s370
        %s374 = smul.addr %s373, 8
        %s375 = scalar_lea.vmem %s3, %s374
        %s376 = smul.u32 16, %s19
        %s377 = smul.u32 8, %s21
        %s378 = smul.u32 128, %s21
        %p379 = scmp.lt.s32.totalorder %s378, 255
        %s380 = scalar_select %p379, %s378, 255
        %p381 = scmp.lt.s32.totalorder %s20, 0
        %s382 = scalar_select %p381, %s20, 0
        %s383 = sadd.s32 %s382, %s380
        %s384 = smul.addr %s383, 4
        %s385 = scalar_lea.vmem %s1, %s384
        %s386 = smul.u32 128, %s21
        %p387 = scmp.lt.s32.totalorder %s20, 0
        %s388 = scalar_select %p387, %s20, 0
        %s389 = scalar_lea.vmem %s2, %s388
        %s390 = smul.u32 16, %s19
        %p391 = scmp.lt.s32.totalorder %s390, 15
        %s392 = scalar_select %p391, %s390, 15
        %p393 = scmp.lt.s32.totalorder %s20, 0
        %s394 = scalar_select %p393, %s20, 0
        %s395 = sadd.s32 %s394, %s392
        %s396 = smul.addr %s395, 8
        %s397 = scalar_lea.vmem %s3, %s396
        %s398 = smul.u32 16, %s19
        %p400 = scmp.eq.s32.totalorder %s21, 0
        // Predicated region
        $region56: #{discriminator_forward.12} parent=50 // pred_check
          %p401 = pneg %p400
        $region57: #{discriminator_forward.12} parent=50 // pred_check_branch
          %403 = sbr.rel (%p401) target = $region59
        $region58: #{discriminator_forward.12} parent=50 // pred_region
          %404 = vst [vmem:[#allocation2] sm:$0xff] 0.0
          %405 = vst [vmem:[#allocation2 + $0x8] sm:$0xff] 0.0
          %406 = vst [vmem:[#allocation2 + $0x10] sm:$0xff] 0.0
          %407 = vst [vmem:[#allocation2 + $0x18] sm:$0xff] 0.0
          %408 = vst [vmem:[#allocation2 + $0x20] sm:$0xff] 0.0
          %409 = vst [vmem:[#allocation2 + $0x28] sm:$0xff] 0.0
          %410 = vst [vmem:[#allocation2 + $0x30] sm:$0xff] 0.0
          %411 = vst [vmem:[#allocation2 + $0x38] sm:$0xff] 0.0
          %412 = vst [vmem:[#allocation2 + $0x40] sm:$0xff] 0.0
          %413 = vst [vmem:[#allocation2 + $0x48] sm:$0xff] 0.0
          %414 = vst [vmem:[#allocation2 + $0x50] sm:$0xff] 0.0
          %415 = vst [vmem:[#allocation2 + $0x58] sm:$0xff] 0.0
          %416 = vst [vmem:[#allocation2 + $0x60] sm:$0xff] 0.0
          %417 = vst [vmem:[#allocation2 + $0x68] sm:$0xff] 0.0
          %418 = vst [vmem:[#allocation2 + $0x70] sm:$0xff] 0.0
          %419 = vst [vmem:[#allocation2 + $0x78] sm:$0xff] 0.0
        $region59: #{discriminator_forward.12} parent=50 // pred_fallthru
          _
        %v420 = vld [vmem:[#allocation2] sm:$0xff]
        %v421 = vld [vmem:[#allocation2 + $0x8] sm:$0xff]
        %v422 = vld [vmem:[#allocation2 + $0x10] sm:$0xff]
        %v423 = vld [vmem:[#allocation2 + $0x18] sm:$0xff]
        %v424 = vld [vmem:[#allocation2 + $0x20] sm:$0xff]
        %v425 = vld [vmem:[#allocation2 + $0x28] sm:$0xff]
        %v426 = vld [vmem:[#allocation2 + $0x30] sm:$0xff]
        %v427 = vld [vmem:[#allocation2 + $0x38] sm:$0xff]
        %v428 = vld [vmem:[#allocation2 + $0x40] sm:$0xff]
        %v429 = vld [vmem:[#allocation2 + $0x48] sm:$0xff]
        %v430 = vld [vmem:[#allocation2 + $0x50] sm:$0xff]
        %v431 = vld [vmem:[#allocation2 + $0x58] sm:$0xff]
        %v432 = vld [vmem:[#allocation2 + $0x60] sm:$0xff]
        %v433 = vld [vmem:[#allocation2 + $0x68] sm:$0xff]
        %v434 = vld [vmem:[#allocation2 + $0x70] sm:$0xff]
        %v435 = vld [vmem:[#allocation2 + $0x78] sm:$0xff]
        %v436 = vld [vmem:[%s341] sm:$0xff]
        %v437 = vld [vmem:[%s341 + $0x8] sm:$0xff]
        %v438 = vld [vmem:[%s341 + $0x10] sm:$0xff]
        %v439 = vld [vmem:[%s341 + $0x18] sm:$0xff]
        %v440 = vld [vmem:[%s341 + $0x20] sm:$0xff]
        %v441 = vld [vmem:[%s341 + $0x28] sm:$0xff]
        %v442 = vld [vmem:[%s341 + $0x30] sm:$0xff]
        %v443 = vld [vmem:[%s341 + $0x38] sm:$0xff]
        %v444 = vld [vmem:[%s341 + $0x40] sm:$0xff]
        %v445 = vld [vmem:[%s341 + $0x48] sm:$0xff]
        %v446 = vld [vmem:[%s341 + $0x50] sm:$0xff]
        %v447 = vld [vmem:[%s341 + $0x58] sm:$0xff]
        %v448 = vld [vmem:[%s341 + $0x60] sm:$0xff]
        %v449 = vld [vmem:[%s341 + $0x68] sm:$0xff]
        %v450 = vld [vmem:[%s341 + $0x70] sm:$0xff]
        %v451 = vld [vmem:[%s341 + $0x78] sm:$0xff]
        %v452 = vld [vmem:[%s341 + $0x80] sm:$0xff]
        %v453 = vld [vmem:[%s341 + $0x88] sm:$0xff]
        %v454 = vld [vmem:[%s341 + $0x90] sm:$0xff]
        %v455 = vld [vmem:[%s341 + $0x98] sm:$0xff]
        %v456 = vld [vmem:[%s341 + $0xa0] sm:$0xff]
        %v457 = vld [vmem:[%s341 + $0xa8] sm:$0xff]
        %v458 = vld [vmem:[%s341 + $0xb0] sm:$0xff]
        %v459 = vld [vmem:[%s341 + $0xb8] sm:$0xff]
        %v460 = vld [vmem:[%s341 + $0xc0] sm:$0xff]
        %v461 = vld [vmem:[%s341 + $0xc8] sm:$0xff]
        %v462 = vld [vmem:[%s341 + $0xd0] sm:$0xff]
        %v463 = vld [vmem:[%s341 + $0xd8] sm:$0xff]
        %v464 = vld [vmem:[%s341 + $0xe0] sm:$0xff]
        %v465 = vld [vmem:[%s341 + $0xe8] sm:$0xff]
        %v466 = vld [vmem:[%s341 + $0xf0] sm:$0xff]
        %v467 = vld [vmem:[%s341 + $0xf8] sm:$0xff]
        %v468 = vld [vmem:[%s341 + $0x100] sm:$0xff]
        %v469 = vld [vmem:[%s341 + $0x108] sm:$0xff]
        %v470 = vld [vmem:[%s341 + $0x110] sm:$0xff]
        %v471 = vld [vmem:[%s341 + $0x118] sm:$0xff]
        %v472 = vld [vmem:[%s341 + $0x120] sm:$0xff]
        %v473 = vld [vmem:[%s341 + $0x128] sm:$0xff]
        %v474 = vld [vmem:[%s341 + $0x130] sm:$0xff]
        %v475 = vld [vmem:[%s341 + $0x138] sm:$0xff]
        %v476 = vld [vmem:[%s341 + $0x140] sm:$0xff]
        %v477 = vld [vmem:[%s341 + $0x148] sm:$0xff]
        %v478 = vld [vmem:[%s341 + $0x150] sm:$0xff]
        %v479 = vld [vmem:[%s341 + $0x158] sm:$0xff]
        %v480 = vld [vmem:[%s341 + $0x160] sm:$0xff]
        %v481 = vld [vmem:[%s341 + $0x168] sm:$0xff]
        %v482 = vld [vmem:[%s341 + $0x170] sm:$0xff]
        %v483 = vld [vmem:[%s341 + $0x178] sm:$0xff]
        %v484 = vld [vmem:[%s341 + $0x180] sm:$0xff]
        %v485 = vld [vmem:[%s341 + $0x188] sm:$0xff]
        %v486 = vld [vmem:[%s341 + $0x190] sm:$0xff]
        %v487 = vld [vmem:[%s341 + $0x198] sm:$0xff]
        %v488 = vld [vmem:[%s341 + $0x1a0] sm:$0xff]
        %v489 = vld [vmem:[%s341 + $0x1a8] sm:$0xff]
        %v490 = vld [vmem:[%s341 + $0x1b0] sm:$0xff]
        %v491 = vld [vmem:[%s341 + $0x1b8] sm:$0xff]
        %v492 = vld [vmem:[%s341 + $0x1c0] sm:$0xff]
        %v493 = vld [vmem:[%s341 + $0x1c8] sm:$0xff]
        %v494 = vld [vmem:[%s341 + $0x1d0] sm:$0xff]
        %v495 = vld [vmem:[%s341 + $0x1d8] sm:$0xff]
        %v496 = vld [vmem:[%s341 + $0x1e0] sm:$0xff]
        %v497 = vld [vmem:[%s341 + $0x1e8] sm:$0xff]
        %v498 = vld [vmem:[%s341 + $0x1f0] sm:$0xff]
        %v499 = vld [vmem:[%s341 + $0x1f8] sm:$0xff]
        %v500 = vld [vmem:[%s385] sm:$0xf]
        %v501 = vld [vmem:[%s385 + $0x4] sm:$0xf]
        %v502 = vld [vmem:[%s385 + $0x8] sm:$0xf]
        %v503 = vld [vmem:[%s385 + $0xc] sm:$0xf]
        %v504 = vld [vmem:[%s385 + $0x10] sm:$0xf]
        %v505 = vld [vmem:[%s385 + $0x14] sm:$0xf]
        %v506 = vld [vmem:[%s385 + $0x18] sm:$0xf]
        %v507 = vld [vmem:[%s385 + $0x1c] sm:$0xf]
        %v508 = vld [vmem:[%s385 + $0x20] sm:$0xf]
        %v509 = vld [vmem:[%s385 + $0x24] sm:$0xf]
        %v510 = vld [vmem:[%s385 + $0x28] sm:$0xf]
        %v511 = vld [vmem:[%s385 + $0x2c] sm:$0xf]
        %v512 = vld [vmem:[%s385 + $0x30] sm:$0xf]
        %v513 = vld [vmem:[%s385 + $0x34] sm:$0xf]
        %v514 = vld [vmem:[%s385 + $0x38] sm:$0xf]
        %v515 = vld [vmem:[%s385 + $0x3c] sm:$0xf]
        %v516 = vld [vmem:[%s385 + $0x40] sm:$0xf]
        %v517 = vld [vmem:[%s385 + $0x44] sm:$0xf]
        %v518 = vld [vmem:[%s385 + $0x48] sm:$0xf]
        %v519 = vld [vmem:[%s385 + $0x4c] sm:$0xf]
        %v520 = vld [vmem:[%s385 + $0x50] sm:$0xf]
        %v521 = vld [vmem:[%s385 + $0x54] sm:$0xf]
        %v522 = vld [vmem:[%s385 + $0x58] sm:$0xf]
        %v523 = vld [vmem:[%s385 + $0x5c] sm:$0xf]
        %v524 = vld [vmem:[%s385 + $0x60] sm:$0xf]
        %v525 = vld [vmem:[%s385 + $0x64] sm:$0xf]
        %v526 = vld [vmem:[%s385 + $0x68] sm:$0xf]
        %v527 = vld [vmem:[%s385 + $0x6c] sm:$0xf]
        %v528 = vld [vmem:[%s385 + $0x70] sm:$0xf]
        %v529 = vld [vmem:[%s385 + $0x74] sm:$0xf]
        %v530 = vld [vmem:[%s385 + $0x78] sm:$0xf]
        %v531 = vld [vmem:[%s385 + $0x7c] sm:$0xf]
        %v532 = vld [vmem:[%s385 + $0x80] sm:$0xf]
        %v533 = vld [vmem:[%s385 + $0x84] sm:$0xf]
        %v534 = vld [vmem:[%s385 + $0x88] sm:$0xf]
        %v535 = vld [vmem:[%s385 + $0x8c] sm:$0xf]
        %v536 = vld [vmem:[%s385 + $0x90] sm:$0xf]
        %v537 = vld [vmem:[%s385 + $0x94] sm:$0xf]
        %v538 = vld [vmem:[%s385 + $0x98] sm:$0xf]
        %v539 = vld [vmem:[%s385 + $0x9c] sm:$0xf]
        %v540 = vld [vmem:[%s385 + $0xa0] sm:$0xf]
        %v541 = vld [vmem:[%s385 + $0xa4] sm:$0xf]
        %v542 = vld [vmem:[%s385 + $0xa8] sm:$0xf]
        %v543 = vld [vmem:[%s385 + $0xac] sm:$0xf]
        %v544 = vld [vmem:[%s385 + $0xb0] sm:$0xf]
        %v545 = vld [vmem:[%s385 + $0xb4] sm:$0xf]
        %v546 = vld [vmem:[%s385 + $0xb8] sm:$0xf]
        %v547 = vld [vmem:[%s385 + $0xbc] sm:$0xf]
        %v548 = vld [vmem:[%s385 + $0xc0] sm:$0xf]
        %v549 = vld [vmem:[%s385 + $0xc4] sm:$0xf]
        %v550 = vld [vmem:[%s385 + $0xc8] sm:$0xf]
        %v551 = vld [vmem:[%s385 + $0xcc] sm:$0xf]
        %v552 = vld [vmem:[%s385 + $0xd0] sm:$0xf]
        %v553 = vld [vmem:[%s385 + $0xd4] sm:$0xf]
        %v554 = vld [vmem:[%s385 + $0xd8] sm:$0xf]
        %v555 = vld [vmem:[%s385 + $0xdc] sm:$0xf]
        %v556 = vld [vmem:[%s385 + $0xe0] sm:$0xf]
        %v557 = vld [vmem:[%s385 + $0xe4] sm:$0xf]
        %v558 = vld [vmem:[%s385 + $0xe8] sm:$0xf]
        %v559 = vld [vmem:[%s385 + $0xec] sm:$0xf]
        %v560 = vld [vmem:[%s385 + $0xf0] sm:$0xf]
        %v561 = vld [vmem:[%s385 + $0xf4] sm:$0xf]
        %v562 = vld [vmem:[%s385 + $0xf8] sm:$0xf]
        %v563 = vld [vmem:[%s385 + $0xfc] sm:$0xf]
        %v564 = vld [vmem:[%s385 + $0x100] sm:$0xf]
        %v565 = vld [vmem:[%s385 + $0x104] sm:$0xf]
        %v566 = vld [vmem:[%s385 + $0x108] sm:$0xf]
        %v567 = vld [vmem:[%s385 + $0x10c] sm:$0xf]
        %v568 = vld [vmem:[%s385 + $0x110] sm:$0xf]
        %v569 = vld [vmem:[%s385 + $0x114] sm:$0xf]
        %v570 = vld [vmem:[%s385 + $0x118] sm:$0xf]
        %v571 = vld [vmem:[%s385 + $0x11c] sm:$0xf]
        %v572 = vld [vmem:[%s385 + $0x120] sm:$0xf]
        %v573 = vld [vmem:[%s385 + $0x124] sm:$0xf]
        %v574 = vld [vmem:[%s385 + $0x128] sm:$0xf]
        %v575 = vld [vmem:[%s385 + $0x12c] sm:$0xf]
        %v576 = vld [vmem:[%s385 + $0x130] sm:$0xf]
        %v577 = vld [vmem:[%s385 + $0x134] sm:$0xf]
        %v578 = vld [vmem:[%s385 + $0x138] sm:$0xf]
        %v579 = vld [vmem:[%s385 + $0x13c] sm:$0xf]
        %v580 = vld [vmem:[%s385 + $0x140] sm:$0xf]
        %v581 = vld [vmem:[%s385 + $0x144] sm:$0xf]
        %v582 = vld [vmem:[%s385 + $0x148] sm:$0xf]
        %v583 = vld [vmem:[%s385 + $0x14c] sm:$0xf]
        %v584 = vld [vmem:[%s385 + $0x150] sm:$0xf]
        %v585 = vld [vmem:[%s385 + $0x154] sm:$0xf]
        %v586 = vld [vmem:[%s385 + $0x158] sm:$0xf]
        %v587 = vld [vmem:[%s385 + $0x15c] sm:$0xf]
        %v588 = vld [vmem:[%s385 + $0x160] sm:$0xf]
        %v589 = vld [vmem:[%s385 + $0x164] sm:$0xf]
        %v590 = vld [vmem:[%s385 + $0x168] sm:$0xf]
        %v591 = vld [vmem:[%s385 + $0x16c] sm:$0xf]
        %v592 = vld [vmem:[%s385 + $0x170] sm:$0xf]
        %v593 = vld [vmem:[%s385 + $0x174] sm:$0xf]
        %v594 = vld [vmem:[%s385 + $0x178] sm:$0xf]
        %v595 = vld [vmem:[%s385 + $0x17c] sm:$0xf]
        %v596 = vld [vmem:[%s385 + $0x180] sm:$0xf]
        %v597 = vld [vmem:[%s385 + $0x184] sm:$0xf]
        %v598 = vld [vmem:[%s385 + $0x188] sm:$0xf]
        %v599 = vld [vmem:[%s385 + $0x18c] sm:$0xf]
        %v600 = vld [vmem:[%s385 + $0x190] sm:$0xf]
        %v601 = vld [vmem:[%s385 + $0x194] sm:$0xf]
        %v602 = vld [vmem:[%s385 + $0x198] sm:$0xf]
        %v603 = vld [vmem:[%s385 + $0x19c] sm:$0xf]
        %v604 = vld [vmem:[%s385 + $0x1a0] sm:$0xf]
        %v605 = vld [vmem:[%s385 + $0x1a4] sm:$0xf]
        %v606 = vld [vmem:[%s385 + $0x1a8] sm:$0xf]
        %v607 = vld [vmem:[%s385 + $0x1ac] sm:$0xf]
        %v608 = vld [vmem:[%s385 + $0x1b0] sm:$0xf]
        %v609 = vld [vmem:[%s385 + $0x1b4] sm:$0xf]
        %v610 = vld [vmem:[%s385 + $0x1b8] sm:$0xf]
        %v611 = vld [vmem:[%s385 + $0x1bc] sm:$0xf]
        %v612 = vld [vmem:[%s385 + $0x1c0] sm:$0xf]
        %v613 = vld [vmem:[%s385 + $0x1c4] sm:$0xf]
        %v614 = vld [vmem:[%s385 + $0x1c8] sm:$0xf]
        %v615 = vld [vmem:[%s385 + $0x1cc] sm:$0xf]
        %v616 = vld [vmem:[%s385 + $0x1d0] sm:$0xf]
        %v617 = vld [vmem:[%s385 + $0x1d4] sm:$0xf]
        %v618 = vld [vmem:[%s385 + $0x1d8] sm:$0xf]
        %v619 = vld [vmem:[%s385 + $0x1dc] sm:$0xf]
        %v620 = vld [vmem:[%s385 + $0x1e0] sm:$0xf]
        %v621 = vld [vmem:[%s385 + $0x1e4] sm:$0xf]
        %v622 = vld [vmem:[%s385 + $0x1e8] sm:$0xf]
        %v623 = vld [vmem:[%s385 + $0x1ec] sm:$0xf]
        %v624 = vld [vmem:[%s385 + $0x1f0] sm:$0xf]
        %v625 = vld [vmem:[%s385 + $0x1f4] sm:$0xf]
        %v626 = vld [vmem:[%s385 + $0x1f8] sm:$0xf]
        %v627 = vld [vmem:[%s385 + $0x1fc] sm:$0xf]
        %v692 = vunpack.c.l.b16 %v436
        %v693 = vunpack.c.h.b16 %v436
        %v694 = vunpack.c.l.b16 %v437
        %v695 = vunpack.c.h.b16 %v437
        %v696 = vunpack.c.l.b16 %v438
        %v697 = vunpack.c.h.b16 %v438
        %v698 = vunpack.c.l.b16 %v439
        %v699 = vunpack.c.h.b16 %v439
        %v700 = vunpack.c.l.b16 %v440
        %v701 = vunpack.c.h.b16 %v440
        %v702 = vunpack.c.l.b16 %v441
        %v703 = vunpack.c.h.b16 %v441
        %v704 = vunpack.c.l.b16 %v442
        %v705 = vunpack.c.h.b16 %v442
        %v706 = vunpack.c.l.b16 %v443
        %v707 = vunpack.c.h.b16 %v443
        %v708 = vunpack.c.l.b16 %v444
        %v709 = vunpack.c.h.b16 %v444
        %v710 = vunpack.c.l.b16 %v445
        %v711 = vunpack.c.h.b16 %v445
        %v712 = vunpack.c.l.b16 %v446
        %v713 = vunpack.c.h.b16 %v446
        %v714 = vunpack.c.l.b16 %v447
        %v715 = vunpack.c.h.b16 %v447
        %v716 = vunpack.c.l.b16 %v448
        %v717 = vunpack.c.h.b16 %v448
        %v718 = vunpack.c.l.b16 %v449
        %v719 = vunpack.c.h.b16 %v449
        %v720 = vunpack.c.l.b16 %v450
        %v721 = vunpack.c.h.b16 %v450
        %v722 = vunpack.c.l.b16 %v451
        %v723 = vunpack.c.h.b16 %v451
        %v724 = vunpack.c.l.b16 %v452
        %v725 = vunpack.c.h.b16 %v452
        %v726 = vunpack.c.l.b16 %v453
        %v727 = vunpack.c.h.b16 %v453
        %v728 = vunpack.c.l.b16 %v454
        %v729 = vunpack.c.h.b16 %v454
        %v730 = vunpack.c.l.b16 %v455
        %v731 = vunpack.c.h.b16 %v455
        %v732 = vunpack.c.l.b16 %v456
        %v733 = vunpack.c.h.b16 %v456
        %v734 = vunpack.c.l.b16 %v457
        %v735 = vunpack.c.h.b16 %v457
        %v736 = vunpack.c.l.b16 %v458
        %v737 = vunpack.c.h.b16 %v458
        %v738 = vunpack.c.l.b16 %v459
        %v739 = vunpack.c.h.b16 %v459
        %v740 = vunpack.c.l.b16 %v460
        %v741 = vunpack.c.h.b16 %v460
        %v742 = vunpack.c.l.b16 %v461
        %v743 = vunpack.c.h.b16 %v461
        %v744 = vunpack.c.l.b16 %v462
        %v745 = vunpack.c.h.b16 %v462
        %v746 = vunpack.c.l.b16 %v463
        %v747 = vunpack.c.h.b16 %v463
        %v748 = vunpack.c.l.b16 %v464
        %v749 = vunpack.c.h.b16 %v464
        %v750 = vunpack.c.l.b16 %v465
        %v751 = vunpack.c.h.b16 %v465
        %v752 = vunpack.c.l.b16 %v466
        %v753 = vunpack.c.h.b16 %v466
        %v754 = vunpack.c.l.b16 %v467
        %v755 = vunpack.c.h.b16 %v467
        %v756 = vunpack.c.l.b16 %v468
        %v757 = vunpack.c.h.b16 %v468
        %v758 = vunpack.c.l.b16 %v469
        %v759 = vunpack.c.h.b16 %v469
        %v760 = vunpack.c.l.b16 %v470
        %v761 = vunpack.c.h.b16 %v470
        %v762 = vunpack.c.l.b16 %v471
        %v763 = vunpack.c.h.b16 %v471
        %v764 = vunpack.c.l.b16 %v472
        %v765 = vunpack.c.h.b16 %v472
        %v766 = vunpack.c.l.b16 %v473
        %v767 = vunpack.c.h.b16 %v473
        %v768 = vunpack.c.l.b16 %v474
        %v769 = vunpack.c.h.b16 %v474
        %v770 = vunpack.c.l.b16 %v475
        %v771 = vunpack.c.h.b16 %v475
        %v772 = vunpack.c.l.b16 %v476
        %v773 = vunpack.c.h.b16 %v476
        %v774 = vunpack.c.l.b16 %v477
        %v775 = vunpack.c.h.b16 %v477
        %v776 = vunpack.c.l.b16 %v478
        %v777 = vunpack.c.h.b16 %v478
        %v778 = vunpack.c.l.b16 %v479
        %v779 = vunpack.c.h.b16 %v479
        %v780 = vunpack.c.l.b16 %v480
        %v781 = vunpack.c.h.b16 %v480
        %v782 = vunpack.c.l.b16 %v481
        %v783 = vunpack.c.h.b16 %v481
        %v784 = vunpack.c.l.b16 %v482
        %v785 = vunpack.c.h.b16 %v482
        %v786 = vunpack.c.l.b16 %v483
        %v787 = vunpack.c.h.b16 %v483
        %v788 = vunpack.c.l.b16 %v484
        %v789 = vunpack.c.h.b16 %v484
        %v790 = vunpack.c.l.b16 %v485
        %v791 = vunpack.c.h.b16 %v485
        %v792 = vunpack.c.l.b16 %v486
        %v793 = vunpack.c.h.b16 %v486
        %v794 = vunpack.c.l.b16 %v487
        %v795 = vunpack.c.h.b16 %v487
        %v796 = vunpack.c.l.b16 %v488
        %v797 = vunpack.c.h.b16 %v488
        %v798 = vunpack.c.l.b16 %v489
        %v799 = vunpack.c.h.b16 %v489
        %v800 = vunpack.c.l.b16 %v490
        %v801 = vunpack.c.h.b16 %v490
        %v802 = vunpack.c.l.b16 %v491
        %v803 = vunpack.c.h.b16 %v491
        %v804 = vunpack.c.l.b16 %v492
        %v805 = vunpack.c.h.b16 %v492
        %v806 = vunpack.c.l.b16 %v493
        %v807 = vunpack.c.h.b16 %v493
        %v808 = vunpack.c.l.b16 %v494
        %v809 = vunpack.c.h.b16 %v494
        %v810 = vunpack.c.l.b16 %v495
        %v811 = vunpack.c.h.b16 %v495
        %v812 = vunpack.c.l.b16 %v496
        %v813 = vunpack.c.h.b16 %v496
        %v814 = vunpack.c.l.b16 %v497
        %v815 = vunpack.c.h.b16 %v497
        %v816 = vunpack.c.l.b16 %v498
        %v817 = vunpack.c.h.b16 %v498
        %v818 = vunpack.c.l.b16 %v499
        %v819 = vunpack.c.h.b16 %v499
        %v820 = vpack.c.b16 %v700, %v692
        %v821 = vpack.c.b16 %v701, %v693
        %v822 = vpack.c.b16 %v702, %v694
        %v823 = vpack.c.b16 %v703, %v695
        %v824 = vpack.c.b16 %v704, %v696
        %v825 = vpack.c.b16 %v705, %v697
        %v826 = vpack.c.b16 %v706, %v698
        %v827 = vpack.c.b16 %v707, %v699
        %v828 = vpack.c.b16 %v716, %v708
        %v829 = vpack.c.b16 %v717, %v709
        %v830 = vpack.c.b16 %v718, %v710
        %v831 = vpack.c.b16 %v719, %v711
        %v832 = vpack.c.b16 %v720, %v712
        %v833 = vpack.c.b16 %v721, %v713
        %v834 = vpack.c.b16 %v722, %v714
        %v835 = vpack.c.b16 %v723, %v715
        %v836 = vpack.c.b16 %v732, %v724
        %v837 = vpack.c.b16 %v733, %v725
        %v838 = vpack.c.b16 %v734, %v726
        %v839 = vpack.c.b16 %v735, %v727
        %v840 = vpack.c.b16 %v736, %v728
        %v841 = vpack.c.b16 %v737, %v729
        %v842 = vpack.c.b16 %v738, %v730
        %v843 = vpack.c.b16 %v739, %v731
        %v844 = vpack.c.b16 %v748, %v740
        %v845 = vpack.c.b16 %v749, %v741
        %v846 = vpack.c.b16 %v750, %v742
        %v847 = vpack.c.b16 %v751, %v743
        %v848 = vpack.c.b16 %v752, %v744
        %v849 = vpack.c.b16 %v753, %v745
        %v850 = vpack.c.b16 %v754, %v746
        %v851 = vpack.c.b16 %v755, %v747
        %v852 = vpack.c.b16 %v764, %v756
        %v853 = vpack.c.b16 %v765, %v757
        %v854 = vpack.c.b16 %v766, %v758
        %v855 = vpack.c.b16 %v767, %v759
        %v856 = vpack.c.b16 %v768, %v760
        %v857 = vpack.c.b16 %v769, %v761
        %v858 = vpack.c.b16 %v770, %v762
        %v859 = vpack.c.b16 %v771, %v763
        %v860 = vpack.c.b16 %v780, %v772
        %v861 = vpack.c.b16 %v781, %v773
        %v862 = vpack.c.b16 %v782, %v774
        %v863 = vpack.c.b16 %v783, %v775
        %v864 = vpack.c.b16 %v784, %v776
        %v865 = vpack.c.b16 %v785, %v777
        %v866 = vpack.c.b16 %v786, %v778
        %v867 = vpack.c.b16 %v787, %v779
        %v868 = vpack.c.b16 %v796, %v788
        %v869 = vpack.c.b16 %v797, %v789
        %v870 = vpack.c.b16 %v798, %v790
        %v871 = vpack.c.b16 %v799, %v791
        %v872 = vpack.c.b16 %v800, %v792
        %v873 = vpack.c.b16 %v801, %v793
        %v874 = vpack.c.b16 %v802, %v794
        %v875 = vpack.c.b16 %v803, %v795
        %v876 = vpack.c.b16 %v812, %v804
        %v877 = vpack.c.b16 %v813, %v805
        %v878 = vpack.c.b16 %v814, %v806
        %v879 = vpack.c.b16 %v815, %v807
        %v880 = vpack.c.b16 %v816, %v808
        %v881 = vpack.c.b16 %v817, %v809
        %v882 = vpack.c.b16 %v818, %v810
        %v883 = vpack.c.b16 %v819, %v811
        %v1076 = vunpack.c.l.b16 %v500
        %v1077 = vunpack.c.l.b16 %v501
        %v1078 = vunpack.c.l.b16 %v502
        %v1079 = vunpack.c.l.b16 %v503
        %v1080 = vunpack.c.l.b16 %v504
        %v1081 = vunpack.c.l.b16 %v505
        %v1082 = vunpack.c.l.b16 %v506
        %v1083 = vunpack.c.l.b16 %v507
        %v1084 = vunpack.c.l.b16 %v508
        %v1085 = vunpack.c.l.b16 %v509
        %v1086 = vunpack.c.l.b16 %v510
        %v1087 = vunpack.c.l.b16 %v511
        %v1088 = vunpack.c.l.b16 %v512
        %v1089 = vunpack.c.l.b16 %v513
        %v1090 = vunpack.c.l.b16 %v514
        %v1091 = vunpack.c.l.b16 %v515
        %v1092 = vunpack.c.l.b16 %v516
        %v1093 = vunpack.c.l.b16 %v517
        %v1094 = vunpack.c.l.b16 %v518
        %v1095 = vunpack.c.l.b16 %v519
        %v1096 = vunpack.c.l.b16 %v520
        %v1097 = vunpack.c.l.b16 %v521
        %v1098 = vunpack.c.l.b16 %v522
        %v1099 = vunpack.c.l.b16 %v523
        %v1100 = vunpack.c.l.b16 %v524
        %v1101 = vunpack.c.l.b16 %v525
        %v1102 = vunpack.c.l.b16 %v526
        %v1103 = vunpack.c.l.b16 %v527
        %v1104 = vunpack.c.l.b16 %v528
        %v1105 = vunpack.c.l.b16 %v529
        %v1106 = vunpack.c.l.b16 %v530
        %v1107 = vunpack.c.l.b16 %v531
        %v1108 = vunpack.c.l.b16 %v532
        %v1109 = vunpack.c.l.b16 %v533
        %v1110 = vunpack.c.l.b16 %v534
        %v1111 = vunpack.c.l.b16 %v535
        %v1112 = vunpack.c.l.b16 %v536
        %v1113 = vunpack.c.l.b16 %v537
        %v1114 = vunpack.c.l.b16 %v538
        %v1115 = vunpack.c.l.b16 %v539
        %v1116 = vunpack.c.l.b16 %v540
        %v1117 = vunpack.c.l.b16 %v541
        %v1118 = vunpack.c.l.b16 %v542
        %v1119 = vunpack.c.l.b16 %v543
        %v1120 = vunpack.c.l.b16 %v544
        %v1121 = vunpack.c.l.b16 %v545
        %v1122 = vunpack.c.l.b16 %v546
        %v1123 = vunpack.c.l.b16 %v547
        %v1124 = vunpack.c.l.b16 %v548
        %v1125 = vunpack.c.l.b16 %v549
        %v1126 = vunpack.c.l.b16 %v550
        %v1127 = vunpack.c.l.b16 %v551
        %v1128 = vunpack.c.l.b16 %v552
        %v1129 = vunpack.c.l.b16 %v553
        %v1130 = vunpack.c.l.b16 %v554
        %v1131 = vunpack.c.l.b16 %v555
        %v1132 = vunpack.c.l.b16 %v556
        %v1133 = vunpack.c.l.b16 %v557
        %v1134 = vunpack.c.l.b16 %v558
        %v1135 = vunpack.c.l.b16 %v559
        %v1136 = vunpack.c.l.b16 %v560
        %v1137 = vunpack.c.l.b16 %v561
        %v1138 = vunpack.c.l.b16 %v562
        %v1139 = vunpack.c.l.b16 %v563
        %v1140 = vunpack.c.l.b16 %v564
        %v1141 = vunpack.c.l.b16 %v565
        %v1142 = vunpack.c.l.b16 %v566
        %v1143 = vunpack.c.l.b16 %v567
        %v1144 = vunpack.c.l.b16 %v568
        %v1145 = vunpack.c.l.b16 %v569
        %v1146 = vunpack.c.l.b16 %v570
        %v1147 = vunpack.c.l.b16 %v571
        %v1148 = vunpack.c.l.b16 %v572
        %v1149 = vunpack.c.l.b16 %v573
        %v1150 = vunpack.c.l.b16 %v574
        %v1151 = vunpack.c.l.b16 %v575
        %v1152 = vunpack.c.l.b16 %v576
        %v1153 = vunpack.c.l.b16 %v577
        %v1154 = vunpack.c.l.b16 %v578
        %v1155 = vunpack.c.l.b16 %v579
        %v1156 = vunpack.c.l.b16 %v580
        %v1157 = vunpack.c.l.b16 %v581
        %v1158 = vunpack.c.l.b16 %v582
        %v1159 = vunpack.c.l.b16 %v583
        %v1160 = vunpack.c.l.b16 %v584
        %v1161 = vunpack.c.l.b16 %v585
        %v1162 = vunpack.c.l.b16 %v586
        %v1163 = vunpack.c.l.b16 %v587
        %v1164 = vunpack.c.l.b16 %v588
        %v1165 = vunpack.c.l.b16 %v589
        %v1166 = vunpack.c.l.b16 %v590
        %v1167 = vunpack.c.l.b16 %v591
        %v1168 = vunpack.c.l.b16 %v592
        %v1169 = vunpack.c.l.b16 %v593
        %v1170 = vunpack.c.l.b16 %v594
        %v1171 = vunpack.c.l.b16 %v595
        %v1172 = vunpack.c.l.b16 %v596
        %v1173 = vunpack.c.l.b16 %v597
        %v1174 = vunpack.c.l.b16 %v598
        %v1175 = vunpack.c.l.b16 %v599
        %v1176 = vunpack.c.l.b16 %v600
        %v1177 = vunpack.c.l.b16 %v601
        %v1178 = vunpack.c.l.b16 %v602
        %v1179 = vunpack.c.l.b16 %v603
        %v1180 = vunpack.c.l.b16 %v604
        %v1181 = vunpack.c.l.b16 %v605
        %v1182 = vunpack.c.l.b16 %v606
        %v1183 = vunpack.c.l.b16 %v607
        %v1184 = vunpack.c.l.b16 %v608
        %v1185 = vunpack.c.l.b16 %v609
        %v1186 = vunpack.c.l.b16 %v610
        %v1187 = vunpack.c.l.b16 %v611
        %v1188 = vunpack.c.l.b16 %v612
        %v1189 = vunpack.c.l.b16 %v613
        %v1190 = vunpack.c.l.b16 %v614
        %v1191 = vunpack.c.l.b16 %v615
        %v1192 = vunpack.c.l.b16 %v616
        %v1193 = vunpack.c.l.b16 %v617
        %v1194 = vunpack.c.l.b16 %v618
        %v1195 = vunpack.c.l.b16 %v619
        %v1196 = vunpack.c.l.b16 %v620
        %v1197 = vunpack.c.l.b16 %v621
        %v1198 = vunpack.c.l.b16 %v622
        %v1199 = vunpack.c.l.b16 %v623
        %v1200 = vunpack.c.l.b16 %v624
        %v1201 = vunpack.c.l.b16 %v625
        %v1202 = vunpack.c.l.b16 %v626
        %v1203 = vunpack.c.l.b16 %v627
        %v1204 = vpack.c.b16 %v1077, %v1076
        %v1205 = vpack.c.b16 %v1079, %v1078
        %v1206 = vpack.c.b16 %v1081, %v1080
        %v1207 = vpack.c.b16 %v1083, %v1082
        %v1208 = vpack.c.b16 %v1085, %v1084
        %v1209 = vpack.c.b16 %v1087, %v1086
        %v1210 = vpack.c.b16 %v1089, %v1088
        %v1211 = vpack.c.b16 %v1091, %v1090
        %v1212 = vpack.c.b16 %v1093, %v1092
        %v1213 = vpack.c.b16 %v1095, %v1094
        %v1214 = vpack.c.b16 %v1097, %v1096
        %v1215 = vpack.c.b16 %v1099, %v1098
        %v1216 = vpack.c.b16 %v1101, %v1100
        %v1217 = vpack.c.b16 %v1103, %v1102
        %v1218 = vpack.c.b16 %v1105, %v1104
        %v1219 = vpack.c.b16 %v1107, %v1106
        %v1220 = vpack.c.b16 %v1109, %v1108
        %v1221 = vpack.c.b16 %v1111, %v1110
        %v1222 = vpack.c.b16 %v1113, %v1112
        %v1223 = vpack.c.b16 %v1115, %v1114
        %v1224 = vpack.c.b16 %v1117, %v1116
        %v1225 = vpack.c.b16 %v1119, %v1118
        %v1226 = vpack.c.b16 %v1121, %v1120
        %v1227 = vpack.c.b16 %v1123, %v1122
        %v1228 = vpack.c.b16 %v1125, %v1124
        %v1229 = vpack.c.b16 %v1127, %v1126
        %v1230 = vpack.c.b16 %v1129, %v1128
        %v1231 = vpack.c.b16 %v1131, %v1130
        %v1232 = vpack.c.b16 %v1133, %v1132
        %v1233 = vpack.c.b16 %v1135, %v1134
        %v1234 = vpack.c.b16 %v1137, %v1136
        %v1235 = vpack.c.b16 %v1139, %v1138
        %v1236 = vpack.c.b16 %v1141, %v1140
        %v1237 = vpack.c.b16 %v1143, %v1142
        %v1238 = vpack.c.b16 %v1145, %v1144
        %v1239 = vpack.c.b16 %v1147, %v1146
        %v1240 = vpack.c.b16 %v1149, %v1148
        %v1241 = vpack.c.b16 %v1151, %v1150
        %v1242 = vpack.c.b16 %v1153, %v1152
        %v1243 = vpack.c.b16 %v1155, %v1154
        %v1244 = vpack.c.b16 %v1157, %v1156
        %v1245 = vpack.c.b16 %v1159, %v1158
        %v1246 = vpack.c.b16 %v1161, %v1160
        %v1247 = vpack.c.b16 %v1163, %v1162
        %v1248 = vpack.c.b16 %v1165, %v1164
        %v1249 = vpack.c.b16 %v1167, %v1166
        %v1250 = vpack.c.b16 %v1169, %v1168
        %v1251 = vpack.c.b16 %v1171, %v1170
        %v1252 = vpack.c.b16 %v1173, %v1172
        %v1253 = vpack.c.b16 %v1175, %v1174
        %v1254 = vpack.c.b16 %v1177, %v1176
        %v1255 = vpack.c.b16 %v1179, %v1178
        %v1256 = vpack.c.b16 %v1181, %v1180
        %v1257 = vpack.c.b16 %v1183, %v1182
        %v1258 = vpack.c.b16 %v1185, %v1184
        %v1259 = vpack.c.b16 %v1187, %v1186
        %v1260 = vpack.c.b16 %v1189, %v1188
        %v1261 = vpack.c.b16 %v1191, %v1190
        %v1262 = vpack.c.b16 %v1193, %v1192
        %v1263 = vpack.c.b16 %v1195, %v1194
        %v1264 = vpack.c.b16 %v1197, %v1196
        %v1265 = vpack.c.b16 %v1199, %v1198
        %v1266 = vpack.c.b16 %v1201, %v1200
        %v1267 = vpack.c.b16 %v1203, %v1202
        %1332 = vmatprep.subr.bf16.mxu0 0
        %1333 = vmatpush1.bf16.msra.mxu0 %v1211
        %1334 = vmatprep.subr.bf16.mxu0 0
        %1335 = vmatpush1.bf16.msra.mxu0 %v1210
        %1336 = vmatprep.subr.bf16.mxu0 0
        %1337 = vmatpush1.bf16.msra.mxu0 %v1209
        %1338 = vmatprep.subr.bf16.mxu0 0
        %1339 = vmatpush1.bf16.msra.mxu0 %v1208
        %1340 = vmatprep.subr.bf16.mxu0 0
        %1341 = vmatpush1.bf16.msra.mxu0 %v1207
        %1342 = vmatprep.subr.bf16.mxu0 0
        %1343 = vmatpush1.bf16.msra.mxu0 %v1206
        %1344 = vmatprep.subr.bf16.mxu0 0
        %1345 = vmatpush1.bf16.msra.mxu0 %v1205
        %1346 = vmatprep.subr.bf16.mxu0 0
        %1347 = vmatpush1.bf16.msra.mxu0 %v1204
        %1348 = vmatprep.subr.bf16.mxu0 0
        %1349 = vmatpush2.bf16.msra.mxu0 %v1219
        %1350 = vmatprep.subr.bf16.mxu0 0
        %1351 = vmatpush2.bf16.msra.mxu0 %v1218
        %1352 = vmatprep.subr.bf16.mxu0 0
        %1353 = vmatpush2.bf16.msra.mxu0 %v1217
        %1354 = vmatprep.subr.bf16.mxu0 0
        %1355 = vmatpush2.bf16.msra.mxu0 %v1216
        %1356 = vmatprep.subr.bf16.mxu0 0
        %1357 = vmatpush2.bf16.msra.mxu0 %v1215
        %1358 = vmatprep.subr.bf16.mxu0 0
        %1359 = vmatpush2.bf16.msra.mxu0 %v1214
        %1360 = vmatprep.subr.bf16.mxu0 0
        %1361 = vmatpush2.bf16.msra.mxu0 %v1213
        %1362 = vmatprep.subr.bf16.mxu0 0
        %1363 = vmatpush2.bf16.msra.mxu0 %v1212
        %1364 = vmatprep.mubr.bf16.mxu0 %v821
        %1365 = vmatmul.mubr.bf16.gmra.mxu0 %v820
        %v1366 = vpop.f32.mrf.mxu0
        %v1367 = vadd.f32 0.0, %v1366
        %v1368 = vpop.f32.mrf.mxu0
        %v1369 = vpop.f32.mrf.mxu0
        %v1370 = vadd.f32 0.0, %v1369
        %v1371 = vpop.f32.mrf.mxu0
        %1372 = vmatprep.mubr.bf16.mxu0 %v829
        %1373 = vmatmul.mubr.bf16.gmra.mxu0 %v828
        %v1374 = vpop.f32.mrf.mxu0
        %v1375 = vadd.f32 0.0, %v1374
        %v1376 = vpop.f32.mrf.mxu0
        %v1377 = vpop.f32.mrf.mxu0
        %v1378 = vadd.f32 0.0, %v1377
        %v1379 = vpop.f32.mrf.mxu0
        %1380 = vmatprep.mubr.bf16.mxu0 %v837
        %1381 = vmatmul.mubr.bf16.gmra.mxu0 %v836
        %v1382 = vpop.f32.mrf.mxu0
        %v1383 = vadd.f32 0.0, %v1382
        %v1384 = vpop.f32.mrf.mxu0
        %v1385 = vpop.f32.mrf.mxu0
        %v1386 = vadd.f32 0.0, %v1385
        %v1387 = vpop.f32.mrf.mxu0
        %1388 = vmatprep.mubr.bf16.mxu0 %v845
        %1389 = vmatmul.mubr.bf16.gmra.mxu0 %v844
        %v1390 = vpop.f32.mrf.mxu0
        %v1391 = vadd.f32 0.0, %v1390
        %v1392 = vpop.f32.mrf.mxu0
        %v1393 = vpop.f32.mrf.mxu0
        %v1394 = vadd.f32 0.0, %v1393
        %v1395 = vpop.f32.mrf.mxu0
        %1396 = vmatprep.mubr.bf16.mxu0 %v853
        %1397 = vmatmul.mubr.bf16.gmra.mxu0 %v852
        %v1398 = vpop.f32.mrf.mxu0
        %v1399 = vadd.f32 0.0, %v1398
        %v1400 = vpop.f32.mrf.mxu0
        %v1401 = vpop.f32.mrf.mxu0
        %v1402 = vadd.f32 0.0, %v1401
        %v1403 = vpop.f32.mrf.mxu0
        %1404 = vmatprep.mubr.bf16.mxu0 %v861
        %1405 = vmatmul.mubr.bf16.gmra.mxu0 %v860
        %v1406 = vpop.f32.mrf.mxu0
        %v1407 = vadd.f32 0.0, %v1406
        %v1408 = vpop.f32.mrf.mxu0
        %v1409 = vpop.f32.mrf.mxu0
        %v1410 = vadd.f32 0.0, %v1409
        %v1411 = vpop.f32.mrf.mxu0
        %1412 = vmatprep.mubr.bf16.mxu0 %v869
        %1413 = vmatmul.mubr.bf16.gmra.mxu0 %v868
        %v1414 = vpop.f32.mrf.mxu0
        %v1415 = vadd.f32 0.0, %v1414
        %v1416 = vpop.f32.mrf.mxu0
        %v1417 = vpop.f32.mrf.mxu0
        %v1418 = vadd.f32 0.0, %v1417
        %v1419 = vpop.f32.mrf.mxu0
        %1420 = vmatprep.mubr.bf16.mxu0 %v877
        %1421 = vmatmul.mubr.bf16.gmra.mxu0 %v876
        %v1422 = vpop.f32.mrf.mxu0
        %v1423 = vadd.f32 0.0, %v1422
        %v1424 = vpop.f32.mrf.mxu0
        %v1425 = vpop.f32.mrf.mxu0
        %v1426 = vadd.f32 0.0, %v1425
        %v1427 = vpop.f32.mrf.mxu0
        %1428 = vdwg.mxu0
        %1429 = vmatprep.subr.bf16.mxu0 0
        %1430 = vmatpush1.bf16.msra.mxu0 %v1227
        %1431 = vmatprep.subr.bf16.mxu0 0
        %1432 = vmatpush1.bf16.msra.mxu0 %v1226
        %1433 = vmatprep.subr.bf16.mxu0 0
        %1434 = vmatpush1.bf16.msra.mxu0 %v1225
        %1435 = vmatprep.subr.bf16.mxu0 0
        %1436 = vmatpush1.bf16.msra.mxu0 %v1224
        %1437 = vmatprep.subr.bf16.mxu0 0
        %1438 = vmatpush1.bf16.msra.mxu0 %v1223
        %1439 = vmatprep.subr.bf16.mxu0 0
        %1440 = vmatpush1.bf16.msra.mxu0 %v1222
        %1441 = vmatprep.subr.bf16.mxu0 0
        %1442 = vmatpush1.bf16.msra.mxu0 %v1221
        %1443 = vmatprep.subr.bf16.mxu0 0
        %1444 = vmatpush1.bf16.msra.mxu0 %v1220
        %1445 = vmatprep.subr.bf16.mxu0 0
        %1446 = vmatpush2.bf16.msra.mxu0 %v1235
        %1447 = vmatprep.subr.bf16.mxu0 0
        %1448 = vmatpush2.bf16.msra.mxu0 %v1234
        %1449 = vmatprep.subr.bf16.mxu0 0
        %1450 = vmatpush2.bf16.msra.mxu0 %v1233
        %1451 = vmatprep.subr.bf16.mxu0 0
        %1452 = vmatpush2.bf16.msra.mxu0 %v1232
        %1453 = vmatprep.subr.bf16.mxu0 0
        %1454 = vmatpush2.bf16.msra.mxu0 %v1231
        %1455 = vmatprep.subr.bf16.mxu0 0
        %1456 = vmatpush2.bf16.msra.mxu0 %v1230
        %1457 = vmatprep.subr.bf16.mxu0 0
        %1458 = vmatpush2.bf16.msra.mxu0 %v1229
        %1459 = vmatprep.subr.bf16.mxu0 0
        %1460 = vmatpush2.bf16.msra.mxu0 %v1228
        %1461 = vmatprep.mubr.bf16.mxu0 %v823
        %1462 = vmatmul.mubr.bf16.gmra.mxu0 %v822
        %v1463 = vpop.f32.mrf.mxu0
        %v1464 = vadd.f32 %v1367, %v1463
        %v1465 = vpop.f32.mrf.mxu0
        %v1466 = vpop.f32.mrf.mxu0
        %v1467 = vadd.f32 %v1370, %v1466
        %v1468 = vpop.f32.mrf.mxu0
        %1469 = vmatprep.mubr.bf16.mxu0 %v831
        %1470 = vmatmul.mubr.bf16.gmra.mxu0 %v830
        %v1471 = vpop.f32.mrf.mxu0
        %v1472 = vadd.f32 %v1375, %v1471
        %v1473 = vpop.f32.mrf.mxu0
        %v1474 = vpop.f32.mrf.mxu0
        %v1475 = vadd.f32 %v1378, %v1474
        %v1476 = vpop.f32.mrf.mxu0
        %1477 = vmatprep.mubr.bf16.mxu0 %v839
        %1478 = vmatmul.mubr.bf16.gmra.mxu0 %v838
        %v1479 = vpop.f32.mrf.mxu0
        %v1480 = vadd.f32 %v1383, %v1479
        %v1481 = vpop.f32.mrf.mxu0
        %v1482 = vpop.f32.mrf.mxu0
        %v1483 = vadd.f32 %v1386, %v1482
        %v1484 = vpop.f32.mrf.mxu0
        %1485 = vmatprep.mubr.bf16.mxu0 %v847
        %1486 = vmatmul.mubr.bf16.gmra.mxu0 %v846
        %v1487 = vpop.f32.mrf.mxu0
        %v1488 = vadd.f32 %v1391, %v1487
        %v1489 = vpop.f32.mrf.mxu0
        %v1490 = vpop.f32.mrf.mxu0
        %v1491 = vadd.f32 %v1394, %v1490
        %v1492 = vpop.f32.mrf.mxu0
        %1493 = vmatprep.mubr.bf16.mxu0 %v855
        %1494 = vmatmul.mubr.bf16.gmra.mxu0 %v854
        %v1495 = vpop.f32.mrf.mxu0
        %v1496 = vadd.f32 %v1399, %v1495
        %v1497 = vpop.f32.mrf.mxu0
        %v1498 = vpop.f32.mrf.mxu0
        %v1499 = vadd.f32 %v1402, %v1498
        %v1500 = vpop.f32.mrf.mxu0
        %1501 = vmatprep.mubr.bf16.mxu0 %v863
        %1502 = vmatmul.mubr.bf16.gmra.mxu0 %v862
        %v1503 = vpop.f32.mrf.mxu0
        %v1504 = vadd.f32 %v1407, %v1503
        %v1505 = vpop.f32.mrf.mxu0
        %v1506 = vpop.f32.mrf.mxu0
        %v1507 = vadd.f32 %v1410, %v1506
        %v1508 = vpop.f32.mrf.mxu0
        %1509 = vmatprep.mubr.bf16.mxu0 %v871
        %1510 = vmatmul.mubr.bf16.gmra.mxu0 %v870
        %v1511 = vpop.f32.mrf.mxu0
        %v1512 = vadd.f32 %v1415, %v1511
        %v1513 = vpop.f32.mrf.mxu0
        %v1514 = vpop.f32.mrf.mxu0
        %v1515 = vadd.f32 %v1418, %v1514
        %v1516 = vpop.f32.mrf.mxu0
        %1517 = vmatprep.mubr.bf16.mxu0 %v879
        %1518 = vmatmul.mubr.bf16.gmra.mxu0 %v878
        %v1519 = vpop.f32.mrf.mxu0
        %v1520 = vadd.f32 %v1423, %v1519
        %v1521 = vpop.f32.mrf.mxu0
        %v1522 = vpop.f32.mrf.mxu0
        %v1523 = vadd.f32 %v1426, %v1522
        %v1524 = vpop.f32.mrf.mxu0
        %1525 = vdwg.mxu0
        %1526 = vmatprep.subr.bf16.mxu0 0
        %1527 = vmatpush1.bf16.msra.mxu0 %v1243
        %1528 = vmatprep.subr.bf16.mxu0 0
        %1529 = vmatpush1.bf16.msra.mxu0 %v1242
        %1530 = vmatprep.subr.bf16.mxu0 0
        %1531 = vmatpush1.bf16.msra.mxu0 %v1241
        %1532 = vmatprep.subr.bf16.mxu0 0
        %1533 = vmatpush1.bf16.msra.mxu0 %v1240
        %1534 = vmatprep.subr.bf16.mxu0 0
        %1535 = vmatpush1.bf16.msra.mxu0 %v1239
        %1536 = vmatprep.subr.bf16.mxu0 0
        %1537 = vmatpush1.bf16.msra.mxu0 %v1238
        %1538 = vmatprep.subr.bf16.mxu0 0
        %1539 = vmatpush1.bf16.msra.mxu0 %v1237
        %1540 = vmatprep.subr.bf16.mxu0 0
        %1541 = vmatpush1.bf16.msra.mxu0 %v1236
        %1542 = vmatprep.subr.bf16.mxu0 0
        %1543 = vmatpush2.bf16.msra.mxu0 %v1251
        %1544 = vmatprep.subr.bf16.mxu0 0
        %1545 = vmatpush2.bf16.msra.mxu0 %v1250
        %1546 = vmatprep.subr.bf16.mxu0 0
        %1547 = vmatpush2.bf16.msra.mxu0 %v1249
        %1548 = vmatprep.subr.bf16.mxu0 0
        %1549 = vmatpush2.bf16.msra.mxu0 %v1248
        %1550 = vmatprep.subr.bf16.mxu0 0
        %1551 = vmatpush2.bf16.msra.mxu0 %v1247
        %1552 = vmatprep.subr.bf16.mxu0 0
        %1553 = vmatpush2.bf16.msra.mxu0 %v1246
        %1554 = vmatprep.subr.bf16.mxu0 0
        %1555 = vmatpush2.bf16.msra.mxu0 %v1245
        %1556 = vmatprep.subr.bf16.mxu0 0
        %1557 = vmatpush2.bf16.msra.mxu0 %v1244
        %1558 = vmatprep.mubr.bf16.mxu0 %v825
        %1559 = vmatmul.mubr.bf16.gmra.mxu0 %v824
        %v1560 = vpop.f32.mrf.mxu0
        %v1561 = vadd.f32 %v1464, %v1560
        %v1562 = vpop.f32.mrf.mxu0
        %v1563 = vpop.f32.mrf.mxu0
        %v1564 = vadd.f32 %v1467, %v1563
        %v1565 = vpop.f32.mrf.mxu0
        %1566 = vmatprep.mubr.bf16.mxu0 %v833
        %1567 = vmatmul.mubr.bf16.gmra.mxu0 %v832
        %v1568 = vpop.f32.mrf.mxu0
        %v1569 = vadd.f32 %v1472, %v1568
        %v1570 = vpop.f32.mrf.mxu0
        %v1571 = vpop.f32.mrf.mxu0
        %v1572 = vadd.f32 %v1475, %v1571
        %v1573 = vpop.f32.mrf.mxu0
        %1574 = vmatprep.mubr.bf16.mxu0 %v841
        %1575 = vmatmul.mubr.bf16.gmra.mxu0 %v840
        %v1576 = vpop.f32.mrf.mxu0
        %v1577 = vadd.f32 %v1480, %v1576
        %v1578 = vpop.f32.mrf.mxu0
        %v1579 = vpop.f32.mrf.mxu0
        %v1580 = vadd.f32 %v1483, %v1579
        %v1581 = vpop.f32.mrf.mxu0
        %1582 = vmatprep.mubr.bf16.mxu0 %v849
        %1583 = vmatmul.mubr.bf16.gmra.mxu0 %v848
        %v1584 = vpop.f32.mrf.mxu0
        %v1585 = vadd.f32 %v1488, %v1584
        %v1586 = vpop.f32.mrf.mxu0
        %v1587 = vpop.f32.mrf.mxu0
        %v1588 = vadd.f32 %v1491, %v1587
        %v1589 = vpop.f32.mrf.mxu0
        %1590 = vmatprep.mubr.bf16.mxu0 %v857
        %1591 = vmatmul.mubr.bf16.gmra.mxu0 %v856
        %v1592 = vpop.f32.mrf.mxu0
        %v1593 = vadd.f32 %v1496, %v1592
        %v1594 = vpop.f32.mrf.mxu0
        %v1595 = vpop.f32.mrf.mxu0
        %v1596 = vadd.f32 %v1499, %v1595
        %v1597 = vpop.f32.mrf.mxu0
        %1598 = vmatprep.mubr.bf16.mxu0 %v865
        %1599 = vmatmul.mubr.bf16.gmra.mxu0 %v864
        %v1600 = vpop.f32.mrf.mxu0
        %v1601 = vadd.f32 %v1504, %v1600
        %v1602 = vpop.f32.mrf.mxu0
        %v1603 = vpop.f32.mrf.mxu0
        %v1604 = vadd.f32 %v1507, %v1603
        %v1605 = vpop.f32.mrf.mxu0
        %1606 = vmatprep.mubr.bf16.mxu0 %v873
        %1607 = vmatmul.mubr.bf16.gmra.mxu0 %v872
        %v1608 = vpop.f32.mrf.mxu0
        %v1609 = vadd.f32 %v1512, %v1608
        %v1610 = vpop.f32.mrf.mxu0
        %v1611 = vpop.f32.mrf.mxu0
        %v1612 = vadd.f32 %v1515, %v1611
        %v1613 = vpop.f32.mrf.mxu0
        %1614 = vmatprep.mubr.bf16.mxu0 %v881
        %1615 = vmatmul.mubr.bf16.gmra.mxu0 %v880
        %v1616 = vpop.f32.mrf.mxu0
        %v1617 = vadd.f32 %v1520, %v1616
        %v1618 = vpop.f32.mrf.mxu0
        %v1619 = vpop.f32.mrf.mxu0
        %v1620 = vadd.f32 %v1523, %v1619
        %v1621 = vpop.f32.mrf.mxu0
        %1622 = vdwg.mxu0
        %1623 = vmatprep.subr.bf16.mxu0 0
        %1624 = vmatpush1.bf16.msra.mxu0 %v1259
        %1625 = vmatprep.subr.bf16.mxu0 0
        %1626 = vmatpush1.bf16.msra.mxu0 %v1258
        %1627 = vmatprep.subr.bf16.mxu0 0
        %1628 = vmatpush1.bf16.msra.mxu0 %v1257
        %1629 = vmatprep.subr.bf16.mxu0 0
        %1630 = vmatpush1.bf16.msra.mxu0 %v1256
        %1631 = vmatprep.subr.bf16.mxu0 0
        %1632 = vmatpush1.bf16.msra.mxu0 %v1255
        %1633 = vmatprep.subr.bf16.mxu0 0
        %1634 = vmatpush1.bf16.msra.mxu0 %v1254
        %1635 = vmatprep.subr.bf16.mxu0 0
        %1636 = vmatpush1.bf16.msra.mxu0 %v1253
        %1637 = vmatprep.subr.bf16.mxu0 0
        %1638 = vmatpush1.bf16.msra.mxu0 %v1252
        %1639 = vmatprep.subr.bf16.mxu0 0
        %1640 = vmatpush2.bf16.msra.mxu0 %v1267
        %1641 = vmatprep.subr.bf16.mxu0 0
        %1642 = vmatpush2.bf16.msra.mxu0 %v1266
        %1643 = vmatprep.subr.bf16.mxu0 0
        %1644 = vmatpush2.bf16.msra.mxu0 %v1265
        %1645 = vmatprep.subr.bf16.mxu0 0
        %1646 = vmatpush2.bf16.msra.mxu0 %v1264
        %1647 = vmatprep.subr.bf16.mxu0 0
        %1648 = vmatpush2.bf16.msra.mxu0 %v1263
        %1649 = vmatprep.subr.bf16.mxu0 0
        %1650 = vmatpush2.bf16.msra.mxu0 %v1262
        %1651 = vmatprep.subr.bf16.mxu0 0
        %1652 = vmatpush2.bf16.msra.mxu0 %v1261
        %1653 = vmatprep.subr.bf16.mxu0 0
        %1654 = vmatpush2.bf16.msra.mxu0 %v1260
        %1655 = vmatprep.mubr.bf16.mxu0 %v827
        %1656 = vmatmul.mubr.bf16.gmra.mxu0 %v826
        %v1657 = vpop.f32.mrf.mxu0
        %v1658 = vadd.f32 %v1561, %v1657
        %v1659 = vpop.f32.mrf.mxu0
        %v1660 = vpop.f32.mrf.mxu0
        %v1661 = vadd.f32 %v1564, %v1660
        %v1662 = vpop.f32.mrf.mxu0
        %1663 = vmatprep.mubr.bf16.mxu0 %v835
        %1664 = vmatmul.mubr.bf16.gmra.mxu0 %v834
        %v1665 = vpop.f32.mrf.mxu0
        %v1666 = vadd.f32 %v1569, %v1665
        %v1667 = vpop.f32.mrf.mxu0
        %v1668 = vpop.f32.mrf.mxu0
        %v1669 = vadd.f32 %v1572, %v1668
        %v1670 = vpop.f32.mrf.mxu0
        %1671 = vmatprep.mubr.bf16.mxu0 %v843
        %1672 = vmatmul.mubr.bf16.gmra.mxu0 %v842
        %v1673 = vpop.f32.mrf.mxu0
        %v1674 = vadd.f32 %v1577, %v1673
        %v1675 = vpop.f32.mrf.mxu0
        %v1676 = vpop.f32.mrf.mxu0
        %v1677 = vadd.f32 %v1580, %v1676
        %v1678 = vpop.f32.mrf.mxu0
        %1679 = vmatprep.mubr.bf16.mxu0 %v851
        %1680 = vmatmul.mubr.bf16.gmra.mxu0 %v850
        %v1681 = vpop.f32.mrf.mxu0
        %v1682 = vadd.f32 %v1585, %v1681
        %v1683 = vpop.f32.mrf.mxu0
        %v1684 = vpop.f32.mrf.mxu0
        %v1685 = vadd.f32 %v1588, %v1684
        %v1686 = vpop.f32.mrf.mxu0
        %1687 = vmatprep.mubr.bf16.mxu0 %v859
        %1688 = vmatmul.mubr.bf16.gmra.mxu0 %v858
        %v1689 = vpop.f32.mrf.mxu0
        %v1690 = vadd.f32 %v1593, %v1689
        %v1691 = vpop.f32.mrf.mxu0
        %v1692 = vpop.f32.mrf.mxu0
        %v1693 = vadd.f32 %v1596, %v1692
        %v1694 = vpop.f32.mrf.mxu0
        %1695 = vmatprep.mubr.bf16.mxu0 %v867
        %1696 = vmatmul.mubr.bf16.gmra.mxu0 %v866
        %v1697 = vpop.f32.mrf.mxu0
        %v1698 = vadd.f32 %v1601, %v1697
        %v1699 = vpop.f32.mrf.mxu0
        %v1700 = vpop.f32.mrf.mxu0
        %v1701 = vadd.f32 %v1604, %v1700
        %v1702 = vpop.f32.mrf.mxu0
        %1703 = vmatprep.mubr.bf16.mxu0 %v875
        %1704 = vmatmul.mubr.bf16.gmra.mxu0 %v874
        %v1705 = vpop.f32.mrf.mxu0
        %v1706 = vadd.f32 %v1609, %v1705
        %v1707 = vpop.f32.mrf.mxu0
        %v1708 = vpop.f32.mrf.mxu0
        %v1709 = vadd.f32 %v1612, %v1708
        %v1710 = vpop.f32.mrf.mxu0
        %1711 = vmatprep.mubr.bf16.mxu0 %v883
        %1712 = vmatmul.mubr.bf16.gmra.mxu0 %v882
        %v1713 = vpop.f32.mrf.mxu0
        %v1714 = vadd.f32 %v1617, %v1713
        %v1715 = vpop.f32.mrf.mxu0
        %v1716 = vpop.f32.mrf.mxu0
        %v1717 = vadd.f32 %v1620, %v1716
        %v1718 = vpop.f32.mrf.mxu0
        %1719 = vdwg.mxu0
        %v1720 = vadd.f32 %v420, %v1658
        %v1721 = vadd.f32 %v421, %v1661
        %v1722 = vadd.f32 %v422, %v1666
        %v1723 = vadd.f32 %v423, %v1669
        %v1724 = vadd.f32 %v424, %v1674
        %v1725 = vadd.f32 %v425, %v1677
        %v1726 = vadd.f32 %v426, %v1682
        %v1727 = vadd.f32 %v427, %v1685
        %v1728 = vadd.f32 %v428, %v1690
        %v1729 = vadd.f32 %v429, %v1693
        %v1730 = vadd.f32 %v430, %v1698
        %v1731 = vadd.f32 %v431, %v1701
        %v1732 = vadd.f32 %v432, %v1706
        %v1733 = vadd.f32 %v433, %v1709
        %v1734 = vadd.f32 %v434, %v1714
        %v1735 = vadd.f32 %v435, %v1717
        %1736 = vst [vmem:[#allocation2] sm:$0xff] %v1720
        %1737 = vst [vmem:[#allocation2 + $0x8] sm:$0xff] %v1721
        %1738 = vst [vmem:[#allocation2 + $0x10] sm:$0xff] %v1722
        %1739 = vst [vmem:[#allocation2 + $0x18] sm:$0xff] %v1723
        %1740 = vst [vmem:[#allocation2 + $0x20] sm:$0xff] %v1724
        %1741 = vst [vmem:[#allocation2 + $0x28] sm:$0xff] %v1725
        %1742 = vst [vmem:[#allocation2 + $0x30] sm:$0xff] %v1726
        %1743 = vst [vmem:[#allocation2 + $0x38] sm:$0xff] %v1727
        %1744 = vst [vmem:[#allocation2 + $0x40] sm:$0xff] %v1728
        %1745 = vst [vmem:[#allocation2 + $0x48] sm:$0xff] %v1729
        %1746 = vst [vmem:[#allocation2 + $0x50] sm:$0xff] %v1730
        %1747 = vst [vmem:[#allocation2 + $0x58] sm:$0xff] %v1731
        %1748 = vst [vmem:[#allocation2 + $0x60] sm:$0xff] %v1732
        %1749 = vst [vmem:[#allocation2 + $0x68] sm:$0xff] %v1733
        %1750 = vst [vmem:[#allocation2 + $0x70] sm:$0xff] %v1734
        %1751 = vst [vmem:[#allocation2 + $0x78] sm:$0xff] %v1735
        %p1752 = scmp.eq.s32.totalorder %s21, 1
        // Predicated region
        $region60: #{discriminator_forward.12} parent=50 // pred_check
          %p1753 = pneg %p1752
        $region61: #{discriminator_forward.12} parent=50 // pred_check_branch
          %1755 = sbr.rel (%p1753) target = $region63
        $region62: #{discriminator_forward.12} parent=50 // pred_region
          %v1756 = vld [vmem:[#allocation2] sm:$0xff]
          %v1757 = vld [vmem:[#allocation2 + $0x8] sm:$0xff]
          %v1758 = vld [vmem:[#allocation2 + $0x10] sm:$0xff]
          %v1759 = vld [vmem:[#allocation2 + $0x18] sm:$0xff]
          %v1760 = vld [vmem:[#allocation2 + $0x20] sm:$0xff]
          %v1761 = vld [vmem:[#allocation2 + $0x28] sm:$0xff]
          %v1762 = vld [vmem:[#allocation2 + $0x30] sm:$0xff]
          %v1763 = vld [vmem:[#allocation2 + $0x38] sm:$0xff]
          %v1764 = vld [vmem:[#allocation2 + $0x40] sm:$0xff]
          %v1765 = vld [vmem:[#allocation2 + $0x48] sm:$0xff]
          %v1766 = vld [vmem:[#allocation2 + $0x50] sm:$0xff]
          %v1767 = vld [vmem:[#allocation2 + $0x58] sm:$0xff]
          %v1768 = vld [vmem:[#allocation2 + $0x60] sm:$0xff]
          %v1769 = vld [vmem:[#allocation2 + $0x68] sm:$0xff]
          %v1770 = vld [vmem:[#allocation2 + $0x70] sm:$0xff]
          %v1771 = vld [vmem:[#allocation2 + $0x78] sm:$0xff]
          %1772 = vst [vmem:[%s397] sm:$0xff] %v1756
          %1773 = vst [vmem:[%s397 + $0x8] sm:$0xff] %v1757
          %1774 = vst [vmem:[%s397 + $0x10] sm:$0xff] %v1758
          %1775 = vst [vmem:[%s397 + $0x18] sm:$0xff] %v1759
          %1776 = vst [vmem:[%s397 + $0x20] sm:$0xff] %v1760
          %1777 = vst [vmem:[%s397 + $0x28] sm:$0xff] %v1761
          %1778 = vst [vmem:[%s397 + $0x30] sm:$0xff] %v1762
          %1779 = vst [vmem:[%s397 + $0x38] sm:$0xff] %v1763
          %1780 = vst [vmem:[%s397 + $0x40] sm:$0xff] %v1764
          %1781 = vst [vmem:[%s397 + $0x48] sm:$0xff] %v1765
          %1782 = vst [vmem:[%s397 + $0x50] sm:$0xff] %v1766
          %1783 = vst [vmem:[%s397 + $0x58] sm:$0xff] %v1767
          %1784 = vst [vmem:[%s397 + $0x60] sm:$0xff] %v1768
          %1785 = vst [vmem:[%s397 + $0x68] sm:$0xff] %v1769
          %1786 = vst [vmem:[%s397 + $0x70] sm:$0xff] %v1770
          %1787 = vst [vmem:[%s397 + $0x78] sm:$0xff] %v1771
        $region63: #{discriminator_forward.12} parent=50 // pred_fallthru
          _
        %s1788 = smul.u32 16, %s19
        %p1789 = scmp.lt.s32.totalorder %s1788, 15
        %s1790 = scalar_select %p1789, %s1788, 15
        %p1791 = scmp.lt.s32.totalorder %s20, 0
        %s1792 = scalar_select %p1791, %s20, 0
        %s1793 = sadd.s32 %s1792, %s1790
        %s1794 = smul.addr %s1793, 8
        %s1795 = scalar_lea.vmem %s3, %s1794
        // Predicated region
        $region64: #{discriminator_forward.12} parent=50 // pred_check
          %p1796 = pneg %p135
        $region65: #{discriminator_forward.12} parent=50 // pred_check_branch
          %1798 = sbr.rel (%p1796) target = $region67
        $region66: #{discriminator_forward.12} parent=50 // pred_region
          %s1799 = smul.u32 16, %s19
        $region67: #{discriminator_forward.12} parent=50 // pred_fallthru
          _
        // Predicated region
        $region68: #{discriminator_forward.12} parent=50 // pred_check
          %p1800 = pneg %p135
        $region69: #{discriminator_forward.12} parent=50 // pred_check_branch
          %1802 = sbr.rel (%p1800) target = $region71
        $region70: #{discriminator_forward.12} parent=50 // pred_region
          %s1803 = smul.u32 16, %s19
          %p1804 = scmp.lt.s32.totalorder %s1803, 15
          %s1805 = scalar_select %p1804, %s1803, 15
          %p1806 = scmp.lt.s32.totalorder %s20, 0
          %s1807 = scalar_select %p1806, %s20, 0
          %s1808 = sadd.s32 %s1807, %s1805
          %s1809 = smul.addr %s1808, 8
          %s1810 = scalar_lea.vmem %s3, %s1809
        $region71: #{discriminator_forward.12} parent=50 // pred_fallthru
          _
      $region51: #{discriminator_forward.12} parent=5 // pred_fallthru
        _
      %p1811 = scmp.le.s32.totalorder 2, %s9
      // Predicated region
      $region72: #{discriminator_forward.12} parent=5 // pred_check
        %p1812 = pneg %p1811
      $region73: #{discriminator_forward.12} parent=5 // pred_check_branch
        %1814 = sbr.rel (%p1812) target = $region75
      $region74: #{discriminator_forward.12} parent=5 // pred_region
        %s1815 = ssub.s32 %s9, 2
      $region75: #{discriminator_forward.12} parent=5 // pred_fallthru
        _
    $region6: #{discriminator_forward.12} parent=1 // loop_footer
      %s13 = sadd.s32 1, %s9
    $region7: #{discriminator_forward.12} parent=1 // loop_footer_branch
      %8 = sbr.rel target = $region3
    $region8: #{discriminator_forward.12} parent=1 // loop_exit
      _

// kernel: discriminator_forward.16
$region0: #{discriminator_forward.16}
  #allocation0 [shape = 'u32[]', space=smem, size = 0x4, offset = 0x4, fixed_abs, tag = 'smem constant byte address 0x4 - core index']
  #allocation1 [shape = 'u32[144,128]{1,0:T(1,128)}', space=vmem, size = 0x12000, scoped, tag = 'internal scratch']
  %s0 = inlined_call_operand.vmem [shape: f32[32,128], index: 0, kind: input, shape index: {}]
  %s1 = inlined_call_operand.vmem [shape: f32[1,128], index: 1, kind: output, shape index: {0}]
  %s2 = inlined_call_operand.vmem [shape: f32[1,128], index: 2, kind: output, shape index: {1}]
  %3 = xla_tuple %s1, %s2
  %s4 = sld [smem:[#allocation0]]
  $region26: #{discriminator_forward.16} parent=0
    _
  %s6 = ssub.s32 1, %s4
  %s7 = scalar_select 0, %s6, %s4
  // Predicated region
  $region2: #{discriminator_forward.16} parent=0 // pred_check
    _
  $region3: #{discriminator_forward.16} parent=0 // pred_check_branch
    %9 = sbr.rel (0) target = $region5
  $region4: #{discriminator_forward.16} parent=0 // pred_region
    _
  $region5: #{discriminator_forward.16} parent=0 // pred_fallthru
    _
  %p10 = scmp.eq.s32.totalorder 0, 0
  // Predicated region
  $region6: #{discriminator_forward.16} parent=0 // pred_check
    %p11 = pneg %p10
  $region7: #{discriminator_forward.16} parent=0 // pred_check_branch
    %13 = sbr.rel (%p11) target = $region9
  $region8: #{discriminator_forward.16} parent=0 // pred_region
    %14 = vst [vmem:[%s1] sm:$0x1] 0.0
    %15 = vst [vmem:[%s2] sm:$0x1] 0.0
  $region9: #{discriminator_forward.16} parent=0 // pred_fallthru
    _
  %v16 = vld [vmem:[%s0] sm:$0xff]
  %v17 = vld [vmem:[%s0 + $0x8] sm:$0xff]
  %v18 = vld [vmem:[%s0 + $0x10] sm:$0xff]
  %v19 = vld [vmem:[%s0 + $0x18] sm:$0xff]
  %v20 = vld [vmem:[%s1] sm:$0x1]
  %v21 = vadd.f32 %v16, %v17
  %v22 = vadd.f32 %v21, %v18
  %v23 = vadd.f32 %v22, %v19
  %v24 = vrot.slane %v23, 4
  %v25 = vadd.f32 %v23, %v24
  %v26 = vrot.slane %v25, 2
  %v27 = vadd.f32 %v25, %v26
  %v28 = vrot.slane %v27, 1
  %v29 = vadd.f32 %v27, %v28
  %v30 = vadd.f32 %v20, %v29
  %31 = vst [vmem:[%s1] sm:$0x1] %v30
  %v32 = vld [vmem:[%s2] sm:$0x1]
  %v33 = vmul.f32 %v16, %v16
  %v34 = vmul.f32 %v17, %v17
  %v35 = vmul.f32 %v18, %v18
  %v36 = vmul.f32 %v19, %v19
  %v37 = vadd.f32 %v33, %v34
  %v38 = vadd.f32 %v37, %v35
  %v39 = vadd.f32 %v38, %v36
  %v40 = vrot.slane %v39, 4
  %v41 = vadd.f32 %v39, %v40
  %v42 = vrot.slane %v41, 2
  %v43 = vadd.f32 %v41, %v42
  %v44 = vrot.slane %v43, 1
  %v45 = vadd.f32 %v43, %v44
  %v46 = vadd.f32 %v32, %v45
  %47 = vst [vmem:[%s2] sm:$0x1] %v46
  // Predicated region
  $region10: #{discriminator_forward.16} parent=0 // pred_check
    _
  $region11: #{discriminator_forward.16} parent=0 // pred_check_branch
    %49 = sbr.rel (0) target = $region13
  $region12: #{discriminator_forward.16} parent=0 // pred_region
    _
  $region13: #{discriminator_forward.16} parent=0 // pred_fallthru
    _
  // Predicated region
  $region14: #{discriminator_forward.16} parent=0 // pred_check
    _
  $region15: #{discriminator_forward.16} parent=0 // pred_check_branch
    %51 = sbr.rel (0) target = $region17
  $region16: #{discriminator_forward.16} parent=0 // pred_region
    _
  $region17: #{discriminator_forward.16} parent=0 // pred_fallthru
    _
  // Predicated region
  $region18: #{discriminator_forward.16} parent=0 // pred_check
    _
  $region19: #{discriminator_forward.16} parent=0 // pred_check_branch
    %53 = sbr.rel (0) target = $region21
  $region20: #{discriminator_forward.16} parent=0 // pred_region
    _
  $region21: #{discriminator_forward.16} parent=0 // pred_fallthru
    _
  // Predicated region
  $region22: #{discriminator_forward.16} parent=0 // pred_check
    _
  $region23: #{discriminator_forward.16} parent=0 // pred_check_branch
    %55 = sbr.rel (0) target = $region25
  $region24: #{discriminator_forward.16} parent=0 // pred_region
    _
  $region25: #{discriminator_forward.16} parent=0 // pred_fallthru
    _

// kernel: discriminator_forward.17
$region0: #{discriminator_forward.17}
  #allocation0 [shape = 'u32[]', space=smem, size = 0x4, offset = 0x4, fixed_abs, tag = 'smem constant byte address 0x4 - core index']
  #allocation1 [shape = 'u32[144,128]{1,0:T(1,128)}', space=vmem, size = 0x12000, scoped, tag = 'internal scratch']
  %s0 = inlined_call_operand.vmem [shape: f32[32,128], index: 0, kind: input, shape index: {}]
  %s1 = inlined_call_operand.vmem [shape: f32[1,128], index: 1, kind: input, shape index: {}]
  %s2 = inlined_call_operand.vmem [shape: f32[1,128], index: 2, kind: input, shape index: {}]
  %s3 = inlined_call_operand.vmem [shape: bf16[32,128], index: 3, kind: output, shape index: {}]
  %s4 = sld [smem:[#allocation0]]
  $region22: #{discriminator_forward.17} parent=0
    _
  %s6 = ssub.s32 1, %s4
  %s7 = scalar_select 0, %s6, %s4
  // Predicated region
  $region2: #{discriminator_forward.17} parent=0 // pred_check
    _
  $region3: #{discriminator_forward.17} parent=0 // pred_check_branch
    %9 = sbr.rel (0) target = $region5
  $region4: #{discriminator_forward.17} parent=0 // pred_region
    _
  $region5: #{discriminator_forward.17} parent=0 // pred_fallthru
    _
  // Predicated region
  $region6: #{discriminator_forward.17} parent=0 // pred_check
    _
  $region7: #{discriminator_forward.17} parent=0 // pred_check_branch
    %11 = sbr.rel (0) target = $region9
  $region8: #{discriminator_forward.17} parent=0 // pred_region
    _
  $region9: #{discriminator_forward.17} parent=0 // pred_fallthru
    _
  // Predicated region
  $region10: #{discriminator_forward.17} parent=0 // pred_check
    _
  $region11: #{discriminator_forward.17} parent=0 // pred_check_branch
    %13 = sbr.rel (0) target = $region13
  $region12: #{discriminator_forward.17} parent=0 // pred_region
    _
  $region13: #{discriminator_forward.17} parent=0 // pred_fallthru
    _
  %v14 = vld [vmem:[%s0] sm:$0xff]
  %v15 = vld [vmem:[%s0 + $0x8] sm:$0xff]
  %v16 = vld [vmem:[%s0 + $0x10] sm:$0xff]
  %v17 = vld [vmem:[%s0 + $0x18] sm:$0xff]
  %v18 = vld [vmem:[%s1] sm:$0x1]
  %v20 = vlaneseq
  %v21 = vshrl.u32 %v20, 7
  %v22 = vsub.s32 0, %v21
  %v23 = vrot.slane %v18, %v22
  %v25 = vmul.f32 %v14, %v23
  %v26 = vmul.f32 %v15, %v23
  %v27 = vmul.f32 %v16, %v23
  %v28 = vmul.f32 %v17, %v23
  %v29 = vld [vmem:[%s2] sm:$0x1]
  %v31 = vlaneseq
  %v32 = vshrl.u32 %v31, 7
  %v33 = vsub.s32 0, %v32
  %v34 = vrot.slane %v29, %v33
  %v36 = vadd.f32 %v25, %v34
  %v37 = vadd.f32 %v26, %v34
  %v38 = vadd.f32 %v27, %v34
  %v39 = vadd.f32 %v28, %v34
  %vm40 = vcmp.ge.f32.partialorder %v36, 0.0
  %vm41 = vcmp.ge.f32.partialorder %v37, 0.0
  %vm42 = vcmp.ge.f32.partialorder %v38, 0.0
  %vm43 = vcmp.ge.f32.partialorder %v39, 0.0
  %v44 = vmul.f32 %v36, 0.2
  %v45 = vmul.f32 %v37, 0.2
  %v46 = vmul.f32 %v38, 0.2
  %v47 = vmul.f32 %v39, 0.2
  %v48 = vsel %vm40, %v36, %v44
  %v49 = vsel %vm41, %v37, %v45
  %v50 = vsel %vm42, %v38, %v46
  %v51 = vsel %vm43, %v39, %v47
  %v52 = vpack.c.bf16 %v49, %v48
  %v53 = vpack.c.bf16 %v51, %v50
  %v56 = vunpack.c.l.b16 %v52
  %v57 = vunpack.c.h.b16 %v52
  %v58 = vunpack.c.l.b16 %v53
  %v59 = vunpack.c.h.b16 %v53
  %v60 = vpack.c.b16 %v56, %v56
  %v61 = vpack.c.b16 %v57, %v57
  %v62 = vpack.c.b16 %v58, %v58
  %v63 = vpack.c.b16 %v59, %v59
  %68 = vst [vmem:[%s3] sm:$0xf] %v60
  %69 = vst [vmem:[%s3 + $0x4] sm:$0xf] %v61
  %70 = vst [vmem:[%s3 + $0x8] sm:$0xf] %v62
  %71 = vst [vmem:[%s3 + $0xc] sm:$0xf] %v63
  // Predicated region
  $region14: #{discriminator_forward.17} parent=0 // pred_check
    _
  $region15: #{discriminator_forward.17} parent=0 // pred_check_branch
    %73 = sbr.rel (0) target = $region17
  $region16: #{discriminator_forward.17} parent=0 // pred_region
    _
  $region17: #{discriminator_forward.17} parent=0 // pred_fallthru
    _
  // Predicated region
  $region18: #{discriminator_forward.17} parent=0 // pred_check
    _
  $region19: #{discriminator_forward.17} parent=0 // pred_check_branch
    %75 = sbr.rel (0) target = $region21
  $region20: #{discriminator_forward.17} parent=0 // pred_region
    _
  $region21: #{discriminator_forward.17} parent=0 // pred_fallthru
    _

// kernel: discriminator_forward.15
$region0: #{discriminator_forward.15}
  #allocation0 [shape = 'u32[]', space=smem, size = 0x4, offset = 0x4, fixed_abs, tag = 'smem constant byte address 0x4 - core index']
  #allocation1 [shape = 'u32[144,128]{1,0:T(1,128)}', space=vmem, size = 0x12000, scoped, tag = 'internal scratch']
  #allocation2 [shape = 'f32[32,128]{1,0:T(8,128)}', space=vmem, size = 0x4000, scoped, tag = 'scratch operand']
  %s0 = inlined_call_operand.vmem [shape: bf16[32,2048], index: 0, kind: input, shape index: {}]
  %s1 = inlined_call_operand.vmem [shape: bf16[2048,128], index: 1, kind: input, shape index: {}]
  %s2 = inlined_call_operand.vmem [shape: f32[1,128], index: 2, kind: input, shape index: {}]
  %s3 = inlined_call_operand.vmem [shape: f32[32,128], index: 3, kind: output, shape index: {}]
  %s4 = sld [smem:[#allocation0]]
  $region76: #{discriminator_forward.15} parent=0
    _
  %s6 = ssub.s32 1, %s4
  %s7 = scalar_select 0, %s6, %s4
  $region1: #{discriminator_forward.15} parent=0
    #allocation3 [shape = 'u8[131072]{0}', space=vmem, size = 0x20000, scoped, tag = 'input window, operand 0']
    loop: start=0, step=1, limit=4
    $region2: #{discriminator_forward.15} parent=1 // loop_pre_header
      _
    $region3: #{discriminator_forward.15} parent=1 // loop_header
      %s9 = sphi 0, %s13
      %p10 = scmp.ge.s32.totalorder %s9, 4
      %s16 = sphi 0, %s35
      %s17 = sphi 0, %s31
      %s18 = sphi 0, %s27
      %s19 = sphi 0, %s16
      %s20 = sphi 0, %s17
      %s21 = sphi 0, %s18
      %s22 = sphi 0, %s19
      %s23 = sphi 0, %s20
      %s24 = sphi 0, %s21
      %s40 = sphi 0, %s42
      %s43 = sphi 0, %s40
      %s44 = sphi 0, %s43
      %s60 = sphi 0, %s44
      %s68 = sphi 0, %s70
      %s71 = sphi 0, %s68
      %s72 = sphi 0, %s71
      %s88 = sphi 0, %s72
      %s94 = sphi 0, %s96
      %s97 = sphi 0, %s94
      %s98 = sphi 0, %s97
      %s114 = sphi 0, %s98
      %s122 = sphi 0, %s124
      %s125 = sphi 0, %s122
      %s126 = sphi 0, %s125
      %s142 = sphi 0, %s126
    $region4: #{discriminator_forward.15} parent=1 // loop_header_branch
      %12 = sbr.rel (%p10) target = $region8
    $region5: #{discriminator_forward.15} parent=1 // loop_body
      %s14 = ssub.s32 %s9, 1
      %s15 = ssub.s32 %s9, 2
      %s25 = sadd.s32 1, %s18
      %p26 = scmp.ge.s32.totalorder %s25, 2
      %s27 = scalar_select %p26, 0, %s25
      %s28 = sadd.s32 1, %s17
      %s29 = scalar_select %p26, %s28, %s17
      %p30 = scmp.ge.s32.totalorder %s29, 1
      %s31 = scalar_select %p30, 0, %s29
      %s32 = sadd.s32 1, %s16
      %s33 = scalar_select %p30, %s32, %s16
      %p34 = scmp.ge.s32.totalorder %s33, 1
      %s35 = scalar_select %p34, 0, %s33
      %s36 = ssub.s32 %s16, %s35
      %s37 = ssub.s32 %s18, %s27
      %s38 = sor.u32 %s36, %s37
      %p39 = scmp.eq.s32.totalorder %s38, 0
      %s41 = sadd.s32 %s40, 1
      %s42 = scalar_select %p39, %s40, %s41
      %p45 = pneg %p39
      %p46 = scmp.eq.s32.totalorder %s9, 1
      %p47 = por %p45, %p46
      %p48 = scmp.ne.s32.totalorder %s40, %s43
      %p49 = scmp.eq.s32.totalorder %s9, 0
      %p50 = por %p48, %p49
      %p51 = scmp.ne.s32.totalorder %s40, %s43
      %p52 = scmp.eq.s32.totalorder %s14, 1
      %p53 = por %p51, %p52
      %p54 = scmp.ne.s32.totalorder %s43, %s44
      %p55 = scmp.eq.s32.totalorder %s14, 0
      %p56 = por %p54, %p55
      %p57 = scmp.ne.s32.totalorder %s43, %s44
      %p58 = scmp.eq.s32.totalorder %s15, 1
      %p59 = por %p57, %p58
      %p61 = scmp.ne.s32.totalorder %s44, %s60
      %p62 = scmp.eq.s32.totalorder %s15, 0
      %p63 = por %p61, %p62
      %s64 = ssub.s32 %s18, %s27
      %s65 = ssub.s32 %s17, %s31
      %s66 = sor.u32 %s64, %s65
      %p67 = scmp.eq.s32.totalorder %s66, 0
      %s69 = sadd.s32 %s68, 1
      %s70 = scalar_select %p67, %s68, %s69
      %p73 = pneg %p67
      %p74 = scmp.eq.s32.totalorder %s9, 1
      %p75 = por %p73, %p74
      %p76 = scmp.ne.s32.totalorder %s68, %s71
      %p77 = scmp.eq.s32.totalorder %s9, 0
      %p78 = por %p76, %p77
      %p79 = scmp.ne.s32.totalorder %s68, %s71
      %p80 = scmp.eq.s32.totalorder %s14, 1
      %p81 = por %p79, %p80
      %p82 = scmp.ne.s32.totalorder %s71, %s72
      %p83 = scmp.eq.s32.totalorder %s14, 0
      %p84 = por %p82, %p83
      %p85 = scmp.ne.s32.totalorder %s71, %s72
      %p86 = scmp.eq.s32.totalorder %s15, 1
      %p87 = por %p85, %p86
      %p89 = scmp.ne.s32.totalorder %s72, %s88
      %p90 = scmp.eq.s32.totalorder %s15, 0
      %p91 = por %p89, %p90
      %s92 = ssub.s32 %s17, %s31
      %p93 = scmp.eq.s32.totalorder %s92, 0
      %s95 = sadd.s32 %s94, 1
      %s96 = scalar_select %p93, %s94, %s95
      %p99 = pneg %p93
      %p100 = scmp.eq.s32.totalorder %s9, 1
      %p101 = por %p99, %p100
      %p102 = scmp.ne.s32.totalorder %s94, %s97
      %p103 = scmp.eq.s32.totalorder %s9, 0
      %p104 = por %p102, %p103
      %p105 = scmp.ne.s32.totalorder %s94, %s97
      %p106 = scmp.eq.s32.totalorder %s14, 1
      %p107 = por %p105, %p106
      %p108 = scmp.ne.s32.totalorder %s97, %s98
      %p109 = scmp.eq.s32.totalorder %s14, 0
      %p110 = por %p108, %p109
      %p111 = scmp.ne.s32.totalorder %s97, %s98
      %p112 = scmp.eq.s32.totalorder %s15, 1
      %p113 = por %p111, %p112
      %p115 = scmp.ne.s32.totalorder %s98, %s114
      %p116 = scmp.eq.s32.totalorder %s15, 0
      %p117 = por %p115, %p116
      %s118 = ssub.s32 %s16, %s35
      %s119 = ssub.s32 %s17, %s31
      %s120 = sor.u32 %s118, %s119
      %p121 = scmp.eq.s32.totalorder %s120, 0
      %s123 = sadd.s32 %s122, 1
      %s124 = scalar_select %p121, %s122, %s123
      %p127 = pneg %p121
      %p128 = scmp.eq.s32.totalorder %s9, 1
      %p129 = por %p127, %p128
      %p130 = scmp.ne.s32.totalorder %s122, %s125
      %p131 = scmp.eq.s32.totalorder %s9, 0
      %p132 = por %p130, %p131
      %p133 = scmp.ne.s32.totalorder %s122, %s125
      %p134 = scmp.eq.s32.totalorder %s14, 1
      %p135 = por %p133, %p134
      %p136 = scmp.ne.s32.totalorder %s125, %s126
      %p137 = scmp.eq.s32.totalorder %s14, 0
      %p138 = por %p136, %p137
      %p139 = scmp.ne.s32.totalorder %s125, %s126
      %p140 = scmp.eq.s32.totalorder %s15, 1
      %p141 = por %p139, %p140
      %p143 = scmp.ne.s32.totalorder %s126, %s142
      %p144 = scmp.eq.s32.totalorder %s15, 0
      %p145 = por %p143, %p144
      %p146 = scmp.le.s32.totalorder 1, %s9
      %p147 = scmp.lt.s32.totalorder %s9, 3
      %p148 = pnand %p146, %p147
      %p149 = pneg %p148
      // Predicated region
      $region9: #{discriminator_forward.15} parent=5 // pred_check
        _
      $region10: #{discriminator_forward.15} parent=5 // pred_check_branch
        %151 = sbr.rel (%p148) target = $region12
      $region11: #{discriminator_forward.15} parent=5 // pred_region
        %s152 = ssub.s32 %s9, 1
        // Predicated region
        $region13: #{discriminator_forward.15} parent=11 // pred_check
          %p153 = pneg %p110
        $region14: #{discriminator_forward.15} parent=11 // pred_check_branch
          %155 = sbr.rel (%p153) target = $region16
        $region15: #{discriminator_forward.15} parent=11 // pred_region
          %p156 = scmp.lt.s32.totalorder %s20, 0
          %s157 = scalar_select %p156, %s20, 0
          %s158 = scalar_lea.vmem %s2, %s157
        $region16: #{discriminator_forward.15} parent=11 // pred_fallthru
          _
      $region12: #{discriminator_forward.15} parent=5 // pred_fallthru
        _
      %p159 = scmp.lt.s32.totalorder %s9, 2
      // Predicated region
      $region17: #{discriminator_forward.15} parent=5 // pred_check
        %p160 = pneg %p159
      $region18: #{discriminator_forward.15} parent=5 // pred_check_branch
        %162 = sbr.rel (%p160) target = $region20
      $region19: #{discriminator_forward.15} parent=5 // pred_region
        // Predicated region
        $region21: #{discriminator_forward.15} parent=19 // pred_check
          %p163 = pneg %p50
        $region22: #{discriminator_forward.15} parent=19 // pred_check_branch
          %165 = sbr.rel (%p163) target = $region24
        $region23: #{discriminator_forward.15} parent=19 // pred_region
          %s166 = sand.u32 %s40, 1
          %s167 = sand.u32 %s40, 1
          %s168 = smul.addr %s167, 128
          %s169 = scalar_lea.vmem [#allocation3], %s168
          %s170 = smul.u32 4, %s16
          %s171 = smul.u32 8, %s18
          %s172 = smul.addr %s170, 16
          %s173 = sadd.s32 %s171, %s172
          %s174 = smul.addr %s173, 4
          %s175 = scalar_lea.vmem %s0, %s174
          // Predicated region
          $region25: #{discriminator_forward.15} parent=23 // pred_check
            _
          $region26: #{discriminator_forward.15} parent=23 // pred_check_branch
            %177 = sbr.rel (0) target = $region28
          $region27: #{discriminator_forward.15} parent=23 // pred_region
            // Predicated region
            $region29: #{discriminator_forward.15} parent=27 // pred_check
              _
            $region30: #{discriminator_forward.15} parent=27 // pred_check_branch
              %179 = sbr.rel (0) target = $region32
            $region31: #{discriminator_forward.15} parent=27 // pred_region
              loop: start=0, step=1, limit=1
              $region33: #{discriminator_forward.15} parent=31 // loop_pre_header
                _
              $region34: #{discriminator_forward.15} parent=31 // loop_header
                %s181 = sphi 0, %s185
                %p182 = scmp.ge.s32.totalorder %s181, 1
                %s186 = sphi %s175, %s175
                %s187 = sphi %s169, %s169
              $region35: #{discriminator_forward.15} parent=31 // loop_header_branch
                %184 = sbr.rel (%p182) target = $region39
              $region36: #{discriminator_forward.15} parent=31 // loop_body
                %v188 = vld [vmem:[%s186] sm:$0xff]
                %189 = vst [vmem:[%s187] sm:$0xff] %v188
                %v190 = vld [vmem:[%s186 + $0x8] sm:$0xff]
                %191 = vst [vmem:[%s187 + $0x8] sm:$0xff] %v190
                %v192 = vld [vmem:[%s186 + $0x10] sm:$0xff]
                %193 = vst [vmem:[%s187 + $0x10] sm:$0xff] %v192
                %v194 = vld [vmem:[%s186 + $0x18] sm:$0xff]
                %195 = vst [vmem:[%s187 + $0x18] sm:$0xff] %v194
                %v196 = vld [vmem:[%s186 + $0x40] sm:$0xff]
                %197 = vst [vmem:[%s187 + $0x20] sm:$0xff] %v196
                %v198 = vld [vmem:[%s186 + $0x48] sm:$0xff]
                %199 = vst [vmem:[%s187 + $0x28] sm:$0xff] %v198
                %v200 = vld [vmem:[%s186 + $0x50] sm:$0xff]
                %201 = vst [vmem:[%s187 + $0x30] sm:$0xff] %v200
                %v202 = vld [vmem:[%s186 + $0x58] sm:$0xff]
                %203 = vst [vmem:[%s187 + $0x38] sm:$0xff] %v202
                %v204 = vld [vmem:[%s186 + $0x80] sm:$0xff]
                %205 = vst [vmem:[%s187 + $0x40] sm:$0xff] %v204
                %v206 = vld [vmem:[%s186 + $0x88] sm:$0xff]
                %207 = vst [vmem:[%s187 + $0x48] sm:$0xff] %v206
                %v208 = vld [vmem:[%s186 + $0x90] sm:$0xff]
                %209 = vst [vmem:[%s187 + $0x50] sm:$0xff] %v208
                %v210 = vld [vmem:[%s186 + $0x98] sm:$0xff]
                %211 = vst [vmem:[%s187 + $0x58] sm:$0xff] %v210
                %v212 = vld [vmem:[%s186 + $0xc0] sm:$0xff]
                %213 = vst [vmem:[%s187 + $0x60] sm:$0xff] %v212
                %v214 = vld [vmem:[%s186 + $0xc8] sm:$0xff]
                %215 = vst [vmem:[%s187 + $0x68] sm:$0xff] %v214
                %v216 = vld [vmem:[%s186 + $0xd0] sm:$0xff]
                %217 = vst [vmem:[%s187 + $0x70] sm:$0xff] %v216
                %v218 = vld [vmem:[%s186 + $0xd8] sm:$0xff]
                %219 = vst [vmem:[%s187 + $0x78] sm:$0xff] %v218
              $region37: #{discriminator_forward.15} parent=31 // loop_footer
                %s185 = sadd.s32 1, %s181
              $region38: #{discriminator_forward.15} parent=31 // loop_footer_branch
                %180 = sbr.rel target = $region34
              $region39: #{discriminator_forward.15} parent=31 // loop_exit
                _
            $region32: #{discriminator_forward.15} parent=27 // pred_fallthru
              _
            // Predicated region
            $region40: #{discriminator_forward.15} parent=27 // pred_check
              _
            $region41: #{discriminator_forward.15} parent=27 // pred_check_branch
              %221 = sbr.rel target = $region43
            $region42: #{discriminator_forward.15} parent=27 // pred_region
              _
            $region43: #{discriminator_forward.15} parent=27 // pred_fallthru
              _
          $region28: #{discriminator_forward.15} parent=23 // pred_fallthru
            _
          %222 = vnop
        $region24: #{discriminator_forward.15} parent=19 // pred_fallthru
          _
        // Predicated region
        $region44: #{discriminator_forward.15} parent=19 // pred_check
          %p223 = pneg %p78
        $region45: #{discriminator_forward.15} parent=19 // pred_check_branch
          %225 = sbr.rel (%p223) target = $region47
        $region46: #{discriminator_forward.15} parent=19 // pred_region
          %s226 = smul.u32 128, %s18
          %p227 = scmp.lt.s32.totalorder %s226, 255
          %s228 = scalar_select %p227, %s226, 255
          %p229 = scmp.lt.s32.totalorder %s17, 0
          %s230 = scalar_select %p229, %s17, 0
          %s231 = sadd.s32 %s230, %s228
          %s232 = smul.addr %s231, 4
          %s233 = scalar_lea.vmem %s1, %s232
          %s234 = smul.u32 128, %s18
        $region47: #{discriminator_forward.15} parent=19 // pred_fallthru
          _
      $region20: #{discriminator_forward.15} parent=5 // pred_fallthru
        _
      %p235 = scmp.le.s32.totalorder 1, %s9
      %p236 = scmp.lt.s32.totalorder %s9, 3
      %p237 = pnand %p235, %p236
      %p238 = pneg %p237
      // Predicated region
      $region48: #{discriminator_forward.15} parent=5 // pred_check
        _
      $region49: #{discriminator_forward.15} parent=5 // pred_check_branch
        %240 = sbr.rel (%p237) target = $region51
      $region50: #{discriminator_forward.15} parent=5 // pred_region
        %s241 = ssub.s32 %s9, 1
        %s242 = sand.u32 %s43, 1
        %s243 = sand.u32 %s43, 1
        %s244 = smul.addr %s243, 128
        %s245 = scalar_lea.vmem [#allocation3], %s244
        // Predicated region
        $region52: #{discriminator_forward.15} parent=50 // pred_check
          %p246 = pneg %p56
        $region53: #{discriminator_forward.15} parent=50 // pred_check_branch
          %248 = sbr.rel (%p246) target = $region55
        $region54: #{discriminator_forward.15} parent=50 // pred_region
          _
        $region55: #{discriminator_forward.15} parent=50 // pred_fallthru
          _
        %s249 = sand.u32 %s43, 1
        %s250 = sand.u32 %s43, 1
        %s251 = smul.addr %s250, 128
        %s252 = scalar_lea.vmem [#allocation3], %s251
        %p253 = pneg %p56
        %p254 = pneg %p53
        %s255 = smul.u32 128, %s21
        %p256 = scmp.lt.s32.totalorder %s255, 255
        %s257 = scalar_select %p256, %s255, 255
        %p258 = scmp.lt.s32.totalorder %s20, 0
        %s259 = scalar_select %p258, %s20, 0
        %s260 = sadd.s32 %s259, %s257
        %s261 = smul.addr %s260, 4
        %s262 = scalar_lea.vmem %s1, %s261
        %p263 = pneg %p84
        %p264 = pneg %p81
        %p265 = scmp.lt.s32.totalorder %s20, 0
        %s266 = scalar_select %p265, %s20, 0
        %s267 = scalar_lea.vmem %s2, %s266
        %p268 = pneg %p110
        %p269 = pneg %p107
        %p270 = pneg %p138
        %p271 = pneg %p135
        %s272 = smul.u32 4, %s19
        %p273 = scmp.lt.s32.totalorder %s272, 3
        %s274 = scalar_select %p273, %s272, 3
        %p275 = scmp.lt.s32.totalorder %s20, 0
        %s276 = scalar_select %p275, %s20, 0
        %s277 = sadd.s32 %s276, %s274
        %s278 = smul.addr %s277, 8
        %s279 = scalar_lea.vmem %s3, %s278
        %s280 = smul.u32 4, %s19
        %s281 = smul.u32 8, %s21
        %s282 = smul.u32 128, %s21
        %p283 = scmp.lt.s32.totalorder %s282, 255
        %s284 = scalar_select %p283, %s282, 255
        %p285 = scmp.lt.s32.totalorder %s20, 0
        %s286 = scalar_select %p285, %s20, 0
        %s287 = sadd.s32 %s286, %s284
        %s288 = smul.addr %s287, 4
        %s289 = scalar_lea.vmem %s1, %s288
        %s290 = smul.u32 128, %s21
        %p291 = scmp.lt.s32.totalorder %s20, 0
        %s292 = scalar_select %p291, %s20, 0
        %s293 = scalar_lea.vmem %s2, %s292
        %s294 = smul.u32 4, %s19
        %p295 = scmp.lt.s32.totalorder %s294, 3
        %s296 = scalar_select %p295, %s294, 3
        %p297 = scmp.lt.s32.totalorder %s20, 0
        %s298 = scalar_select %p297, %s20, 0
        %s299 = sadd.s32 %s298, %s296
        %s300 = smul.addr %s299, 8
        %s301 = scalar_lea.vmem %s3, %s300
        %s302 = smul.u32 4, %s19
        %p304 = scmp.eq.s32.totalorder %s21, 0
        // Predicated region
        $region56: #{discriminator_forward.15} parent=50 // pred_check
          %p305 = pneg %p304
        $region57: #{discriminator_forward.15} parent=50 // pred_check_branch
          %307 = sbr.rel (%p305) target = $region59
        $region58: #{discriminator_forward.15} parent=50 // pred_region
          %308 = vst [vmem:[#allocation2] sm:$0xff] 0.0
          %309 = vst [vmem:[#allocation2 + $0x8] sm:$0xff] 0.0
          %310 = vst [vmem:[#allocation2 + $0x10] sm:$0xff] 0.0
          %311 = vst [vmem:[#allocation2 + $0x18] sm:$0xff] 0.0
        $region59: #{discriminator_forward.15} parent=50 // pred_fallthru
          _
        %v312 = vld [vmem:[#allocation2] sm:$0xff]
        %v313 = vld [vmem:[#allocation2 + $0x8] sm:$0xff]
        %v314 = vld [vmem:[#allocation2 + $0x10] sm:$0xff]
        %v315 = vld [vmem:[#allocation2 + $0x18] sm:$0xff]
        %v316 = vld [vmem:[%s245] sm:$0xff]
        %v317 = vld [vmem:[%s245 + $0x8] sm:$0xff]
        %v318 = vld [vmem:[%s245 + $0x10] sm:$0xff]
        %v319 = vld [vmem:[%s245 + $0x18] sm:$0xff]
        %v320 = vld [vmem:[%s245 + $0x20] sm:$0xff]
        %v321 = vld [vmem:[%s245 + $0x28] sm:$0xff]
        %v322 = vld [vmem:[%s245 + $0x30] sm:$0xff]
        %v323 = vld [vmem:[%s245 + $0x38] sm:$0xff]
        %v324 = vld [vmem:[%s245 + $0x40] sm:$0xff]
        %v325 = vld [vmem:[%s245 + $0x48] sm:$0xff]
        %v326 = vld [vmem:[%s245 + $0x50] sm:$0xff]
        %v327 = vld [vmem:[%s245 + $0x58] sm:$0xff]
        %v328 = vld [vmem:[%s245 + $0x60] sm:$0xff]
        %v329 = vld [vmem:[%s245 + $0x68] sm:$0xff]
        %v330 = vld [vmem:[%s245 + $0x70] sm:$0xff]
        %v331 = vld [vmem:[%s245 + $0x78] sm:$0xff]
        %v332 = vld [vmem:[%s289] sm:$0xf]
        %v333 = vld [vmem:[%s289 + $0x4] sm:$0xf]
        %v334 = vld [vmem:[%s289 + $0x8] sm:$0xf]
        %v335 = vld [vmem:[%s289 + $0xc] sm:$0xf]
        %v336 = vld [vmem:[%s289 + $0x10] sm:$0xf]
        %v337 = vld [vmem:[%s289 + $0x14] sm:$0xf]
        %v338 = vld [vmem:[%s289 + $0x18] sm:$0xf]
        %v339 = vld [vmem:[%s289 + $0x1c] sm:$0xf]
        %v340 = vld [vmem:[%s289 + $0x20] sm:$0xf]
        %v341 = vld [vmem:[%s289 + $0x24] sm:$0xf]
        %v342 = vld [vmem:[%s289 + $0x28] sm:$0xf]
        %v343 = vld [vmem:[%s289 + $0x2c] sm:$0xf]
        %v344 = vld [vmem:[%s289 + $0x30] sm:$0xf]
        %v345 = vld [vmem:[%s289 + $0x34] sm:$0xf]
        %v346 = vld [vmem:[%s289 + $0x38] sm:$0xf]
        %v347 = vld [vmem:[%s289 + $0x3c] sm:$0xf]
        %v348 = vld [vmem:[%s289 + $0x40] sm:$0xf]
        %v349 = vld [vmem:[%s289 + $0x44] sm:$0xf]
        %v350 = vld [vmem:[%s289 + $0x48] sm:$0xf]
        %v351 = vld [vmem:[%s289 + $0x4c] sm:$0xf]
        %v352 = vld [vmem:[%s289 + $0x50] sm:$0xf]
        %v353 = vld [vmem:[%s289 + $0x54] sm:$0xf]
        %v354 = vld [vmem:[%s289 + $0x58] sm:$0xf]
        %v355 = vld [vmem:[%s289 + $0x5c] sm:$0xf]
        %v356 = vld [vmem:[%s289 + $0x60] sm:$0xf]
        %v357 = vld [vmem:[%s289 + $0x64] sm:$0xf]
        %v358 = vld [vmem:[%s289 + $0x68] sm:$0xf]
        %v359 = vld [vmem:[%s289 + $0x6c] sm:$0xf]
        %v360 = vld [vmem:[%s289 + $0x70] sm:$0xf]
        %v361 = vld [vmem:[%s289 + $0x74] sm:$0xf]
        %v362 = vld [vmem:[%s289 + $0x78] sm:$0xf]
        %v363 = vld [vmem:[%s289 + $0x7c] sm:$0xf]
        %v364 = vld [vmem:[%s289 + $0x80] sm:$0xf]
        %v365 = vld [vmem:[%s289 + $0x84] sm:$0xf]
        %v366 = vld [vmem:[%s289 + $0x88] sm:$0xf]
        %v367 = vld [vmem:[%s289 + $0x8c] sm:$0xf]
        %v368 = vld [vmem:[%s289 + $0x90] sm:$0xf]
        %v369 = vld [vmem:[%s289 + $0x94] sm:$0xf]
        %v370 = vld [vmem:[%s289 + $0x98] sm:$0xf]
        %v371 = vld [vmem:[%s289 + $0x9c] sm:$0xf]
        %v372 = vld [vmem:[%s289 + $0xa0] sm:$0xf]
        %v373 = vld [vmem:[%s289 + $0xa4] sm:$0xf]
        %v374 = vld [vmem:[%s289 + $0xa8] sm:$0xf]
        %v375 = vld [vmem:[%s289 + $0xac] sm:$0xf]
        %v376 = vld [vmem:[%s289 + $0xb0] sm:$0xf]
        %v377 = vld [vmem:[%s289 + $0xb4] sm:$0xf]
        %v378 = vld [vmem:[%s289 + $0xb8] sm:$0xf]
        %v379 = vld [vmem:[%s289 + $0xbc] sm:$0xf]
        %v380 = vld [vmem:[%s289 + $0xc0] sm:$0xf]
        %v381 = vld [vmem:[%s289 + $0xc4] sm:$0xf]
        %v382 = vld [vmem:[%s289 + $0xc8] sm:$0xf]
        %v383 = vld [vmem:[%s289 + $0xcc] sm:$0xf]
        %v384 = vld [vmem:[%s289 + $0xd0] sm:$0xf]
        %v385 = vld [vmem:[%s289 + $0xd4] sm:$0xf]
        %v386 = vld [vmem:[%s289 + $0xd8] sm:$0xf]
        %v387 = vld [vmem:[%s289 + $0xdc] sm:$0xf]
        %v388 = vld [vmem:[%s289 + $0xe0] sm:$0xf]
        %v389 = vld [vmem:[%s289 + $0xe4] sm:$0xf]
        %v390 = vld [vmem:[%s289 + $0xe8] sm:$0xf]
        %v391 = vld [vmem:[%s289 + $0xec] sm:$0xf]
        %v392 = vld [vmem:[%s289 + $0xf0] sm:$0xf]
        %v393 = vld [vmem:[%s289 + $0xf4] sm:$0xf]
        %v394 = vld [vmem:[%s289 + $0xf8] sm:$0xf]
        %v395 = vld [vmem:[%s289 + $0xfc] sm:$0xf]
        %v396 = vld [vmem:[%s289 + $0x100] sm:$0xf]
        %v397 = vld [vmem:[%s289 + $0x104] sm:$0xf]
        %v398 = vld [vmem:[%s289 + $0x108] sm:$0xf]
        %v399 = vld [vmem:[%s289 + $0x10c] sm:$0xf]
        %v400 = vld [vmem:[%s289 + $0x110] sm:$0xf]
        %v401 = vld [vmem:[%s289 + $0x114] sm:$0xf]
        %v402 = vld [vmem:[%s289 + $0x118] sm:$0xf]
        %v403 = vld [vmem:[%s289 + $0x11c] sm:$0xf]
        %v404 = vld [vmem:[%s289 + $0x120] sm:$0xf]
        %v405 = vld [vmem:[%s289 + $0x124] sm:$0xf]
        %v406 = vld [vmem:[%s289 + $0x128] sm:$0xf]
        %v407 = vld [vmem:[%s289 + $0x12c] sm:$0xf]
        %v408 = vld [vmem:[%s289 + $0x130] sm:$0xf]
        %v409 = vld [vmem:[%s289 + $0x134] sm:$0xf]
        %v410 = vld [vmem:[%s289 + $0x138] sm:$0xf]
        %v411 = vld [vmem:[%s289 + $0x13c] sm:$0xf]
        %v412 = vld [vmem:[%s289 + $0x140] sm:$0xf]
        %v413 = vld [vmem:[%s289 + $0x144] sm:$0xf]
        %v414 = vld [vmem:[%s289 + $0x148] sm:$0xf]
        %v415 = vld [vmem:[%s289 + $0x14c] sm:$0xf]
        %v416 = vld [vmem:[%s289 + $0x150] sm:$0xf]
        %v417 = vld [vmem:[%s289 + $0x154] sm:$0xf]
        %v418 = vld [vmem:[%s289 + $0x158] sm:$0xf]
        %v419 = vld [vmem:[%s289 + $0x15c] sm:$0xf]
        %v420 = vld [vmem:[%s289 + $0x160] sm:$0xf]
        %v421 = vld [vmem:[%s289 + $0x164] sm:$0xf]
        %v422 = vld [vmem:[%s289 + $0x168] sm:$0xf]
        %v423 = vld [vmem:[%s289 + $0x16c] sm:$0xf]
        %v424 = vld [vmem:[%s289 + $0x170] sm:$0xf]
        %v425 = vld [vmem:[%s289 + $0x174] sm:$0xf]
        %v426 = vld [vmem:[%s289 + $0x178] sm:$0xf]
        %v427 = vld [vmem:[%s289 + $0x17c] sm:$0xf]
        %v428 = vld [vmem:[%s289 + $0x180] sm:$0xf]
        %v429 = vld [vmem:[%s289 + $0x184] sm:$0xf]
        %v430 = vld [vmem:[%s289 + $0x188] sm:$0xf]
        %v431 = vld [vmem:[%s289 + $0x18c] sm:$0xf]
        %v432 = vld [vmem:[%s289 + $0x190] sm:$0xf]
        %v433 = vld [vmem:[%s289 + $0x194] sm:$0xf]
        %v434 = vld [vmem:[%s289 + $0x198] sm:$0xf]
        %v435 = vld [vmem:[%s289 + $0x19c] sm:$0xf]
        %v436 = vld [vmem:[%s289 + $0x1a0] sm:$0xf]
        %v437 = vld [vmem:[%s289 + $0x1a4] sm:$0xf]
        %v438 = vld [vmem:[%s289 + $0x1a8] sm:$0xf]
        %v439 = vld [vmem:[%s289 + $0x1ac] sm:$0xf]
        %v440 = vld [vmem:[%s289 + $0x1b0] sm:$0xf]
        %v441 = vld [vmem:[%s289 + $0x1b4] sm:$0xf]
        %v442 = vld [vmem:[%s289 + $0x1b8] sm:$0xf]
        %v443 = vld [vmem:[%s289 + $0x1bc] sm:$0xf]
        %v444 = vld [vmem:[%s289 + $0x1c0] sm:$0xf]
        %v445 = vld [vmem:[%s289 + $0x1c4] sm:$0xf]
        %v446 = vld [vmem:[%s289 + $0x1c8] sm:$0xf]
        %v447 = vld [vmem:[%s289 + $0x1cc] sm:$0xf]
        %v448 = vld [vmem:[%s289 + $0x1d0] sm:$0xf]
        %v449 = vld [vmem:[%s289 + $0x1d4] sm:$0xf]
        %v450 = vld [vmem:[%s289 + $0x1d8] sm:$0xf]
        %v451 = vld [vmem:[%s289 + $0x1dc] sm:$0xf]
        %v452 = vld [vmem:[%s289 + $0x1e0] sm:$0xf]
        %v453 = vld [vmem:[%s289 + $0x1e4] sm:$0xf]
        %v454 = vld [vmem:[%s289 + $0x1e8] sm:$0xf]
        %v455 = vld [vmem:[%s289 + $0x1ec] sm:$0xf]
        %v456 = vld [vmem:[%s289 + $0x1f0] sm:$0xf]
        %v457 = vld [vmem:[%s289 + $0x1f4] sm:$0xf]
        %v458 = vld [vmem:[%s289 + $0x1f8] sm:$0xf]
        %v459 = vld [vmem:[%s289 + $0x1fc] sm:$0xf]
        %v476 = vunpack.c.l.b16 %v316
        %v477 = vunpack.c.h.b16 %v316
        %v478 = vunpack.c.l.b16 %v317
        %v479 = vunpack.c.h.b16 %v317
        %v480 = vunpack.c.l.b16 %v318
        %v481 = vunpack.c.h.b16 %v318
        %v482 = vunpack.c.l.b16 %v319
        %v483 = vunpack.c.h.b16 %v319
        %v484 = vunpack.c.l.b16 %v320
        %v485 = vunpack.c.h.b16 %v320
        %v486 = vunpack.c.l.b16 %v321
        %v487 = vunpack.c.h.b16 %v321
        %v488 = vunpack.c.l.b16 %v322
        %v489 = vunpack.c.h.b16 %v322
        %v490 = vunpack.c.l.b16 %v323
        %v491 = vunpack.c.h.b16 %v323
        %v492 = vunpack.c.l.b16 %v324
        %v493 = vunpack.c.h.b16 %v324
        %v494 = vunpack.c.l.b16 %v325
        %v495 = vunpack.c.h.b16 %v325
        %v496 = vunpack.c.l.b16 %v326
        %v497 = vunpack.c.h.b16 %v326
        %v498 = vunpack.c.l.b16 %v327
        %v499 = vunpack.c.h.b16 %v327
        %v500 = vunpack.c.l.b16 %v328
        %v501 = vunpack.c.h.b16 %v328
        %v502 = vunpack.c.l.b16 %v329
        %v503 = vunpack.c.h.b16 %v329
        %v504 = vunpack.c.l.b16 %v330
        %v505 = vunpack.c.h.b16 %v330
        %v506 = vunpack.c.l.b16 %v331
        %v507 = vunpack.c.h.b16 %v331
        %v508 = vpack.c.b16 %v484, %v476
        %v509 = vpack.c.b16 %v485, %v477
        %v510 = vpack.c.b16 %v486, %v478
        %v511 = vpack.c.b16 %v487, %v479
        %v512 = vpack.c.b16 %v488, %v480
        %v513 = vpack.c.b16 %v489, %v481
        %v514 = vpack.c.b16 %v490, %v482
        %v515 = vpack.c.b16 %v491, %v483
        %v516 = vpack.c.b16 %v500, %v492
        %v517 = vpack.c.b16 %v501, %v493
        %v518 = vpack.c.b16 %v502, %v494
        %v519 = vpack.c.b16 %v503, %v495
        %v520 = vpack.c.b16 %v504, %v496
        %v521 = vpack.c.b16 %v505, %v497
        %v522 = vpack.c.b16 %v506, %v498
        %v523 = vpack.c.b16 %v507, %v499
        %v668 = vunpack.c.l.b16 %v332
        %v669 = vunpack.c.l.b16 %v333
        %v670 = vunpack.c.l.b16 %v334
        %v671 = vunpack.c.l.b16 %v335
        %v672 = vunpack.c.l.b16 %v336
        %v673 = vunpack.c.l.b16 %v337
        %v674 = vunpack.c.l.b16 %v338
        %v675 = vunpack.c.l.b16 %v339
        %v676 = vunpack.c.l.b16 %v340
        %v677 = vunpack.c.l.b16 %v341
        %v678 = vunpack.c.l.b16 %v342
        %v679 = vunpack.c.l.b16 %v343
        %v680 = vunpack.c.l.b16 %v344
        %v681 = vunpack.c.l.b16 %v345
        %v682 = vunpack.c.l.b16 %v346
        %v683 = vunpack.c.l.b16 %v347
        %v684 = vunpack.c.l.b16 %v348
        %v685 = vunpack.c.l.b16 %v349
        %v686 = vunpack.c.l.b16 %v350
        %v687 = vunpack.c.l.b16 %v351
        %v688 = vunpack.c.l.b16 %v352
        %v689 = vunpack.c.l.b16 %v353
        %v690 = vunpack.c.l.b16 %v354
        %v691 = vunpack.c.l.b16 %v355
        %v692 = vunpack.c.l.b16 %v356
        %v693 = vunpack.c.l.b16 %v357
        %v694 = vunpack.c.l.b16 %v358
        %v695 = vunpack.c.l.b16 %v359
        %v696 = vunpack.c.l.b16 %v360
        %v697 = vunpack.c.l.b16 %v361
        %v698 = vunpack.c.l.b16 %v362
        %v699 = vunpack.c.l.b16 %v363
        %v700 = vunpack.c.l.b16 %v364
        %v701 = vunpack.c.l.b16 %v365
        %v702 = vunpack.c.l.b16 %v366
        %v703 = vunpack.c.l.b16 %v367
        %v704 = vunpack.c.l.b16 %v368
        %v705 = vunpack.c.l.b16 %v369
        %v706 = vunpack.c.l.b16 %v370
        %v707 = vunpack.c.l.b16 %v371
        %v708 = vunpack.c.l.b16 %v372
        %v709 = vunpack.c.l.b16 %v373
        %v710 = vunpack.c.l.b16 %v374
        %v711 = vunpack.c.l.b16 %v375
        %v712 = vunpack.c.l.b16 %v376
        %v713 = vunpack.c.l.b16 %v377
        %v714 = vunpack.c.l.b16 %v378
        %v715 = vunpack.c.l.b16 %v379
        %v716 = vunpack.c.l.b16 %v380
        %v717 = vunpack.c.l.b16 %v381
        %v718 = vunpack.c.l.b16 %v382
        %v719 = vunpack.c.l.b16 %v383
        %v720 = vunpack.c.l.b16 %v384
        %v721 = vunpack.c.l.b16 %v385
        %v722 = vunpack.c.l.b16 %v386
        %v723 = vunpack.c.l.b16 %v387
        %v724 = vunpack.c.l.b16 %v388
        %v725 = vunpack.c.l.b16 %v389
        %v726 = vunpack.c.l.b16 %v390
        %v727 = vunpack.c.l.b16 %v391
        %v728 = vunpack.c.l.b16 %v392
        %v729 = vunpack.c.l.b16 %v393
        %v730 = vunpack.c.l.b16 %v394
        %v731 = vunpack.c.l.b16 %v395
        %v732 = vunpack.c.l.b16 %v396
        %v733 = vunpack.c.l.b16 %v397
        %v734 = vunpack.c.l.b16 %v398
        %v735 = vunpack.c.l.b16 %v399
        %v736 = vunpack.c.l.b16 %v400
        %v737 = vunpack.c.l.b16 %v401
        %v738 = vunpack.c.l.b16 %v402
        %v739 = vunpack.c.l.b16 %v403
        %v740 = vunpack.c.l.b16 %v404
        %v741 = vunpack.c.l.b16 %v405
        %v742 = vunpack.c.l.b16 %v406
        %v743 = vunpack.c.l.b16 %v407
        %v744 = vunpack.c.l.b16 %v408
        %v745 = vunpack.c.l.b16 %v409
        %v746 = vunpack.c.l.b16 %v410
        %v747 = vunpack.c.l.b16 %v411
        %v748 = vunpack.c.l.b16 %v412
        %v749 = vunpack.c.l.b16 %v413
        %v750 = vunpack.c.l.b16 %v414
        %v751 = vunpack.c.l.b16 %v415
        %v752 = vunpack.c.l.b16 %v416
        %v753 = vunpack.c.l.b16 %v417
        %v754 = vunpack.c.l.b16 %v418
        %v755 = vunpack.c.l.b16 %v419
        %v756 = vunpack.c.l.b16 %v420
        %v757 = vunpack.c.l.b16 %v421
        %v758 = vunpack.c.l.b16 %v422
        %v759 = vunpack.c.l.b16 %v423
        %v760 = vunpack.c.l.b16 %v424
        %v761 = vunpack.c.l.b16 %v425
        %v762 = vunpack.c.l.b16 %v426
        %v763 = vunpack.c.l.b16 %v427
        %v764 = vunpack.c.l.b16 %v428
        %v765 = vunpack.c.l.b16 %v429
        %v766 = vunpack.c.l.b16 %v430
        %v767 = vunpack.c.l.b16 %v431
        %v768 = vunpack.c.l.b16 %v432
        %v769 = vunpack.c.l.b16 %v433
        %v770 = vunpack.c.l.b16 %v434
        %v771 = vunpack.c.l.b16 %v435
        %v772 = vunpack.c.l.b16 %v436
        %v773 = vunpack.c.l.b16 %v437
        %v774 = vunpack.c.l.b16 %v438
        %v775 = vunpack.c.l.b16 %v439
        %v776 = vunpack.c.l.b16 %v440
        %v777 = vunpack.c.l.b16 %v441
        %v778 = vunpack.c.l.b16 %v442
        %v779 = vunpack.c.l.b16 %v443
        %v780 = vunpack.c.l.b16 %v444
        %v781 = vunpack.c.l.b16 %v445
        %v782 = vunpack.c.l.b16 %v446
        %v783 = vunpack.c.l.b16 %v447
        %v784 = vunpack.c.l.b16 %v448
        %v785 = vunpack.c.l.b16 %v449
        %v786 = vunpack.c.l.b16 %v450
        %v787 = vunpack.c.l.b16 %v451
        %v788 = vunpack.c.l.b16 %v452
        %v789 = vunpack.c.l.b16 %v453
        %v790 = vunpack.c.l.b16 %v454
        %v791 = vunpack.c.l.b16 %v455
        %v792 = vunpack.c.l.b16 %v456
        %v793 = vunpack.c.l.b16 %v457
        %v794 = vunpack.c.l.b16 %v458
        %v795 = vunpack.c.l.b16 %v459
        %v796 = vpack.c.b16 %v669, %v668
        %v797 = vpack.c.b16 %v671, %v670
        %v798 = vpack.c.b16 %v673, %v672
        %v799 = vpack.c.b16 %v675, %v674
        %v800 = vpack.c.b16 %v677, %v676
        %v801 = vpack.c.b16 %v679, %v678
        %v802 = vpack.c.b16 %v681, %v680
        %v803 = vpack.c.b16 %v683, %v682
        %v804 = vpack.c.b16 %v685, %v684
        %v805 = vpack.c.b16 %v687, %v686
        %v806 = vpack.c.b16 %v689, %v688
        %v807 = vpack.c.b16 %v691, %v690
        %v808 = vpack.c.b16 %v693, %v692
        %v809 = vpack.c.b16 %v695, %v694
        %v810 = vpack.c.b16 %v697, %v696
        %v811 = vpack.c.b16 %v699, %v698
        %v812 = vpack.c.b16 %v701, %v700
        %v813 = vpack.c.b16 %v703, %v702
        %v814 = vpack.c.b16 %v705, %v704
        %v815 = vpack.c.b16 %v707, %v706
        %v816 = vpack.c.b16 %v709, %v708
        %v817 = vpack.c.b16 %v711, %v710
        %v818 = vpack.c.b16 %v713, %v712
        %v819 = vpack.c.b16 %v715, %v714
        %v820 = vpack.c.b16 %v717, %v716
        %v821 = vpack.c.b16 %v719, %v718
        %v822 = vpack.c.b16 %v721, %v720
        %v823 = vpack.c.b16 %v723, %v722
        %v824 = vpack.c.b16 %v725, %v724
        %v825 = vpack.c.b16 %v727, %v726
        %v826 = vpack.c.b16 %v729, %v728
        %v827 = vpack.c.b16 %v731, %v730
        %v828 = vpack.c.b16 %v733, %v732
        %v829 = vpack.c.b16 %v735, %v734
        %v830 = vpack.c.b16 %v737, %v736
        %v831 = vpack.c.b16 %v739, %v738
        %v832 = vpack.c.b16 %v741, %v740
        %v833 = vpack.c.b16 %v743, %v742
        %v834 = vpack.c.b16 %v745, %v744
        %v835 = vpack.c.b16 %v747, %v746
        %v836 = vpack.c.b16 %v749, %v748
        %v837 = vpack.c.b16 %v751, %v750
        %v838 = vpack.c.b16 %v753, %v752
        %v839 = vpack.c.b16 %v755, %v754
        %v840 = vpack.c.b16 %v757, %v756
        %v841 = vpack.c.b16 %v759, %v758
        %v842 = vpack.c.b16 %v761, %v760
        %v843 = vpack.c.b16 %v763, %v762
        %v844 = vpack.c.b16 %v765, %v764
        %v845 = vpack.c.b16 %v767, %v766
        %v846 = vpack.c.b16 %v769, %v768
        %v847 = vpack.c.b16 %v771, %v770
        %v848 = vpack.c.b16 %v773, %v772
        %v849 = vpack.c.b16 %v775, %v774
        %v850 = vpack.c.b16 %v777, %v776
        %v851 = vpack.c.b16 %v779, %v778
        %v852 = vpack.c.b16 %v781, %v780
        %v853 = vpack.c.b16 %v783, %v782
        %v854 = vpack.c.b16 %v785, %v784
        %v855 = vpack.c.b16 %v787, %v786
        %v856 = vpack.c.b16 %v789, %v788
        %v857 = vpack.c.b16 %v791, %v790
        %v858 = vpack.c.b16 %v793, %v792
        %v859 = vpack.c.b16 %v795, %v794
        %924 = vmatprep.subr.bf16.mxu0 0
        %925 = vmatpush1.bf16.msra.mxu0 %v803
        %926 = vmatprep.subr.bf16.mxu0 0
        %927 = vmatpush1.bf16.msra.mxu0 %v802
        %928 = vmatprep.subr.bf16.mxu0 0
        %929 = vmatpush1.bf16.msra.mxu0 %v801
        %930 = vmatprep.subr.bf16.mxu0 0
        %931 = vmatpush1.bf16.msra.mxu0 %v800
        %932 = vmatprep.subr.bf16.mxu0 0
        %933 = vmatpush1.bf16.msra.mxu0 %v799
        %934 = vmatprep.subr.bf16.mxu0 0
        %935 = vmatpush1.bf16.msra.mxu0 %v798
        %936 = vmatprep.subr.bf16.mxu0 0
        %937 = vmatpush1.bf16.msra.mxu0 %v797
        %938 = vmatprep.subr.bf16.mxu0 0
        %939 = vmatpush1.bf16.msra.mxu0 %v796
        %940 = vmatprep.subr.bf16.mxu0 0
        %941 = vmatpush2.bf16.msra.mxu0 %v811
        %942 = vmatprep.subr.bf16.mxu0 0
        %943 = vmatpush2.bf16.msra.mxu0 %v810
        %944 = vmatprep.subr.bf16.mxu0 0
        %945 = vmatpush2.bf16.msra.mxu0 %v809
        %946 = vmatprep.subr.bf16.mxu0 0
        %947 = vmatpush2.bf16.msra.mxu0 %v808
        %948 = vmatprep.subr.bf16.mxu0 0
        %949 = vmatpush2.bf16.msra.mxu0 %v807
        %950 = vmatprep.subr.bf16.mxu0 0
        %951 = vmatpush2.bf16.msra.mxu0 %v806
        %952 = vmatprep.subr.bf16.mxu0 0
        %953 = vmatpush2.bf16.msra.mxu0 %v805
        %954 = vmatprep.subr.bf16.mxu0 0
        %955 = vmatpush2.bf16.msra.mxu0 %v804
        %956 = vmatprep.mubr.bf16.mxu0 %v509
        %957 = vmatmul.mubr.bf16.gmra.mxu0 %v508
        %v958 = vpop.f32.mrf.mxu0
        %v959 = vadd.f32 0.0, %v958
        %v960 = vpop.f32.mrf.mxu0
        %v961 = vpop.f32.mrf.mxu0
        %v962 = vadd.f32 0.0, %v961
        %v963 = vpop.f32.mrf.mxu0
        %964 = vmatprep.mubr.bf16.mxu0 %v517
        %965 = vmatmul.mubr.bf16.gmra.mxu0 %v516
        %v966 = vpop.f32.mrf.mxu0
        %v967 = vadd.f32 0.0, %v966
        %v968 = vpop.f32.mrf.mxu0
        %v969 = vpop.f32.mrf.mxu0
        %v970 = vadd.f32 0.0, %v969
        %v971 = vpop.f32.mrf.mxu0
        %972 = vdwg.mxu0
        %973 = vmatprep.subr.bf16.mxu0 0
        %974 = vmatpush1.bf16.msra.mxu0 %v819
        %975 = vmatprep.subr.bf16.mxu0 0
        %976 = vmatpush1.bf16.msra.mxu0 %v818
        %977 = vmatprep.subr.bf16.mxu0 0
        %978 = vmatpush1.bf16.msra.mxu0 %v817
        %979 = vmatprep.subr.bf16.mxu0 0
        %980 = vmatpush1.bf16.msra.mxu0 %v816
        %981 = vmatprep.subr.bf16.mxu0 0
        %982 = vmatpush1.bf16.msra.mxu0 %v815
        %983 = vmatprep.subr.bf16.mxu0 0
        %984 = vmatpush1.bf16.msra.mxu0 %v814
        %985 = vmatprep.subr.bf16.mxu0 0
        %986 = vmatpush1.bf16.msra.mxu0 %v813
        %987 = vmatprep.subr.bf16.mxu0 0
        %988 = vmatpush1.bf16.msra.mxu0 %v812
        %989 = vmatprep.subr.bf16.mxu0 0
        %990 = vmatpush2.bf16.msra.mxu0 %v827
        %991 = vmatprep.subr.bf16.mxu0 0
        %992 = vmatpush2.bf16.msra.mxu0 %v826
        %993 = vmatprep.subr.bf16.mxu0 0
        %994 = vmatpush2.bf16.msra.mxu0 %v825
        %995 = vmatprep.subr.bf16.mxu0 0
        %996 = vmatpush2.bf16.msra.mxu0 %v824
        %997 = vmatprep.subr.bf16.mxu0 0
        %998 = vmatpush2.bf16.msra.mxu0 %v823
        %999 = vmatprep.subr.bf16.mxu0 0
        %1000 = vmatpush2.bf16.msra.mxu0 %v822
        %1001 = vmatprep.subr.bf16.mxu0 0
        %1002 = vmatpush2.bf16.msra.mxu0 %v821
        %1003 = vmatprep.subr.bf16.mxu0 0
        %1004 = vmatpush2.bf16.msra.mxu0 %v820
        %1005 = vmatprep.mubr.bf16.mxu0 %v511
        %1006 = vmatmul.mubr.bf16.gmra.mxu0 %v510
        %v1007 = vpop.f32.mrf.mxu0
        %v1008 = vadd.f32 %v959, %v1007
        %v1009 = vpop.f32.mrf.mxu0
        %v1010 = vpop.f32.mrf.mxu0
        %v1011 = vadd.f32 %v962, %v1010
        %v1012 = vpop.f32.mrf.mxu0
        %1013 = vmatprep.mubr.bf16.mxu0 %v519
        %1014 = vmatmul.mubr.bf16.gmra.mxu0 %v518
        %v1015 = vpop.f32.mrf.mxu0
        %v1016 = vadd.f32 %v967, %v1015
        %v1017 = vpop.f32.mrf.mxu0
        %v1018 = vpop.f32.mrf.mxu0
        %v1019 = vadd.f32 %v970, %v1018
        %v1020 = vpop.f32.mrf.mxu0
        %1021 = vdwg.mxu0
        %1022 = vmatprep.subr.bf16.mxu0 0
        %1023 = vmatpush1.bf16.msra.mxu0 %v835
        %1024 = vmatprep.subr.bf16.mxu0 0
        %1025 = vmatpush1.bf16.msra.mxu0 %v834
        %1026 = vmatprep.subr.bf16.mxu0 0
        %1027 = vmatpush1.bf16.msra.mxu0 %v833
        %1028 = vmatprep.subr.bf16.mxu0 0
        %1029 = vmatpush1.bf16.msra.mxu0 %v832
        %1030 = vmatprep.subr.bf16.mxu0 0
        %1031 = vmatpush1.bf16.msra.mxu0 %v831
        %1032 = vmatprep.subr.bf16.mxu0 0
        %1033 = vmatpush1.bf16.msra.mxu0 %v830
        %1034 = vmatprep.subr.bf16.mxu0 0
        %1035 = vmatpush1.bf16.msra.mxu0 %v829
        %1036 = vmatprep.subr.bf16.mxu0 0
        %1037 = vmatpush1.bf16.msra.mxu0 %v828
        %1038 = vmatprep.subr.bf16.mxu0 0
        %1039 = vmatpush2.bf16.msra.mxu0 %v843
        %1040 = vmatprep.subr.bf16.mxu0 0
        %1041 = vmatpush2.bf16.msra.mxu0 %v842
        %1042 = vmatprep.subr.bf16.mxu0 0
        %1043 = vmatpush2.bf16.msra.mxu0 %v841
        %1044 = vmatprep.subr.bf16.mxu0 0
        %1045 = vmatpush2.bf16.msra.mxu0 %v840
        %1046 = vmatprep.subr.bf16.mxu0 0
        %1047 = vmatpush2.bf16.msra.mxu0 %v839
        %1048 = vmatprep.subr.bf16.mxu0 0
        %1049 = vmatpush2.bf16.msra.mxu0 %v838
        %1050 = vmatprep.subr.bf16.mxu0 0
        %1051 = vmatpush2.bf16.msra.mxu0 %v837
        %1052 = vmatprep.subr.bf16.mxu0 0
        %1053 = vmatpush2.bf16.msra.mxu0 %v836
        %1054 = vmatprep.mubr.bf16.mxu0 %v513
        %1055 = vmatmul.mubr.bf16.gmra.mxu0 %v512
        %v1056 = vpop.f32.mrf.mxu0
        %v1057 = vadd.f32 %v1008, %v1056
        %v1058 = vpop.f32.mrf.mxu0
        %v1059 = vpop.f32.mrf.mxu0
        %v1060 = vadd.f32 %v1011, %v1059
        %v1061 = vpop.f32.mrf.mxu0
        %1062 = vmatprep.mubr.bf16.mxu0 %v521
        %1063 = vmatmul.mubr.bf16.gmra.mxu0 %v520
        %v1064 = vpop.f32.mrf.mxu0
        %v1065 = vadd.f32 %v1016, %v1064
        %v1066 = vpop.f32.mrf.mxu0
        %v1067 = vpop.f32.mrf.mxu0
        %v1068 = vadd.f32 %v1019, %v1067
        %v1069 = vpop.f32.mrf.mxu0
        %1070 = vdwg.mxu0
        %1071 = vmatprep.subr.bf16.mxu0 0
        %1072 = vmatpush1.bf16.msra.mxu0 %v851
        %1073 = vmatprep.subr.bf16.mxu0 0
        %1074 = vmatpush1.bf16.msra.mxu0 %v850
        %1075 = vmatprep.subr.bf16.mxu0 0
        %1076 = vmatpush1.bf16.msra.mxu0 %v849
        %1077 = vmatprep.subr.bf16.mxu0 0
        %1078 = vmatpush1.bf16.msra.mxu0 %v848
        %1079 = vmatprep.subr.bf16.mxu0 0
        %1080 = vmatpush1.bf16.msra.mxu0 %v847
        %1081 = vmatprep.subr.bf16.mxu0 0
        %1082 = vmatpush1.bf16.msra.mxu0 %v846
        %1083 = vmatprep.subr.bf16.mxu0 0
        %1084 = vmatpush1.bf16.msra.mxu0 %v845
        %1085 = vmatprep.subr.bf16.mxu0 0
        %1086 = vmatpush1.bf16.msra.mxu0 %v844
        %1087 = vmatprep.subr.bf16.mxu0 0
        %1088 = vmatpush2.bf16.msra.mxu0 %v859
        %1089 = vmatprep.subr.bf16.mxu0 0
        %1090 = vmatpush2.bf16.msra.mxu0 %v858
        %1091 = vmatprep.subr.bf16.mxu0 0
        %1092 = vmatpush2.bf16.msra.mxu0 %v857
        %1093 = vmatprep.subr.bf16.mxu0 0
        %1094 = vmatpush2.bf16.msra.mxu0 %v856
        %1095 = vmatprep.subr.bf16.mxu0 0
        %1096 = vmatpush2.bf16.msra.mxu0 %v855
        %1097 = vmatprep.subr.bf16.mxu0 0
        %1098 = vmatpush2.bf16.msra.mxu0 %v854
        %1099 = vmatprep.subr.bf16.mxu0 0
        %1100 = vmatpush2.bf16.msra.mxu0 %v853
        %1101 = vmatprep.subr.bf16.mxu0 0
        %1102 = vmatpush2.bf16.msra.mxu0 %v852
        %1103 = vmatprep.mubr.bf16.mxu0 %v515
        %1104 = vmatmul.mubr.bf16.gmra.mxu0 %v514
        %v1105 = vpop.f32.mrf.mxu0
        %v1106 = vadd.f32 %v1057, %v1105
        %v1107 = vpop.f32.mrf.mxu0
        %v1108 = vpop.f32.mrf.mxu0
        %v1109 = vadd.f32 %v1060, %v1108
        %v1110 = vpop.f32.mrf.mxu0
        %1111 = vmatprep.mubr.bf16.mxu0 %v523
        %1112 = vmatmul.mubr.bf16.gmra.mxu0 %v522
        %v1113 = vpop.f32.mrf.mxu0
        %v1114 = vadd.f32 %v1065, %v1113
        %v1115 = vpop.f32.mrf.mxu0
        %v1116 = vpop.f32.mrf.mxu0
        %v1117 = vadd.f32 %v1068, %v1116
        %v1118 = vpop.f32.mrf.mxu0
        %1119 = vdwg.mxu0
        %v1120 = vadd.f32 %v312, %v1106
        %v1121 = vadd.f32 %v313, %v1109
        %v1122 = vadd.f32 %v314, %v1114
        %v1123 = vadd.f32 %v315, %v1117
        %1124 = vst [vmem:[#allocation2] sm:$0xff] %v1120
        %1125 = vst [vmem:[#allocation2 + $0x8] sm:$0xff] %v1121
        %1126 = vst [vmem:[#allocation2 + $0x10] sm:$0xff] %v1122
        %1127 = vst [vmem:[#allocation2 + $0x18] sm:$0xff] %v1123
        %p1128 = scmp.eq.s32.totalorder %s21, 1
        // Predicated region
        $region60: #{discriminator_forward.15} parent=50 // pred_check
          %p1129 = pneg %p1128
        $region61: #{discriminator_forward.15} parent=50 // pred_check_branch
          %1131 = sbr.rel (%p1129) target = $region63
        $region62: #{discriminator_forward.15} parent=50 // pred_region
          %v1132 = vld [vmem:[#allocation2] sm:$0xff]
          %v1133 = vld [vmem:[#allocation2 + $0x8] sm:$0xff]
          %v1134 = vld [vmem:[#allocation2 + $0x10] sm:$0xff]
          %v1135 = vld [vmem:[#allocation2 + $0x18] sm:$0xff]
          %1136 = vst [vmem:[%s301] sm:$0xff] %v1132
          %1137 = vst [vmem:[%s301 + $0x8] sm:$0xff] %v1133
          %1138 = vst [vmem:[%s301 + $0x10] sm:$0xff] %v1134
          %1139 = vst [vmem:[%s301 + $0x18] sm:$0xff] %v1135
        $region63: #{discriminator_forward.15} parent=50 // pred_fallthru
          _
        %s1140 = smul.u32 4, %s19
        %p1141 = scmp.lt.s32.totalorder %s1140, 3
        %s1142 = scalar_select %p1141, %s1140, 3
        %p1143 = scmp.lt.s32.totalorder %s20, 0
        %s1144 = scalar_select %p1143, %s20, 0
        %s1145 = sadd.s32 %s1144, %s1142
        %s1146 = smul.addr %s1145, 8
        %s1147 = scalar_lea.vmem %s3, %s1146
        // Predicated region
        $region64: #{discriminator_forward.15} parent=50 // pred_check
          %p1148 = pneg %p135
        $region65: #{discriminator_forward.15} parent=50 // pred_check_branch
          %1150 = sbr.rel (%p1148) target = $region67
        $region66: #{discriminator_forward.15} parent=50 // pred_region
          %s1151 = smul.u32 4, %s19
        $region67: #{discriminator_forward.15} parent=50 // pred_fallthru
          _
        // Predicated region
        $region68: #{discriminator_forward.15} parent=50 // pred_check
          %p1152 = pneg %p135
        $region69: #{discriminator_forward.15} parent=50 // pred_check_branch
          %1154 = sbr.rel (%p1152) target = $region71
        $region70: #{discriminator_forward.15} parent=50 // pred_region
          %s1155 = smul.u32 4, %s19
          %p1156 = scmp.lt.s32.totalorder %s1155, 3
          %s1157 = scalar_select %p1156, %s1155, 3
          %p1158 = scmp.lt.s32.totalorder %s20, 0
          %s1159 = scalar_select %p1158, %s20, 0
          %s1160 = sadd.s32 %s1159, %s1157
          %s1161 = smul.addr %s1160, 8
          %s1162 = scalar_lea.vmem %s3, %s1161
        $region71: #{discriminator_forward.15} parent=50 // pred_fallthru
          _
      $region51: #{discriminator_forward.15} parent=5 // pred_fallthru
        _
      %p1163 = scmp.le.s32.totalorder 2, %s9
      // Predicated region
      $region72: #{discriminator_forward.15} parent=5 // pred_check
        %p1164 = pneg %p1163
      $region73: #{discriminator_forward.15} parent=5 // pred_check_branch
        %1166 = sbr.rel (%p1164) target = $region75
      $region74: #{discriminator_forward.15} parent=5 // pred_region
        %s1167 = ssub.s32 %s9, 2
      $region75: #{discriminator_forward.15} parent=5 // pred_fallthru
        _
    $region6: #{discriminator_forward.15} parent=1 // loop_footer
      %s13 = sadd.s32 1, %s9
    $region7: #{discriminator_forward.15} parent=1 // loop_footer_branch
      %8 = sbr.rel target = $region3
    $region8: #{discriminator_forward.15} parent=1 // loop_exit
      _

// kernel: discriminator_forward.21
$region0: #{discriminator_forward.21}
  #allocation0 [shape = 'u32[]', space=smem, size = 0x4, offset = 0x4, fixed_abs, tag = 'smem constant byte address 0x4 - core index']
  #allocation1 [shape = 'u32[144,128]{1,0:T(1,128)}', space=vmem, size = 0x12000, scoped, tag = 'internal scratch']
  #allocation2 [shape = 'f32[16,128]{1,0:T(8,128)}', space=vmem, size = 0x2000, scoped, tag = 'scratch operand']
  %s0 = inlined_call_operand.vmem [shape: bf16[16,2048], index: 0, kind: input, shape index: {}]
  %s1 = inlined_call_operand.vmem [shape: bf16[2048,128], index: 1, kind: input, shape index: {}]
  %s2 = inlined_call_operand.vmem [shape: f32[1,128], index: 2, kind: input, shape index: {}]
  %s3 = inlined_call_operand.vmem [shape: f32[16,128], index: 3, kind: output, shape index: {}]
  %s4 = sld [smem:[#allocation0]]
  $region76: #{discriminator_forward.21} parent=0
    _
  %s6 = ssub.s32 1, %s4
  %s7 = scalar_select 0, %s6, %s4
  $region1: #{discriminator_forward.21} parent=0
    #allocation3 [shape = 'u8[65536]{0}', space=vmem, size = 0x10000, scoped, tag = 'input window, operand 0']
    loop: start=0, step=1, limit=4
    $region2: #{discriminator_forward.21} parent=1 // loop_pre_header
      _
    $region3: #{discriminator_forward.21} parent=1 // loop_header
      %s9 = sphi 0, %s13
      %p10 = scmp.ge.s32.totalorder %s9, 4
      %s16 = sphi 0, %s35
      %s17 = sphi 0, %s31
      %s18 = sphi 0, %s27
      %s19 = sphi 0, %s16
      %s20 = sphi 0, %s17
      %s21 = sphi 0, %s18
      %s22 = sphi 0, %s19
      %s23 = sphi 0, %s20
      %s24 = sphi 0, %s21
      %s40 = sphi 0, %s42
      %s43 = sphi 0, %s40
      %s44 = sphi 0, %s43
      %s60 = sphi 0, %s44
      %s68 = sphi 0, %s70
      %s71 = sphi 0, %s68
      %s72 = sphi 0, %s71
      %s88 = sphi 0, %s72
      %s94 = sphi 0, %s96
      %s97 = sphi 0, %s94
      %s98 = sphi 0, %s97
      %s114 = sphi 0, %s98
      %s122 = sphi 0, %s124
      %s125 = sphi 0, %s122
      %s126 = sphi 0, %s125
      %s142 = sphi 0, %s126
    $region4: #{discriminator_forward.21} parent=1 // loop_header_branch
      %12 = sbr.rel (%p10) target = $region8
    $region5: #{discriminator_forward.21} parent=1 // loop_body
      %s14 = ssub.s32 %s9, 1
      %s15 = ssub.s32 %s9, 2
      %s25 = sadd.s32 1, %s18
      %p26 = scmp.ge.s32.totalorder %s25, 2
      %s27 = scalar_select %p26, 0, %s25
      %s28 = sadd.s32 1, %s17
      %s29 = scalar_select %p26, %s28, %s17
      %p30 = scmp.ge.s32.totalorder %s29, 1
      %s31 = scalar_select %p30, 0, %s29
      %s32 = sadd.s32 1, %s16
      %s33 = scalar_select %p30, %s32, %s16
      %p34 = scmp.ge.s32.totalorder %s33, 1
      %s35 = scalar_select %p34, 0, %s33
      %s36 = ssub.s32 %s16, %s35
      %s37 = ssub.s32 %s18, %s27
      %s38 = sor.u32 %s36, %s37
      %p39 = scmp.eq.s32.totalorder %s38, 0
      %s41 = sadd.s32 %s40, 1
      %s42 = scalar_select %p39, %s40, %s41
      %p45 = pneg %p39
      %p46 = scmp.eq.s32.totalorder %s9, 1
      %p47 = por %p45, %p46
      %p48 = scmp.ne.s32.totalorder %s40, %s43
      %p49 = scmp.eq.s32.totalorder %s9, 0
      %p50 = por %p48, %p49
      %p51 = scmp.ne.s32.totalorder %s40, %s43
      %p52 = scmp.eq.s32.totalorder %s14, 1
      %p53 = por %p51, %p52
      %p54 = scmp.ne.s32.totalorder %s43, %s44
      %p55 = scmp.eq.s32.totalorder %s14, 0
      %p56 = por %p54, %p55
      %p57 = scmp.ne.s32.totalorder %s43, %s44
      %p58 = scmp.eq.s32.totalorder %s15, 1
      %p59 = por %p57, %p58
      %p61 = scmp.ne.s32.totalorder %s44, %s60
      %p62 = scmp.eq.s32.totalorder %s15, 0
      %p63 = por %p61, %p62
      %s64 = ssub.s32 %s18, %s27
      %s65 = ssub.s32 %s17, %s31
      %s66 = sor.u32 %s64, %s65
      %p67 = scmp.eq.s32.totalorder %s66, 0
      %s69 = sadd.s32 %s68, 1
      %s70 = scalar_select %p67, %s68, %s69
      %p73 = pneg %p67
      %p74 = scmp.eq.s32.totalorder %s9, 1
      %p75 = por %p73, %p74
      %p76 = scmp.ne.s32.totalorder %s68, %s71
      %p77 = scmp.eq.s32.totalorder %s9, 0
      %p78 = por %p76, %p77
      %p79 = scmp.ne.s32.totalorder %s68, %s71
      %p80 = scmp.eq.s32.totalorder %s14, 1
      %p81 = por %p79, %p80
      %p82 = scmp.ne.s32.totalorder %s71, %s72
      %p83 = scmp.eq.s32.totalorder %s14, 0
      %p84 = por %p82, %p83
      %p85 = scmp.ne.s32.totalorder %s71, %s72
      %p86 = scmp.eq.s32.totalorder %s15, 1
      %p87 = por %p85, %p86
      %p89 = scmp.ne.s32.totalorder %s72, %s88
      %p90 = scmp.eq.s32.totalorder %s15, 0
      %p91 = por %p89, %p90
      %s92 = ssub.s32 %s17, %s31
      %p93 = scmp.eq.s32.totalorder %s92, 0
      %s95 = sadd.s32 %s94, 1
      %s96 = scalar_select %p93, %s94, %s95
      %p99 = pneg %p93
      %p100 = scmp.eq.s32.totalorder %s9, 1
      %p101 = por %p99, %p100
      %p102 = scmp.ne.s32.totalorder %s94, %s97
      %p103 = scmp.eq.s32.totalorder %s9, 0
      %p104 = por %p102, %p103
      %p105 = scmp.ne.s32.totalorder %s94, %s97
      %p106 = scmp.eq.s32.totalorder %s14, 1
      %p107 = por %p105, %p106
      %p108 = scmp.ne.s32.totalorder %s97, %s98
      %p109 = scmp.eq.s32.totalorder %s14, 0
      %p110 = por %p108, %p109
      %p111 = scmp.ne.s32.totalorder %s97, %s98
      %p112 = scmp.eq.s32.totalorder %s15, 1
      %p113 = por %p111, %p112
      %p115 = scmp.ne.s32.totalorder %s98, %s114
      %p116 = scmp.eq.s32.totalorder %s15, 0
      %p117 = por %p115, %p116
      %s118 = ssub.s32 %s16, %s35
      %s119 = ssub.s32 %s17, %s31
      %s120 = sor.u32 %s118, %s119
      %p121 = scmp.eq.s32.totalorder %s120, 0
      %s123 = sadd.s32 %s122, 1
      %s124 = scalar_select %p121, %s122, %s123
      %p127 = pneg %p121
      %p128 = scmp.eq.s32.totalorder %s9, 1
      %p129 = por %p127, %p128
      %p130 = scmp.ne.s32.totalorder %s122, %s125
      %p131 = scmp.eq.s32.totalorder %s9, 0
      %p132 = por %p130, %p131
      %p133 = scmp.ne.s32.totalorder %s122, %s125
      %p134 = scmp.eq.s32.totalorder %s14, 1
      %p135 = por %p133, %p134
      %p136 = scmp.ne.s32.totalorder %s125, %s126
      %p137 = scmp.eq.s32.totalorder %s14, 0
      %p138 = por %p136, %p137
      %p139 = scmp.ne.s32.totalorder %s125, %s126
      %p140 = scmp.eq.s32.totalorder %s15, 1
      %p141 = por %p139, %p140
      %p143 = scmp.ne.s32.totalorder %s126, %s142
      %p144 = scmp.eq.s32.totalorder %s15, 0
      %p145 = por %p143, %p144
      %p146 = scmp.le.s32.totalorder 1, %s9
      %p147 = scmp.lt.s32.totalorder %s9, 3
      %p148 = pnand %p146, %p147
      %p149 = pneg %p148
      // Predicated region
      $region9: #{discriminator_forward.21} parent=5 // pred_check
        _
      $region10: #{discriminator_forward.21} parent=5 // pred_check_branch
        %151 = sbr.rel (%p148) target = $region12
      $region11: #{discriminator_forward.21} parent=5 // pred_region
        %s152 = ssub.s32 %s9, 1
        // Predicated region
        $region13: #{discriminator_forward.21} parent=11 // pred_check
          %p153 = pneg %p110
        $region14: #{discriminator_forward.21} parent=11 // pred_check_branch
          %155 = sbr.rel (%p153) target = $region16
        $region15: #{discriminator_forward.21} parent=11 // pred_region
          %p156 = scmp.lt.s32.totalorder %s20, 0
          %s157 = scalar_select %p156, %s20, 0
          %s158 = scalar_lea.vmem %s2, %s157
        $region16: #{discriminator_forward.21} parent=11 // pred_fallthru
          _
      $region12: #{discriminator_forward.21} parent=5 // pred_fallthru
        _
      %p159 = scmp.lt.s32.totalorder %s9, 2
      // Predicated region
      $region17: #{discriminator_forward.21} parent=5 // pred_check
        %p160 = pneg %p159
      $region18: #{discriminator_forward.21} parent=5 // pred_check_branch
        %162 = sbr.rel (%p160) target = $region20
      $region19: #{discriminator_forward.21} parent=5 // pred_region
        // Predicated region
        $region21: #{discriminator_forward.21} parent=19 // pred_check
          %p163 = pneg %p50
        $region22: #{discriminator_forward.21} parent=19 // pred_check_branch
          %165 = sbr.rel (%p163) target = $region24
        $region23: #{discriminator_forward.21} parent=19 // pred_region
          %s166 = sand.u32 %s40, 1
          %s167 = sand.u32 %s40, 1
          %s168 = smul.addr %s167, 64
          %s169 = scalar_lea.vmem [#allocation3], %s168
          %s170 = smul.u32 2, %s16
          %s171 = smul.u32 8, %s18
          %s172 = smul.addr %s170, 16
          %s173 = sadd.s32 %s171, %s172
          %s174 = smul.addr %s173, 4
          %s175 = scalar_lea.vmem %s0, %s174
          // Predicated region
          $region25: #{discriminator_forward.21} parent=23 // pred_check
            _
          $region26: #{discriminator_forward.21} parent=23 // pred_check_branch
            %177 = sbr.rel (0) target = $region28
          $region27: #{discriminator_forward.21} parent=23 // pred_region
            // Predicated region
            $region29: #{discriminator_forward.21} parent=27 // pred_check
              _
            $region30: #{discriminator_forward.21} parent=27 // pred_check_branch
              %179 = sbr.rel (0) target = $region32
            $region31: #{discriminator_forward.21} parent=27 // pred_region
              loop: start=0, step=1, limit=1
              $region33: #{discriminator_forward.21} parent=31 // loop_pre_header
                _
              $region34: #{discriminator_forward.21} parent=31 // loop_header
                %s181 = sphi 0, %s185
                %p182 = scmp.ge.s32.totalorder %s181, 1
                %s186 = sphi %s175, %s175
                %s187 = sphi %s169, %s169
              $region35: #{discriminator_forward.21} parent=31 // loop_header_branch
                %184 = sbr.rel (%p182) target = $region39
              $region36: #{discriminator_forward.21} parent=31 // loop_body
                %v188 = vld [vmem:[%s186] sm:$0xff]
                %189 = vst [vmem:[%s187] sm:$0xff] %v188
                %v190 = vld [vmem:[%s186 + $0x8] sm:$0xff]
                %191 = vst [vmem:[%s187 + $0x8] sm:$0xff] %v190
                %v192 = vld [vmem:[%s186 + $0x10] sm:$0xff]
                %193 = vst [vmem:[%s187 + $0x10] sm:$0xff] %v192
                %v194 = vld [vmem:[%s186 + $0x18] sm:$0xff]
                %195 = vst [vmem:[%s187 + $0x18] sm:$0xff] %v194
                %v196 = vld [vmem:[%s186 + $0x40] sm:$0xff]
                %197 = vst [vmem:[%s187 + $0x20] sm:$0xff] %v196
                %v198 = vld [vmem:[%s186 + $0x48] sm:$0xff]
                %199 = vst [vmem:[%s187 + $0x28] sm:$0xff] %v198
                %v200 = vld [vmem:[%s186 + $0x50] sm:$0xff]
                %201 = vst [vmem:[%s187 + $0x30] sm:$0xff] %v200
                %v202 = vld [vmem:[%s186 + $0x58] sm:$0xff]
                %203 = vst [vmem:[%s187 + $0x38] sm:$0xff] %v202
              $region37: #{discriminator_forward.21} parent=31 // loop_footer
                %s185 = sadd.s32 1, %s181
              $region38: #{discriminator_forward.21} parent=31 // loop_footer_branch
                %180 = sbr.rel target = $region34
              $region39: #{discriminator_forward.21} parent=31 // loop_exit
                _
            $region32: #{discriminator_forward.21} parent=27 // pred_fallthru
              _
            // Predicated region
            $region40: #{discriminator_forward.21} parent=27 // pred_check
              _
            $region41: #{discriminator_forward.21} parent=27 // pred_check_branch
              %205 = sbr.rel target = $region43
            $region42: #{discriminator_forward.21} parent=27 // pred_region
              _
            $region43: #{discriminator_forward.21} parent=27 // pred_fallthru
              _
          $region28: #{discriminator_forward.21} parent=23 // pred_fallthru
            _
          %206 = vnop
        $region24: #{discriminator_forward.21} parent=19 // pred_fallthru
          _
        // Predicated region
        $region44: #{discriminator_forward.21} parent=19 // pred_check
          %p207 = pneg %p78
        $region45: #{discriminator_forward.21} parent=19 // pred_check_branch
          %209 = sbr.rel (%p207) target = $region47
        $region46: #{discriminator_forward.21} parent=19 // pred_region
          %s210 = smul.u32 128, %s18
          %p211 = scmp.lt.s32.totalorder %s210, 255
          %s212 = scalar_select %p211, %s210, 255
          %p213 = scmp.lt.s32.totalorder %s17, 0
          %s214 = scalar_select %p213, %s17, 0
          %s215 = sadd.s32 %s214, %s212
          %s216 = smul.addr %s215, 4
          %s217 = scalar_lea.vmem %s1, %s216
          %s218 = smul.u32 128, %s18
        $region47: #{discriminator_forward.21} parent=19 // pred_fallthru
          _
      $region20: #{discriminator_forward.21} parent=5 // pred_fallthru
        _
      %p219 = scmp.le.s32.totalorder 1, %s9
      %p220 = scmp.lt.s32.totalorder %s9, 3
      %p221 = pnand %p219, %p220
      %p222 = pneg %p221
      // Predicated region
      $region48: #{discriminator_forward.21} parent=5 // pred_check
        _
      $region49: #{discriminator_forward.21} parent=5 // pred_check_branch
        %224 = sbr.rel (%p221) target = $region51
      $region50: #{discriminator_forward.21} parent=5 // pred_region
        %s225 = ssub.s32 %s9, 1
        %s226 = sand.u32 %s43, 1
        %s227 = sand.u32 %s43, 1
        %s228 = smul.addr %s227, 64
        %s229 = scalar_lea.vmem [#allocation3], %s228
        // Predicated region
        $region52: #{discriminator_forward.21} parent=50 // pred_check
          %p230 = pneg %p56
        $region53: #{discriminator_forward.21} parent=50 // pred_check_branch
          %232 = sbr.rel (%p230) target = $region55
        $region54: #{discriminator_forward.21} parent=50 // pred_region
          _
        $region55: #{discriminator_forward.21} parent=50 // pred_fallthru
          _
        %s233 = sand.u32 %s43, 1
        %s234 = sand.u32 %s43, 1
        %s235 = smul.addr %s234, 64
        %s236 = scalar_lea.vmem [#allocation3], %s235
        %p237 = pneg %p56
        %p238 = pneg %p53
        %s239 = smul.u32 128, %s21
        %p240 = scmp.lt.s32.totalorder %s239, 255
        %s241 = scalar_select %p240, %s239, 255
        %p242 = scmp.lt.s32.totalorder %s20, 0
        %s243 = scalar_select %p242, %s20, 0
        %s244 = sadd.s32 %s243, %s241
        %s245 = smul.addr %s244, 4
        %s246 = scalar_lea.vmem %s1, %s245
        %p247 = pneg %p84
        %p248 = pneg %p81
        %p249 = scmp.lt.s32.totalorder %s20, 0
        %s250 = scalar_select %p249, %s20, 0
        %s251 = scalar_lea.vmem %s2, %s250
        %p252 = pneg %p110
        %p253 = pneg %p107
        %p254 = pneg %p138
        %p255 = pneg %p135
        %s256 = smul.u32 2, %s19
        %p257 = scmp.lt.s32.totalorder %s256, 1
        %s258 = scalar_select %p257, %s256, 1
        %p259 = scmp.lt.s32.totalorder %s20, 0
        %s260 = scalar_select %p259, %s20, 0
        %s261 = sadd.s32 %s260, %s258
        %s262 = smul.addr %s261, 8
        %s263 = scalar_lea.vmem %s3, %s262
        %s264 = smul.u32 2, %s19
        %s265 = smul.u32 8, %s21
        %s266 = smul.u32 128, %s21
        %p267 = scmp.lt.s32.totalorder %s266, 255
        %s268 = scalar_select %p267, %s266, 255
        %p269 = scmp.lt.s32.totalorder %s20, 0
        %s270 = scalar_select %p269, %s20, 0
        %s271 = sadd.s32 %s270, %s268
        %s272 = smul.addr %s271, 4
        %s273 = scalar_lea.vmem %s1, %s272
        %s274 = smul.u32 128, %s21
        %p275 = scmp.lt.s32.totalorder %s20, 0
        %s276 = scalar_select %p275, %s20, 0
        %s277 = scalar_lea.vmem %s2, %s276
        %s278 = smul.u32 2, %s19
        %p279 = scmp.lt.s32.totalorder %s278, 1
        %s280 = scalar_select %p279, %s278, 1
        %p281 = scmp.lt.s32.totalorder %s20, 0
        %s282 = scalar_select %p281, %s20, 0
        %s283 = sadd.s32 %s282, %s280
        %s284 = smul.addr %s283, 8
        %s285 = scalar_lea.vmem %s3, %s284
        %s286 = smul.u32 2, %s19
        %p288 = scmp.eq.s32.totalorder %s21, 0
        // Predicated region
        $region56: #{discriminator_forward.21} parent=50 // pred_check
          %p289 = pneg %p288
        $region57: #{discriminator_forward.21} parent=50 // pred_check_branch
          %291 = sbr.rel (%p289) target = $region59
        $region58: #{discriminator_forward.21} parent=50 // pred_region
          %292 = vst [vmem:[#allocation2] sm:$0xff] 0.0
          %293 = vst [vmem:[#allocation2 + $0x8] sm:$0xff] 0.0
        $region59: #{discriminator_forward.21} parent=50 // pred_fallthru
          _
        %v294 = vld [vmem:[#allocation2] sm:$0xff]
        %v295 = vld [vmem:[#allocation2 + $0x8] sm:$0xff]
        %v296 = vld [vmem:[%s229] sm:$0xff]
        %v297 = vld [vmem:[%s229 + $0x8] sm:$0xff]
        %v298 = vld [vmem:[%s229 + $0x10] sm:$0xff]
        %v299 = vld [vmem:[%s229 + $0x18] sm:$0xff]
        %v300 = vld [vmem:[%s229 + $0x20] sm:$0xff]
        %v301 = vld [vmem:[%s229 + $0x28] sm:$0xff]
        %v302 = vld [vmem:[%s229 + $0x30] sm:$0xff]
        %v303 = vld [vmem:[%s229 + $0x38] sm:$0xff]
        %v304 = vld [vmem:[%s273] sm:$0xf]
        %v305 = vld [vmem:[%s273 + $0x4] sm:$0xf]
        %v306 = vld [vmem:[%s273 + $0x8] sm:$0xf]
        %v307 = vld [vmem:[%s273 + $0xc] sm:$0xf]
        %v308 = vld [vmem:[%s273 + $0x10] sm:$0xf]
        %v309 = vld [vmem:[%s273 + $0x14] sm:$0xf]
        %v310 = vld [vmem:[%s273 + $0x18] sm:$0xf]
        %v311 = vld [vmem:[%s273 + $0x1c] sm:$0xf]
        %v312 = vld [vmem:[%s273 + $0x20] sm:$0xf]
        %v313 = vld [vmem:[%s273 + $0x24] sm:$0xf]
        %v314 = vld [vmem:[%s273 + $0x28] sm:$0xf]
        %v315 = vld [vmem:[%s273 + $0x2c] sm:$0xf]
        %v316 = vld [vmem:[%s273 + $0x30] sm:$0xf]
        %v317 = vld [vmem:[%s273 + $0x34] sm:$0xf]
        %v318 = vld [vmem:[%s273 + $0x38] sm:$0xf]
        %v319 = vld [vmem:[%s273 + $0x3c] sm:$0xf]
        %v320 = vld [vmem:[%s273 + $0x40] sm:$0xf]
        %v321 = vld [vmem:[%s273 + $0x44] sm:$0xf]
        %v322 = vld [vmem:[%s273 + $0x48] sm:$0xf]
        %v323 = vld [vmem:[%s273 + $0x4c] sm:$0xf]
        %v324 = vld [vmem:[%s273 + $0x50] sm:$0xf]
        %v325 = vld [vmem:[%s273 + $0x54] sm:$0xf]
        %v326 = vld [vmem:[%s273 + $0x58] sm:$0xf]
        %v327 = vld [vmem:[%s273 + $0x5c] sm:$0xf]
        %v328 = vld [vmem:[%s273 + $0x60] sm:$0xf]
        %v329 = vld [vmem:[%s273 + $0x64] sm:$0xf]
        %v330 = vld [vmem:[%s273 + $0x68] sm:$0xf]
        %v331 = vld [vmem:[%s273 + $0x6c] sm:$0xf]
        %v332 = vld [vmem:[%s273 + $0x70] sm:$0xf]
        %v333 = vld [vmem:[%s273 + $0x74] sm:$0xf]
        %v334 = vld [vmem:[%s273 + $0x78] sm:$0xf]
        %v335 = vld [vmem:[%s273 + $0x7c] sm:$0xf]
        %v336 = vld [vmem:[%s273 + $0x80] sm:$0xf]
        %v337 = vld [vmem:[%s273 + $0x84] sm:$0xf]
        %v338 = vld [vmem:[%s273 + $0x88] sm:$0xf]
        %v339 = vld [vmem:[%s273 + $0x8c] sm:$0xf]
        %v340 = vld [vmem:[%s273 + $0x90] sm:$0xf]
        %v341 = vld [vmem:[%s273 + $0x94] sm:$0xf]
        %v342 = vld [vmem:[%s273 + $0x98] sm:$0xf]
        %v343 = vld [vmem:[%s273 + $0x9c] sm:$0xf]
        %v344 = vld [vmem:[%s273 + $0xa0] sm:$0xf]
        %v345 = vld [vmem:[%s273 + $0xa4] sm:$0xf]
        %v346 = vld [vmem:[%s273 + $0xa8] sm:$0xf]
        %v347 = vld [vmem:[%s273 + $0xac] sm:$0xf]
        %v348 = vld [vmem:[%s273 + $0xb0] sm:$0xf]
        %v349 = vld [vmem:[%s273 + $0xb4] sm:$0xf]
        %v350 = vld [vmem:[%s273 + $0xb8] sm:$0xf]
        %v351 = vld [vmem:[%s273 + $0xbc] sm:$0xf]
        %v352 = vld [vmem:[%s273 + $0xc0] sm:$0xf]
        %v353 = vld [vmem:[%s273 + $0xc4] sm:$0xf]
        %v354 = vld [vmem:[%s273 + $0xc8] sm:$0xf]
        %v355 = vld [vmem:[%s273 + $0xcc] sm:$0xf]
        %v356 = vld [vmem:[%s273 + $0xd0] sm:$0xf]
        %v357 = vld [vmem:[%s273 + $0xd4] sm:$0xf]
        %v358 = vld [vmem:[%s273 + $0xd8] sm:$0xf]
        %v359 = vld [vmem:[%s273 + $0xdc] sm:$0xf]
        %v360 = vld [vmem:[%s273 + $0xe0] sm:$0xf]
        %v361 = vld [vmem:[%s273 + $0xe4] sm:$0xf]
        %v362 = vld [vmem:[%s273 + $0xe8] sm:$0xf]
        %v363 = vld [vmem:[%s273 + $0xec] sm:$0xf]
        %v364 = vld [vmem:[%s273 + $0xf0] sm:$0xf]
        %v365 = vld [vmem:[%s273 + $0xf4] sm:$0xf]
        %v366 = vld [vmem:[%s273 + $0xf8] sm:$0xf]
        %v367 = vld [vmem:[%s273 + $0xfc] sm:$0xf]
        %v368 = vld [vmem:[%s273 + $0x100] sm:$0xf]
        %v369 = vld [vmem:[%s273 + $0x104] sm:$0xf]
        %v370 = vld [vmem:[%s273 + $0x108] sm:$0xf]
        %v371 = vld [vmem:[%s273 + $0x10c] sm:$0xf]
        %v372 = vld [vmem:[%s273 + $0x110] sm:$0xf]
        %v373 = vld [vmem:[%s273 + $0x114] sm:$0xf]
        %v374 = vld [vmem:[%s273 + $0x118] sm:$0xf]
        %v375 = vld [vmem:[%s273 + $0x11c] sm:$0xf]
        %v376 = vld [vmem:[%s273 + $0x120] sm:$0xf]
        %v377 = vld [vmem:[%s273 + $0x124] sm:$0xf]
        %v378 = vld [vmem:[%s273 + $0x128] sm:$0xf]
        %v379 = vld [vmem:[%s273 + $0x12c] sm:$0xf]
        %v380 = vld [vmem:[%s273 + $0x130] sm:$0xf]
        %v381 = vld [vmem:[%s273 + $0x134] sm:$0xf]
        %v382 = vld [vmem:[%s273 + $0x138] sm:$0xf]
        %v383 = vld [vmem:[%s273 + $0x13c] sm:$0xf]
        %v384 = vld [vmem:[%s273 + $0x140] sm:$0xf]
        %v385 = vld [vmem:[%s273 + $0x144] sm:$0xf]
        %v386 = vld [vmem:[%s273 + $0x148] sm:$0xf]
        %v387 = vld [vmem:[%s273 + $0x14c] sm:$0xf]
        %v388 = vld [vmem:[%s273 + $0x150] sm:$0xf]
        %v389 = vld [vmem:[%s273 + $0x154] sm:$0xf]
        %v390 = vld [vmem:[%s273 + $0x158] sm:$0xf]
        %v391 = vld [vmem:[%s273 + $0x15c] sm:$0xf]
        %v392 = vld [vmem:[%s273 + $0x160] sm:$0xf]
        %v393 = vld [vmem:[%s273 + $0x164] sm:$0xf]
        %v394 = vld [vmem:[%s273 + $0x168] sm:$0xf]
        %v395 = vld [vmem:[%s273 + $0x16c] sm:$0xf]
        %v396 = vld [vmem:[%s273 + $0x170] sm:$0xf]
        %v397 = vld [vmem:[%s273 + $0x174] sm:$0xf]
        %v398 = vld [vmem:[%s273 + $0x178] sm:$0xf]
        %v399 = vld [vmem:[%s273 + $0x17c] sm:$0xf]
        %v400 = vld [vmem:[%s273 + $0x180] sm:$0xf]
        %v401 = vld [vmem:[%s273 + $0x184] sm:$0xf]
        %v402 = vld [vmem:[%s273 + $0x188] sm:$0xf]
        %v403 = vld [vmem:[%s273 + $0x18c] sm:$0xf]
        %v404 = vld [vmem:[%s273 + $0x190] sm:$0xf]
        %v405 = vld [vmem:[%s273 + $0x194] sm:$0xf]
        %v406 = vld [vmem:[%s273 + $0x198] sm:$0xf]
        %v407 = vld [vmem:[%s273 + $0x19c] sm:$0xf]
        %v408 = vld [vmem:[%s273 + $0x1a0] sm:$0xf]
        %v409 = vld [vmem:[%s273 + $0x1a4] sm:$0xf]
        %v410 = vld [vmem:[%s273 + $0x1a8] sm:$0xf]
        %v411 = vld [vmem:[%s273 + $0x1ac] sm:$0xf]
        %v412 = vld [vmem:[%s273 + $0x1b0] sm:$0xf]
        %v413 = vld [vmem:[%s273 + $0x1b4] sm:$0xf]
        %v414 = vld [vmem:[%s273 + $0x1b8] sm:$0xf]
        %v415 = vld [vmem:[%s273 + $0x1bc] sm:$0xf]
        %v416 = vld [vmem:[%s273 + $0x1c0] sm:$0xf]
        %v417 = vld [vmem:[%s273 + $0x1c4] sm:$0xf]
        %v418 = vld [vmem:[%s273 + $0x1c8] sm:$0xf]
        %v419 = vld [vmem:[%s273 + $0x1cc] sm:$0xf]
        %v420 = vld [vmem:[%s273 + $0x1d0] sm:$0xf]
        %v421 = vld [vmem:[%s273 + $0x1d4] sm:$0xf]
        %v422 = vld [vmem:[%s273 + $0x1d8] sm:$0xf]
        %v423 = vld [vmem:[%s273 + $0x1dc] sm:$0xf]
        %v424 = vld [vmem:[%s273 + $0x1e0] sm:$0xf]
        %v425 = vld [vmem:[%s273 + $0x1e4] sm:$0xf]
        %v426 = vld [vmem:[%s273 + $0x1e8] sm:$0xf]
        %v427 = vld [vmem:[%s273 + $0x1ec] sm:$0xf]
        %v428 = vld [vmem:[%s273 + $0x1f0] sm:$0xf]
        %v429 = vld [vmem:[%s273 + $0x1f4] sm:$0xf]
        %v430 = vld [vmem:[%s273 + $0x1f8] sm:$0xf]
        %v431 = vld [vmem:[%s273 + $0x1fc] sm:$0xf]
        %v440 = vunpack.c.l.b16 %v296
        %v441 = vunpack.c.h.b16 %v296
        %v442 = vunpack.c.l.b16 %v297
        %v443 = vunpack.c.h.b16 %v297
        %v444 = vunpack.c.l.b16 %v298
        %v445 = vunpack.c.h.b16 %v298
        %v446 = vunpack.c.l.b16 %v299
        %v447 = vunpack.c.h.b16 %v299
        %v448 = vunpack.c.l.b16 %v300
        %v449 = vunpack.c.h.b16 %v300
        %v450 = vunpack.c.l.b16 %v301
        %v451 = vunpack.c.h.b16 %v301
        %v452 = vunpack.c.l.b16 %v302
        %v453 = vunpack.c.h.b16 %v302
        %v454 = vunpack.c.l.b16 %v303
        %v455 = vunpack.c.h.b16 %v303
        %v456 = vpack.c.b16 %v448, %v440
        %v457 = vpack.c.b16 %v449, %v441
        %v458 = vpack.c.b16 %v450, %v442
        %v459 = vpack.c.b16 %v451, %v443
        %v460 = vpack.c.b16 %v452, %v444
        %v461 = vpack.c.b16 %v453, %v445
        %v462 = vpack.c.b16 %v454, %v446
        %v463 = vpack.c.b16 %v455, %v447
        %v600 = vunpack.c.l.b16 %v304
        %v601 = vunpack.c.l.b16 %v305
        %v602 = vunpack.c.l.b16 %v306
        %v603 = vunpack.c.l.b16 %v307
        %v604 = vunpack.c.l.b16 %v308
        %v605 = vunpack.c.l.b16 %v309
        %v606 = vunpack.c.l.b16 %v310
        %v607 = vunpack.c.l.b16 %v311
        %v608 = vunpack.c.l.b16 %v312
        %v609 = vunpack.c.l.b16 %v313
        %v610 = vunpack.c.l.b16 %v314
        %v611 = vunpack.c.l.b16 %v315
        %v612 = vunpack.c.l.b16 %v316
        %v613 = vunpack.c.l.b16 %v317
        %v614 = vunpack.c.l.b16 %v318
        %v615 = vunpack.c.l.b16 %v319
        %v616 = vunpack.c.l.b16 %v320
        %v617 = vunpack.c.l.b16 %v321
        %v618 = vunpack.c.l.b16 %v322
        %v619 = vunpack.c.l.b16 %v323
        %v620 = vunpack.c.l.b16 %v324
        %v621 = vunpack.c.l.b16 %v325
        %v622 = vunpack.c.l.b16 %v326
        %v623 = vunpack.c.l.b16 %v327
        %v624 = vunpack.c.l.b16 %v328
        %v625 = vunpack.c.l.b16 %v329
        %v626 = vunpack.c.l.b16 %v330
        %v627 = vunpack.c.l.b16 %v331
        %v628 = vunpack.c.l.b16 %v332
        %v629 = vunpack.c.l.b16 %v333
        %v630 = vunpack.c.l.b16 %v334
        %v631 = vunpack.c.l.b16 %v335
        %v632 = vunpack.c.l.b16 %v336
        %v633 = vunpack.c.l.b16 %v337
        %v634 = vunpack.c.l.b16 %v338
        %v635 = vunpack.c.l.b16 %v339
        %v636 = vunpack.c.l.b16 %v340
        %v637 = vunpack.c.l.b16 %v341
        %v638 = vunpack.c.l.b16 %v342
        %v639 = vunpack.c.l.b16 %v343
        %v640 = vunpack.c.l.b16 %v344
        %v641 = vunpack.c.l.b16 %v345
        %v642 = vunpack.c.l.b16 %v346
        %v643 = vunpack.c.l.b16 %v347
        %v644 = vunpack.c.l.b16 %v348
        %v645 = vunpack.c.l.b16 %v349
        %v646 = vunpack.c.l.b16 %v350
        %v647 = vunpack.c.l.b16 %v351
        %v648 = vunpack.c.l.b16 %v352
        %v649 = vunpack.c.l.b16 %v353
        %v650 = vunpack.c.l.b16 %v354
        %v651 = vunpack.c.l.b16 %v355
        %v652 = vunpack.c.l.b16 %v356
        %v653 = vunpack.c.l.b16 %v357
        %v654 = vunpack.c.l.b16 %v358
        %v655 = vunpack.c.l.b16 %v359
        %v656 = vunpack.c.l.b16 %v360
        %v657 = vunpack.c.l.b16 %v361
        %v658 = vunpack.c.l.b16 %v362
        %v659 = vunpack.c.l.b16 %v363
        %v660 = vunpack.c.l.b16 %v364
        %v661 = vunpack.c.l.b16 %v365
        %v662 = vunpack.c.l.b16 %v366
        %v663 = vunpack.c.l.b16 %v367
        %v664 = vunpack.c.l.b16 %v368
        %v665 = vunpack.c.l.b16 %v369
        %v666 = vunpack.c.l.b16 %v370
        %v667 = vunpack.c.l.b16 %v371
        %v668 = vunpack.c.l.b16 %v372
        %v669 = vunpack.c.l.b16 %v373
        %v670 = vunpack.c.l.b16 %v374
        %v671 = vunpack.c.l.b16 %v375
        %v672 = vunpack.c.l.b16 %v376
        %v673 = vunpack.c.l.b16 %v377
        %v674 = vunpack.c.l.b16 %v378
        %v675 = vunpack.c.l.b16 %v379
        %v676 = vunpack.c.l.b16 %v380
        %v677 = vunpack.c.l.b16 %v381
        %v678 = vunpack.c.l.b16 %v382
        %v679 = vunpack.c.l.b16 %v383
        %v680 = vunpack.c.l.b16 %v384
        %v681 = vunpack.c.l.b16 %v385
        %v682 = vunpack.c.l.b16 %v386
        %v683 = vunpack.c.l.b16 %v387
        %v684 = vunpack.c.l.b16 %v388
        %v685 = vunpack.c.l.b16 %v389
        %v686 = vunpack.c.l.b16 %v390
        %v687 = vunpack.c.l.b16 %v391
        %v688 = vunpack.c.l.b16 %v392
        %v689 = vunpack.c.l.b16 %v393
        %v690 = vunpack.c.l.b16 %v394
        %v691 = vunpack.c.l.b16 %v395
        %v692 = vunpack.c.l.b16 %v396
        %v693 = vunpack.c.l.b16 %v397
        %v694 = vunpack.c.l.b16 %v398
        %v695 = vunpack.c.l.b16 %v399
        %v696 = vunpack.c.l.b16 %v400
        %v697 = vunpack.c.l.b16 %v401
        %v698 = vunpack.c.l.b16 %v402
        %v699 = vunpack.c.l.b16 %v403
        %v700 = vunpack.c.l.b16 %v404
        %v701 = vunpack.c.l.b16 %v405
        %v702 = vunpack.c.l.b16 %v406
        %v703 = vunpack.c.l.b16 %v407
        %v704 = vunpack.c.l.b16 %v408
        %v705 = vunpack.c.l.b16 %v409
        %v706 = vunpack.c.l.b16 %v410
        %v707 = vunpack.c.l.b16 %v411
        %v708 = vunpack.c.l.b16 %v412
        %v709 = vunpack.c.l.b16 %v413
        %v710 = vunpack.c.l.b16 %v414
        %v711 = vunpack.c.l.b16 %v415
        %v712 = vunpack.c.l.b16 %v416
        %v713 = vunpack.c.l.b16 %v417
        %v714 = vunpack.c.l.b16 %v418
        %v715 = vunpack.c.l.b16 %v419
        %v716 = vunpack.c.l.b16 %v420
        %v717 = vunpack.c.l.b16 %v421
        %v718 = vunpack.c.l.b16 %v422
        %v719 = vunpack.c.l.b16 %v423
        %v720 = vunpack.c.l.b16 %v424
        %v721 = vunpack.c.l.b16 %v425
        %v722 = vunpack.c.l.b16 %v426
        %v723 = vunpack.c.l.b16 %v427
        %v724 = vunpack.c.l.b16 %v428
        %v725 = vunpack.c.l.b16 %v429
        %v726 = vunpack.c.l.b16 %v430
        %v727 = vunpack.c.l.b16 %v431
        %v728 = vpack.c.b16 %v601, %v600
        %v729 = vpack.c.b16 %v603, %v602
        %v730 = vpack.c.b16 %v605, %v604
        %v731 = vpack.c.b16 %v607, %v606
        %v732 = vpack.c.b16 %v609, %v608
        %v733 = vpack.c.b16 %v611, %v610
        %v734 = vpack.c.b16 %v613, %v612
        %v735 = vpack.c.b16 %v615, %v614
        %v736 = vpack.c.b16 %v617, %v616
        %v737 = vpack.c.b16 %v619, %v618
        %v738 = vpack.c.b16 %v621, %v620
        %v739 = vpack.c.b16 %v623, %v622
        %v740 = vpack.c.b16 %v625, %v624
        %v741 = vpack.c.b16 %v627, %v626
        %v742 = vpack.c.b16 %v629, %v628
        %v743 = vpack.c.b16 %v631, %v630
        %v744 = vpack.c.b16 %v633, %v632
        %v745 = vpack.c.b16 %v635, %v634
        %v746 = vpack.c.b16 %v637, %v636
        %v747 = vpack.c.b16 %v639, %v638
        %v748 = vpack.c.b16 %v641, %v640
        %v749 = vpack.c.b16 %v643, %v642
        %v750 = vpack.c.b16 %v645, %v644
        %v751 = vpack.c.b16 %v647, %v646
        %v752 = vpack.c.b16 %v649, %v648
        %v753 = vpack.c.b16 %v651, %v650
        %v754 = vpack.c.b16 %v653, %v652
        %v755 = vpack.c.b16 %v655, %v654
        %v756 = vpack.c.b16 %v657, %v656
        %v757 = vpack.c.b16 %v659, %v658
        %v758 = vpack.c.b16 %v661, %v660
        %v759 = vpack.c.b16 %v663, %v662
        %v760 = vpack.c.b16 %v665, %v664
        %v761 = vpack.c.b16 %v667, %v666
        %v762 = vpack.c.b16 %v669, %v668
        %v763 = vpack.c.b16 %v671, %v670
        %v764 = vpack.c.b16 %v673, %v672
        %v765 = vpack.c.b16 %v675, %v674
        %v766 = vpack.c.b16 %v677, %v676
        %v767 = vpack.c.b16 %v679, %v678
        %v768 = vpack.c.b16 %v681, %v680
        %v769 = vpack.c.b16 %v683, %v682
        %v770 = vpack.c.b16 %v685, %v684
        %v771 = vpack.c.b16 %v687, %v686
        %v772 = vpack.c.b16 %v689, %v688
        %v773 = vpack.c.b16 %v691, %v690
        %v774 = vpack.c.b16 %v693, %v692
        %v775 = vpack.c.b16 %v695, %v694
        %v776 = vpack.c.b16 %v697, %v696
        %v777 = vpack.c.b16 %v699, %v698
        %v778 = vpack.c.b16 %v701, %v700
        %v779 = vpack.c.b16 %v703, %v702
        %v780 = vpack.c.b16 %v705, %v704
        %v781 = vpack.c.b16 %v707, %v706
        %v782 = vpack.c.b16 %v709, %v708
        %v783 = vpack.c.b16 %v711, %v710
        %v784 = vpack.c.b16 %v713, %v712
        %v785 = vpack.c.b16 %v715, %v714
        %v786 = vpack.c.b16 %v717, %v716
        %v787 = vpack.c.b16 %v719, %v718
        %v788 = vpack.c.b16 %v721, %v720
        %v789 = vpack.c.b16 %v723, %v722
        %v790 = vpack.c.b16 %v725, %v724
        %v791 = vpack.c.b16 %v727, %v726
        %856 = vmatprep.subr.bf16.mxu0 0
        %857 = vmatpush1.bf16.msra.mxu0 %v735
        %858 = vmatprep.subr.bf16.mxu0 0
        %859 = vmatpush1.bf16.msra.mxu0 %v734
        %860 = vmatprep.subr.bf16.mxu0 0
        %861 = vmatpush1.bf16.msra.mxu0 %v733
        %862 = vmatprep.subr.bf16.mxu0 0
        %863 = vmatpush1.bf16.msra.mxu0 %v732
        %864 = vmatprep.subr.bf16.mxu0 0
        %865 = vmatpush1.bf16.msra.mxu0 %v731
        %866 = vmatprep.subr.bf16.mxu0 0
        %867 = vmatpush1.bf16.msra.mxu0 %v730
        %868 = vmatprep.subr.bf16.mxu0 0
        %869 = vmatpush1.bf16.msra.mxu0 %v729
        %870 = vmatprep.subr.bf16.mxu0 0
        %871 = vmatpush1.bf16.msra.mxu0 %v728
        %872 = vmatprep.subr.bf16.mxu0 0
        %873 = vmatpush2.bf16.msra.mxu0 %v743
        %874 = vmatprep.subr.bf16.mxu0 0
        %875 = vmatpush2.bf16.msra.mxu0 %v742
        %876 = vmatprep.subr.bf16.mxu0 0
        %877 = vmatpush2.bf16.msra.mxu0 %v741
        %878 = vmatprep.subr.bf16.mxu0 0
        %879 = vmatpush2.bf16.msra.mxu0 %v740
        %880 = vmatprep.subr.bf16.mxu0 0
        %881 = vmatpush2.bf16.msra.mxu0 %v739
        %882 = vmatprep.subr.bf16.mxu0 0
        %883 = vmatpush2.bf16.msra.mxu0 %v738
        %884 = vmatprep.subr.bf16.mxu0 0
        %885 = vmatpush2.bf16.msra.mxu0 %v737
        %886 = vmatprep.subr.bf16.mxu0 0
        %887 = vmatpush2.bf16.msra.mxu0 %v736
        %888 = vmatprep.mubr.bf16.mxu0 %v457
        %889 = vmatmul.mubr.bf16.gmra.mxu0 %v456
        %v890 = vpop.f32.mrf.mxu0
        %v891 = vadd.f32 0.0, %v890
        %v892 = vpop.f32.mrf.mxu0
        %v893 = vpop.f32.mrf.mxu0
        %v894 = vadd.f32 0.0, %v893
        %v895 = vpop.f32.mrf.mxu0
        %896 = vdwg.mxu0
        %897 = vmatprep.subr.bf16.mxu0 0
        %898 = vmatpush1.bf16.msra.mxu0 %v751
        %899 = vmatprep.subr.bf16.mxu0 0
        %900 = vmatpush1.bf16.msra.mxu0 %v750
        %901 = vmatprep.subr.bf16.mxu0 0
        %902 = vmatpush1.bf16.msra.mxu0 %v749
        %903 = vmatprep.subr.bf16.mxu0 0
        %904 = vmatpush1.bf16.msra.mxu0 %v748
        %905 = vmatprep.subr.bf16.mxu0 0
        %906 = vmatpush1.bf16.msra.mxu0 %v747
        %907 = vmatprep.subr.bf16.mxu0 0
        %908 = vmatpush1.bf16.msra.mxu0 %v746
        %909 = vmatprep.subr.bf16.mxu0 0
        %910 = vmatpush1.bf16.msra.mxu0 %v745
        %911 = vmatprep.subr.bf16.mxu0 0
        %912 = vmatpush1.bf16.msra.mxu0 %v744
        %913 = vmatprep.subr.bf16.mxu0 0
        %914 = vmatpush2.bf16.msra.mxu0 %v759
        %915 = vmatprep.subr.bf16.mxu0 0
        %916 = vmatpush2.bf16.msra.mxu0 %v758
        %917 = vmatprep.subr.bf16.mxu0 0
        %918 = vmatpush2.bf16.msra.mxu0 %v757
        %919 = vmatprep.subr.bf16.mxu0 0
        %920 = vmatpush2.bf16.msra.mxu0 %v756
        %921 = vmatprep.subr.bf16.mxu0 0
        %922 = vmatpush2.bf16.msra.mxu0 %v755
        %923 = vmatprep.subr.bf16.mxu0 0
        %924 = vmatpush2.bf16.msra.mxu0 %v754
        %925 = vmatprep.subr.bf16.mxu0 0
        %926 = vmatpush2.bf16.msra.mxu0 %v753
        %927 = vmatprep.subr.bf16.mxu0 0
        %928 = vmatpush2.bf16.msra.mxu0 %v752
        %929 = vmatprep.mubr.bf16.mxu0 %v459
        %930 = vmatmul.mubr.bf16.gmra.mxu0 %v458
        %v931 = vpop.f32.mrf.mxu0
        %v932 = vadd.f32 %v891, %v931
        %v933 = vpop.f32.mrf.mxu0
        %v934 = vpop.f32.mrf.mxu0
        %v935 = vadd.f32 %v894, %v934
        %v936 = vpop.f32.mrf.mxu0
        %937 = vdwg.mxu0
        %938 = vmatprep.subr.bf16.mxu0 0
        %939 = vmatpush1.bf16.msra.mxu0 %v767
        %940 = vmatprep.subr.bf16.mxu0 0
        %941 = vmatpush1.bf16.msra.mxu0 %v766
        %942 = vmatprep.subr.bf16.mxu0 0
        %943 = vmatpush1.bf16.msra.mxu0 %v765
        %944 = vmatprep.subr.bf16.mxu0 0
        %945 = vmatpush1.bf16.msra.mxu0 %v764
        %946 = vmatprep.subr.bf16.mxu0 0
        %947 = vmatpush1.bf16.msra.mxu0 %v763
        %948 = vmatprep.subr.bf16.mxu0 0
        %949 = vmatpush1.bf16.msra.mxu0 %v762
        %950 = vmatprep.subr.bf16.mxu0 0
        %951 = vmatpush1.bf16.msra.mxu0 %v761
        %952 = vmatprep.subr.bf16.mxu0 0
        %953 = vmatpush1.bf16.msra.mxu0 %v760
        %954 = vmatprep.subr.bf16.mxu0 0
        %955 = vmatpush2.bf16.msra.mxu0 %v775
        %956 = vmatprep.subr.bf16.mxu0 0
        %957 = vmatpush2.bf16.msra.mxu0 %v774
        %958 = vmatprep.subr.bf16.mxu0 0
        %959 = vmatpush2.bf16.msra.mxu0 %v773
        %960 = vmatprep.subr.bf16.mxu0 0
        %961 = vmatpush2.bf16.msra.mxu0 %v772
        %962 = vmatprep.subr.bf16.mxu0 0
        %963 = vmatpush2.bf16.msra.mxu0 %v771
        %964 = vmatprep.subr.bf16.mxu0 0
        %965 = vmatpush2.bf16.msra.mxu0 %v770
        %966 = vmatprep.subr.bf16.mxu0 0
        %967 = vmatpush2.bf16.msra.mxu0 %v769
        %968 = vmatprep.subr.bf16.mxu0 0
        %969 = vmatpush2.bf16.msra.mxu0 %v768
        %970 = vmatprep.mubr.bf16.mxu0 %v461
        %971 = vmatmul.mubr.bf16.gmra.mxu0 %v460
        %v972 = vpop.f32.mrf.mxu0
        %v973 = vadd.f32 %v932, %v972
        %v974 = vpop.f32.mrf.mxu0
        %v975 = vpop.f32.mrf.mxu0
        %v976 = vadd.f32 %v935, %v975
        %v977 = vpop.f32.mrf.mxu0
        %978 = vdwg.mxu0
        %979 = vmatprep.subr.bf16.mxu0 0
        %980 = vmatpush1.bf16.msra.mxu0 %v783
        %981 = vmatprep.subr.bf16.mxu0 0
        %982 = vmatpush1.bf16.msra.mxu0 %v782
        %983 = vmatprep.subr.bf16.mxu0 0
        %984 = vmatpush1.bf16.msra.mxu0 %v781
        %985 = vmatprep.subr.bf16.mxu0 0
        %986 = vmatpush1.bf16.msra.mxu0 %v780
        %987 = vmatprep.subr.bf16.mxu0 0
        %988 = vmatpush1.bf16.msra.mxu0 %v779
        %989 = vmatprep.subr.bf16.mxu0 0
        %990 = vmatpush1.bf16.msra.mxu0 %v778
        %991 = vmatprep.subr.bf16.mxu0 0
        %992 = vmatpush1.bf16.msra.mxu0 %v777
        %993 = vmatprep.subr.bf16.mxu0 0
        %994 = vmatpush1.bf16.msra.mxu0 %v776
        %995 = vmatprep.subr.bf16.mxu0 0
        %996 = vmatpush2.bf16.msra.mxu0 %v791
        %997 = vmatprep.subr.bf16.mxu0 0
        %998 = vmatpush2.bf16.msra.mxu0 %v790
        %999 = vmatprep.subr.bf16.mxu0 0
        %1000 = vmatpush2.bf16.msra.mxu0 %v789
        %1001 = vmatprep.subr.bf16.mxu0 0
        %1002 = vmatpush2.bf16.msra.mxu0 %v788
        %1003 = vmatprep.subr.bf16.mxu0 0
        %1004 = vmatpush2.bf16.msra.mxu0 %v787
        %1005 = vmatprep.subr.bf16.mxu0 0
        %1006 = vmatpush2.bf16.msra.mxu0 %v786
        %1007 = vmatprep.subr.bf16.mxu0 0
        %1008 = vmatpush2.bf16.msra.mxu0 %v785
        %1009 = vmatprep.subr.bf16.mxu0 0
        %1010 = vmatpush2.bf16.msra.mxu0 %v784
        %1011 = vmatprep.mubr.bf16.mxu0 %v463
        %1012 = vmatmul.mubr.bf16.gmra.mxu0 %v462
        %v1013 = vpop.f32.mrf.mxu0
        %v1014 = vadd.f32 %v973, %v1013
        %v1015 = vpop.f32.mrf.mxu0
        %v1016 = vpop.f32.mrf.mxu0
        %v1017 = vadd.f32 %v976, %v1016
        %v1018 = vpop.f32.mrf.mxu0
        %1019 = vdwg.mxu0
        %v1020 = vadd.f32 %v294, %v1014
        %v1021 = vadd.f32 %v295, %v1017
        %1022 = vst [vmem:[#allocation2] sm:$0xff] %v1020
        %1023 = vst [vmem:[#allocation2 + $0x8] sm:$0xff] %v1021
        %p1024 = scmp.eq.s32.totalorder %s21, 1
        // Predicated region
        $region60: #{discriminator_forward.21} parent=50 // pred_check
          %p1025 = pneg %p1024
        $region61: #{discriminator_forward.21} parent=50 // pred_check_branch
          %1027 = sbr.rel (%p1025) target = $region63
        $region62: #{discriminator_forward.21} parent=50 // pred_region
          %v1028 = vld [vmem:[#allocation2] sm:$0xff]
          %v1029 = vld [vmem:[#allocation2 + $0x8] sm:$0xff]
          %v1030 = vld [vmem:[%s277] sm:$0x1]
          %v1032 = vlaneseq
          %v1033 = vshrl.u32 %v1032, 7
          %v1034 = vsub.s32 0, %v1033
          %v1035 = vrot.slane %v1030, %v1034
          %v1037 = vadd.f32 %v1028, %v1035
          %v1038 = vadd.f32 %v1029, %v1035
          %1039 = vst [vmem:[%s285] sm:$0xff] %v1037
          %1040 = vst [vmem:[%s285 + $0x8] sm:$0xff] %v1038
        $region63: #{discriminator_forward.21} parent=50 // pred_fallthru
          _
        %s1041 = smul.u32 2, %s19
        %p1042 = scmp.lt.s32.totalorder %s1041, 1
        %s1043 = scalar_select %p1042, %s1041, 1
        %p1044 = scmp.lt.s32.totalorder %s20, 0
        %s1045 = scalar_select %p1044, %s20, 0
        %s1046 = sadd.s32 %s1045, %s1043
        %s1047 = smul.addr %s1046, 8
        %s1048 = scalar_lea.vmem %s3, %s1047
        // Predicated region
        $region64: #{discriminator_forward.21} parent=50 // pred_check
          %p1049 = pneg %p135
        $region65: #{discriminator_forward.21} parent=50 // pred_check_branch
          %1051 = sbr.rel (%p1049) target = $region67
        $region66: #{discriminator_forward.21} parent=50 // pred_region
          %s1052 = smul.u32 2, %s19
        $region67: #{discriminator_forward.21} parent=50 // pred_fallthru
          _
        // Predicated region
        $region68: #{discriminator_forward.21} parent=50 // pred_check
          %p1053 = pneg %p135
        $region69: #{discriminator_forward.21} parent=50 // pred_check_branch
          %1055 = sbr.rel (%p1053) target = $region71
        $region70: #{discriminator_forward.21} parent=50 // pred_region
          %s1056 = smul.u32 2, %s19
          %p1057 = scmp.lt.s32.totalorder %s1056, 1
          %s1058 = scalar_select %p1057, %s1056, 1
          %p1059 = scmp.lt.s32.totalorder %s20, 0
          %s1060 = scalar_select %p1059, %s20, 0
          %s1061 = sadd.s32 %s1060, %s1058
          %s1062 = smul.addr %s1061, 8
          %s1063 = scalar_lea.vmem %s3, %s1062
        $region71: #{discriminator_forward.21} parent=50 // pred_fallthru
          _
      $region51: #{discriminator_forward.21} parent=5 // pred_fallthru
        _
      %p1064 = scmp.le.s32.totalorder 2, %s9
      // Predicated region
      $region72: #{discriminator_forward.21} parent=5 // pred_check
        %p1065 = pneg %p1064
      $region73: #{discriminator_forward.21} parent=5 // pred_check_branch
        %1067 = sbr.rel (%p1065) target = $region75
      $region74: #{discriminator_forward.21} parent=5 // pred_region
        %s1068 = ssub.s32 %s9, 2
      $region75: #{discriminator_forward.21} parent=5 // pred_fallthru
        _
    $region6: #{discriminator_forward.21} parent=1 // loop_footer
      %s13 = sadd.s32 1, %s9
    $region7: #{discriminator_forward.21} parent=1 // loop_footer_branch
      %8 = sbr.rel target = $region3
    $region8: #{discriminator_forward.21} parent=1 // loop_exit
      _

</llo_original>
